<compile_context>
chip_gen: v7x
topology: tpu7x:2x2x1
jax: 0.10.0
libtpu: 0.0.40
codegen_flags: <defaults>
</compile_context>

<pallas_src>
import math
from functools import partial

import jax
import jax.numpy as jnp
from jax.experimental import pallas as pl
from jax.experimental.pallas import tpu as pltpu


# ----------------------------------------------------------------------------
# Fused MHA block kernel:
#   out = LayerNorm(x_q + Wo @ (softmax(QK^T + bias) V) + bo)
# grid = (batch, q_tiles); all heads handled in-kernel.
# ----------------------------------------------------------------------------
def _mha_block_kernel(*refs, n_heads, d_model, tq, fused_qkv, save_attn):
    if fused_qkv:
        (xkv_ref, bias_ref, w_in_ref, b_in_ref,
         wo_ref, bo_ref, g_ref, b_ref, *rest) = refs
        xq_ref = wq_ref = bq_ref = None
    else:
        (xq_ref, xkv_ref, bias_ref, wq_ref, bq_ref, w_in_ref, b_in_ref,
         wo_ref, bo_ref, g_ref, b_ref, *rest) = refs
    if save_attn:
        o_ref, attn_ref, kv_s, ctx_s = rest
    else:
        o_ref, kv_s, ctx_s = rest
        attn_ref = None

    D = d_model
    dh = D // n_heads          # NOTE: best perf when dh is a multiple of 128 (lane dim)
    qi = pl.program_id(1)
    q0 = pl.multiple_of(qi * tq, tq)

    # Packed K|V (and Q for self-attention) projection: computed once per batch
    # element (first q-tile) into persistent bf16 VMEM scratch, reused by all tiles.
    @pl.when(qi == 0)
    def _():
        xkv = xkv_ref[0].astype(jnp.bfloat16)
        kv_s[...] = (jnp.dot(xkv, w_in_ref[...],
                             preferred_element_type=jnp.float32)
                     + b_in_ref[...]).astype(jnp.bfloat16)

    if fused_qkv:
        resid = xkv_ref[0, pl.ds(q0, tq), :]               # (TQ, D) f32 residual rows
        q_all = None
        q_col0, k_col0, v_col0 = 0, D, 2 * D
    else:
        resid = xq_ref[0]                                   # (TQ, D) f32
        # per-tile Q projection (softmax scale pre-folded into wq/bq at init)
        q_all = (jnp.dot(resid.astype(jnp.bfloat16), wq_ref[...],
                         preferred_element_type=jnp.float32)
                 + bq_ref[...]).astype(jnp.bfloat16)        # (TQ, D) bf16
        q_col0, k_col0, v_col0 = 0, 0, D

    bias_t = bias_ref[0].astype(jnp.float32)                # (TQ, Sk) additive mask

    # per-head attention (static unroll; all operands stay in VMEM, bf16 on the MXU)
    for h in range(n_heads):
        lo = h * dh
        if fused_qkv:
            q_h = kv_s[pl.ds(q0, tq), q_col0 + lo:q_col0 + lo + dh]   # (TQ, dh) bf16
        else:
            q_h = q_all[:, lo:lo + dh]
        k_h = kv_s[:, k_col0 + lo:k_col0 + lo + dh]                    # (Sk, dh) bf16
        v_h = kv_s[:, v_col0 + lo:v_col0 + lo + dh]                    # (Sk, dh) bf16

        # contraction over dh on both operands -> no explicit K transpose
        s = jax.lax.dot_general(q_h, k_h, (((1,), (1,)), ((), ())),
                                preferred_element_type=jnp.float32) + bias_t
        s = s - jnp.max(s, axis=-1, keepdims=True)
        e = jnp.exp(s)
        den = jnp.sum(e, axis=-1, keepdims=True)
        if save_attn:
            p_att = e / den                                  # exact probs when saved
            @pl.when(pl.program_id(0) == 0)                  # only batch 0 is consumed
            def _(p_att=p_att, h=h):
                attn_ref[0, h] = p_att
        else:
            p_att = e * pl.reciprocal(den, approx=True)
        ctx_s[:, lo:lo + dh] = jnp.dot(
            p_att.astype(jnp.bfloat16), v_h,
            preferred_element_type=jnp.float32).astype(jnp.bfloat16)

    # output projection + residual + LayerNorm (f32, eps=1e-5, biased variance)
    out = jnp.dot(ctx_s[...], wo_ref[...],
                  preferred_element_type=jnp.float32) + bo_ref[...]
    y = resid + out
    mean = jnp.mean(y, axis=-1, keepdims=True)
    var = jnp.mean((y - mean) ** 2, axis=-1, keepdims=True)
    o_ref[0] = (y - mean) * jax.lax.rsqrt(var + 1e-5) * g_ref[...] + b_ref[...]


def mha_block(x_q, x_kv, mask_bias, p, n_heads, save_attn, fused_qkv, tile_q=512):
    B, Sq, D = x_q.shape
    Sk = x_kv.shape[1]

    # Q-row tiling bounds the (TQ, Sk) score tile; the debug save-attention path
    # keeps the full Sq resident (one q-tile) so the batch-0 probability block
    # stays grid-resident and is flushed exactly once.
    TQ = tile_q if (not save_attn and Sq % tile_q == 0) else Sq
    nq = Sq // TQ

    def wspec(r, c):
        return pl.BlockSpec((r, c), lambda b, qi: (0, 0))

    if fused_qkv:
        inputs = (x_kv, mask_bias, p["w_qkv"], p["b_qkv"],
                  p["wo"], p["bo"], p["ln_g"], p["ln_b"])
        in_specs = [
            pl.BlockSpec((1, Sk, D), lambda b, qi: (b, 0, 0)),     # x (full, QKV source)
            pl.BlockSpec((1, TQ, Sk), lambda b, qi: (b, qi, 0)),   # bf16 mask bias
            wspec(D, 3 * D), wspec(1, 3 * D),                      # packed QKV
            wspec(D, D), wspec(1, D), wspec(1, D), wspec(1, D),    # wo, bo, LN
        ]
        kv_cols = 3 * D
    else:
        inputs = (x_q, x_kv, mask_bias, p["wq"], p["bq"], p["w_kv"], p["b_kv"],
                  p["wo"], p["bo"], p["ln_g"], p["ln_b"])
        in_specs = [
            pl.BlockSpec((1, TQ, D), lambda b, qi: (b, qi, 0)),    # query rows / residual
            pl.BlockSpec((1, Sk, D), lambda b, qi: (b, 0, 0)),     # enc_out (full)
            pl.BlockSpec((1, TQ, Sk), lambda b, qi: (b, qi, 0)),
            wspec(D, D), wspec(1, D), wspec(D, 2 * D), wspec(1, 2 * D),
            wspec(D, D), wspec(1, D), wspec(1, D), wspec(1, D),
        ]
        kv_cols = 2 * D

    out_shapes = [jax.ShapeDtypeStruct((B, Sq, D), jnp.float32)]
    out_specs = [pl.BlockSpec((1, TQ, D), lambda b, qi: (b, qi, 0))]
    if save_attn:
        # only batch element 0 is consumed downstream -> emit (1, H, Sq, Sk)
        out_shapes.append(jax.ShapeDtypeStruct((1, n_heads, Sq, Sk), jnp.float32))
        out_specs.append(pl.BlockSpec((1, n_heads, TQ, Sk),
                                      lambda b, qi: (0, 0, qi, 0)))

    # batch axis kept sequential on the save path so the resident attention-prob
    # block (written only for b == 0) is not split across cores.
    sems = ("arbitrary", "arbitrary") if save_attn else ("parallel", "arbitrary")

    outs = pl.pallas_call(
        partial(_mha_block_kernel, n_heads=n_heads, d_model=D, tq=TQ,
                fused_qkv=fused_qkv, save_attn=save_attn),
        grid=(B, nq),
        out_shape=tuple(out_shapes),
        in_specs=in_specs,
        out_specs=tuple(out_specs),
        scratch_shapes=[
            pltpu.VMEM((Sk, kv_cols), jnp.bfloat16),    # packed (Q)|K|V projection
            pltpu.VMEM((TQ, D), jnp.bfloat16),          # per-tile attention context
        ],
        compiler_params=pltpu.CompilerParams(dimension_semantics=sems),
    )(*inputs)

    if save_attn:
        return outs[0], outs[1]
    return outs[0], None


# ----------------------------------------------------------------------------
# Fused FeedForward block kernel:  LN(x + W2 @ relu(W1 @ x + b1) + b2)
# ----------------------------------------------------------------------------
def _ffn_block_kernel(x_ref, w1_ref, b1_ref, w2_ref, b2_ref, g_ref, b_ref, o_ref):
    x = x_ref[...]                                              # (TM, D) f32
    h = jnp.dot(x.astype(jnp.bfloat16), w1_ref[...],
                preferred_element_type=jnp.float32) + b1_ref[...]
    h = jnp.maximum(h, 0.0)
    # TODO(synk): nn.Dropout inside FeedForward omitted (inference -> identity)
    y = jnp.dot(h.astype(jnp.bfloat16), w2_ref[...],
                preferred_element_type=jnp.float32) + b2_ref[...]
    y = x + y
    mean = jnp.mean(y, axis=-1, keepdims=True)
    var = jnp.mean((y - mean) ** 2, axis=-1, keepdims=True)
    o_ref[...] = (y - mean) * jax.lax.rsqrt(var + 1e-5) * g_ref[...] + b_ref[...]


def ffn_block(x2d, p, tile_m=512):
    M, D = x2d.shape
    F = p["ff_w1"].shape[1]
    TM = M if M <= tile_m else tile_m
    # TODO(synk): for very large d_ff on v7x, chunk F in-kernel instead of holding
    # full W1/W2 + the (TM,F) intermediate resident.
    return pl.pallas_call(
        _ffn_block_kernel,
        grid=(pl.cdiv(M, TM),),
        out_shape=jax.ShapeDtypeStruct((M, D), jnp.float32),
        in_specs=[
            pl.BlockSpec((TM, D), lambda i: (i, 0)),
            pl.BlockSpec((D, F), lambda i: (0, 0)),
            pl.BlockSpec((1, F), lambda i: (0, 0)),
            pl.BlockSpec((F, D), lambda i: (0, 0)),
            pl.BlockSpec((1, D), lambda i: (0, 0)),
            pl.BlockSpec((1, D), lambda i: (0, 0)),
            pl.BlockSpec((1, D), lambda i: (0, 0)),
        ],
        out_specs=pl.BlockSpec((TM, D), lambda i: (i, 0)),
        compiler_params=pltpu.CompilerParams(dimension_semantics=("parallel",)),
    )(x2d, p["ff_w1"], p["ff_b1"], p["ff_w2"], p["ff_b2"],
      p["ln_ff_g"], p["ln_ff_b"])


# ----------------------------------------------------------------------------
# fc_out: tiled linear. Grid ordered (N tiles, M tiles) with M innermost so each
# (large) vocab weight block is DMA'd once; x arrives pre-cast to bf16.
# ----------------------------------------------------------------------------
def _linear_kernel(x_ref, w_ref, b_ref, o_ref):
    o_ref[...] = jnp.dot(x_ref[...], w_ref[...],
                         preferred_element_type=jnp.float32) + b_ref[...]


def linear_tiled(x2d_bf16, w, b, tile_m=512, tile_n=512):
    M, K = x2d_bf16.shape
    N = w.shape[1]
    TM = M if M <= tile_m else tile_m
    TN = N if N <= tile_n else tile_n
    return pl.pallas_call(
        _linear_kernel,
        grid=(pl.cdiv(N, TN), pl.cdiv(M, TM)),
        out_shape=jax.ShapeDtypeStruct((M, N), jnp.float32),
        in_specs=[
            pl.BlockSpec((TM, K), lambda j, i: (i, 0)),
            pl.BlockSpec((K, TN), lambda j, i: (0, j)),
            pl.BlockSpec((1, TN), lambda j, i: (0, j)),
        ],
        out_specs=pl.BlockSpec((TM, TN), lambda j, i: (i, j)),
        compiler_params=pltpu.CompilerParams(
            dimension_semantics=("parallel", "parallel")),
    )(x2d_bf16, w, b)


# ----------------------------------------------------------------------------
# Model glue (plain JAX: embedding gather, mask -> bf16 bias, layer loop)
# ----------------------------------------------------------------------------
@partial(jax.jit, static_argnames=("n_heads", "atten_map_save"))
def decoder_forward(params, trg, enc_out, dec_mask, enc_dec_mask,
                    n_heads, atten_map_save=False):
    B, S = trg.shape
    D = params["tok_emb"].shape[1]
    emb_scale = math.sqrt(D)
    pos = jnp.arange(S)
    # TODO(synk): embedding lookup kept as jnp.take (gather); nn.Dropout omitted
    # (inference mode -> identity).
    x = emb_scale * jnp.take(params["tok_emb"], trg, axis=0) \
        + jnp.take(params["pos_emb"], pos, axis=0)[None, :, :]

    # additive bf16 mask biases (head dim squeezed): (B, Sq, Sk)
    dec_bias = jnp.where(dec_mask[:, 0] > 0, 0.0, -1e9).astype(jnp.bfloat16)
    enc_dec_bias = jnp.where(enc_dec_mask[:, 0] > 0, 0.0, -1e9).astype(jnp.bfloat16)

    atten_decs, atten_enc_decs = [], []
    for lp in params["layers"]:
        x, a_dec = mha_block(x, x, dec_bias, lp["self"], n_heads,
                             atten_map_save, fused_qkv=True)
        x, a_ed = mha_block(x, enc_out, enc_dec_bias, lp["cross"], n_heads,
                            atten_map_save, fused_qkv=False)
        x = ffn_block(x.reshape(-1, D), lp).reshape(B, S, D)
        if atten_map_save:
            atten_decs.append(a_dec[0])
            atten_enc_decs.append(a_ed[0])

    logits = linear_tiled(x.reshape(-1, D).astype(jnp.bfloat16),
                          params["fc_w"], params["fc_b"])
    logits = logits.reshape(B, S, -1)
    if atten_map_save:
        return logits, jnp.stack(atten_decs, 0), jnp.stack(atten_enc_decs, 0)
    return logits, jnp.zeros((0,), jnp.float32), jnp.zeros((0,), jnp.float32)


# ----------------------------------------------------------------------------
# Deterministic parameter initialization (matmul weights in bf16, rest f32).
# The 1/sqrt(d_head) softmax scale is folded into the Q projection weights.
# ----------------------------------------------------------------------------
def init_params(key, vocab_size, max_len, n_layers, d_model, d_ff, n_heads):
    def nrm(k, shape, s=0.02):
        return (s * jax.random.normal(k, shape)).astype(jnp.float32)

    q_scale = 1.0 / math.sqrt(d_model // n_heads)

    keys = jax.random.split(key, 3 + n_layers)
    params = {
        "tok_emb": nrm(keys[0], (vocab_size, d_model), 1.0),
        "pos_emb": nrm(keys[1], (max_len, d_model), 1.0),
        "fc_w": nrm(keys[2], (d_model, vocab_size)).astype(jnp.bfloat16),
        "fc_b": jnp.zeros((1, vocab_size), jnp.float32),
        "layers": [],
    }

    def self_attn_params(k4):
        ks = jax.random.split(k4, 4)
        wq = nrm(ks[0], (d_model, d_model)) * q_scale
        wk = nrm(ks[1], (d_model, d_model))
        wv = nrm(ks[2], (d_model, d_model))
        return {
            # Q|K|V packed into one (D, 3D) weight -> single fused projection matmul
            "w_qkv": jnp.concatenate([wq, wk, wv], axis=1).astype(jnp.bfloat16),
            "b_qkv": jnp.zeros((1, 3 * d_model), jnp.float32),
            "wo": nrm(ks[3], (d_model, d_model)).astype(jnp.bfloat16),
            "bo": jnp.zeros((1, d_model), jnp.float32),
            "ln_g": jnp.ones((1, d_model), jnp.float32),
            "ln_b": jnp.zeros((1, d_model), jnp.float32),
        }

    def cross_attn_params(k4):
        ks = jax.random.split(k4, 4)
        wk = nrm(ks[1], (d_model, d_model))
        wv = nrm(ks[2], (d_model, d_model))
        return {
            "wq": (nrm(ks[0], (d_model, d_model)) * q_scale).astype(jnp.bfloat16),
            "bq": jnp.zeros((1, d_model), jnp.float32),
            # K|V packed into one (D, 2D) weight
            "w_kv": jnp.concatenate([wk, wv], axis=1).astype(jnp.bfloat16),
            "b_kv": jnp.zeros((1, 2 * d_model), jnp.float32),
            "wo": nrm(ks[3], (d_model, d_model)).astype(jnp.bfloat16),
            "bo": jnp.zeros((1, d_model), jnp.float32),
            "ln_g": jnp.ones((1, d_model), jnp.float32),
            "ln_b": jnp.zeros((1, d_model), jnp.float32),
        }

    for li in range(n_layers):
        lk = jax.random.split(keys[3 + li], 4)
        params["layers"].append({
            "self": self_attn_params(lk[0]),
            "cross": cross_attn_params(lk[1]),
            "ff_w1": nrm(lk[2], (d_model, d_ff)).astype(jnp.bfloat16),
            "ff_b1": jnp.zeros((1, d_ff), jnp.float32),
            "ff_w2": nrm(lk[3], (d_ff, d_model)).astype(jnp.bfloat16),
            "ff_b2": jnp.zeros((1, d_model), jnp.float32),
            "ln_ff_g": jnp.ones((1, d_model), jnp.float32),
            "ln_ff_b": jnp.zeros((1, d_model), jnp.float32),
        })
    return params


# ----------------------------------------------------------------------------
# Main (small correctness shapes; production configs should keep d_head >= 128
# and sequence lengths multiples of the 512-row q-tile for best lane utilization)
# ----------------------------------------------------------------------------
if __name__ == "__main__":
    B, S, Se = 2, 8, 8
    d_model, d_ff, n_heads, n_layers = 32, 64, 4, 2
    vocab_size, max_len = 50, 16

    key = jax.random.PRNGKey(0)
    k_par, k_trg, k_enc = jax.random.split(key, 3)

    params = init_params(k_par, vocab_size, max_len, n_layers,
                         d_model, d_ff, n_heads)

    trg = jax.random.randint(k_trg, (B, S), 0, vocab_size, dtype=jnp.int32)
    enc_out = jax.random.normal(k_enc, (B, Se, d_model), dtype=jnp.float32)

    # causal mask for decoder self-attention; full visibility for cross-attn
    dec_mask = jnp.broadcast_to(
        jnp.tril(jnp.ones((S, S), jnp.int32))[None, None], (B, 1, S, S)
    )
    enc_dec_mask = jnp.ones((B, 1, S, Se), jnp.int32)

    logits, atten_decs, atten_enc_decs = decoder_forward(
        params, trg, enc_out, dec_mask, enc_dec_mask, n_heads, atten_map_save=True
    )
    jax.block_until_ready(logits)
    jax.block_until_ready(atten_decs)
    jax.block_until_ready(atten_enc_decs)

    assert logits.shape == (B, S, vocab_size)
    assert atten_decs.shape == (n_layers, n_heads, S, S)
    assert atten_enc_decs.shape == (n_layers, n_heads, S, Se)

    # also exercise the fast path (Sq-tiled grid, no attention-map output)
    logits2, _, _ = decoder_forward(
        params, trg, enc_out, dec_mask, enc_dec_mask, n_heads, atten_map_save=False
    )
    jax.block_until_ready(logits2)
    assert logits2.shape == (B, S, vocab_size)

    print("KERNEL_OK")
</pallas_src>

<mosaic_0001>
module attributes {stable_mosaic.version = 11 : i64} {
  func.func @_ffn_block_kernel(%arg0: i32, %arg1: memref<16x32xf32, #tpu.memory_space<vmem>>, %arg2: memref<32x64xbf16, #tpu.memory_space<vmem>>, %arg3: memref<1x64xf32, #tpu.memory_space<vmem>>, %arg4: memref<64x32xbf16, #tpu.memory_space<vmem>>, %arg5: memref<1x32xf32, #tpu.memory_space<vmem>>, %arg6: memref<1x32xf32, #tpu.memory_space<vmem>>, %arg7: memref<1x32xf32, #tpu.memory_space<vmem>>, %arg8: memref<16x32xf32, #tpu.memory_space<vmem>>) attributes {dimension_semantics = [#tpu.dimension_semantics<parallel>], iteration_bounds = array<i64: 1>, scalar_prefetch = 0 : i64, scratch_operands = 0 : i64, tpu.core_type = #tpu.core_type<tc>, window_params = [{transform_indices = @transform_0, window_bounds = array<i64: 16, 32>}, {pipeline_mode = #tpu.pipeline_mode<synchronous>, transform_indices = @transform_1, window_bounds = array<i64: 32, 64>}, {pipeline_mode = #tpu.pipeline_mode<synchronous>, transform_indices = @transform_2, window_bounds = array<i64: 1, 64>}, {pipeline_mode = #tpu.pipeline_mode<synchronous>, transform_indices = @transform_3, window_bounds = array<i64: 64, 32>}, {pipeline_mode = #tpu.pipeline_mode<synchronous>, transform_indices = @transform_4, window_bounds = array<i64: 1, 32>}, {pipeline_mode = #tpu.pipeline_mode<synchronous>, transform_indices = @transform_5, window_bounds = array<i64: 1, 32>}, {pipeline_mode = #tpu.pipeline_mode<synchronous>, transform_indices = @transform_6, window_bounds = array<i64: 1, 32>}, {transform_indices = @transform_7, window_bounds = array<i64: 16, 32>}]} {
    %c0 = arith.constant 0 : index
    %c0_0 = arith.constant 0 : index
    %0 = vector.load %arg1[%c0, %c0_0] : memref<16x32xf32, #tpu.memory_space<vmem>>, vector<16x32xf32>
    %1 = arith.truncf %0 : vector<16x32xf32> to vector<16x32xbf16>
    %c0_1 = arith.constant 0 : index
    %c0_2 = arith.constant 0 : index
    %2 = vector.load %arg2[%c0_1, %c0_2] : memref<32x64xbf16, #tpu.memory_space<vmem>>, vector<32x64xbf16>
    %cst = arith.constant dense<0.000000e+00> : vector<16x64xf32>
    %3 = tpu.matmul %1, %2, %cst {dimension_numbers = #tpu.dot_dimension_numbers<[1], [0], [0], [1], [0, 0, 1, 1], [], []>} : vector<16x32xbf16>, vector<32x64xbf16>, vector<16x64xf32> -> vector<16x64xf32>
    %c0_3 = arith.constant 0 : index
    %c0_4 = arith.constant 0 : index
    %4 = vector.load %arg3[%c0_3, %c0_4] : memref<1x64xf32, #tpu.memory_space<vmem>>, vector<1x64xf32>
    %5 = vector.broadcast %4 : vector<1x64xf32> to vector<16x64xf32>
    %6 = arith.addf %3, %5 : vector<16x64xf32>
    %cst_5 = arith.constant 0.000000e+00 : f32
    %7 = vector.broadcast %cst_5 : f32 to vector<16x64xf32>
    %8 = arith.maximumf %6, %7 : vector<16x64xf32>
    %9 = arith.truncf %8 : vector<16x64xf32> to vector<16x64xbf16>
    %c0_6 = arith.constant 0 : index
    %c0_7 = arith.constant 0 : index
    %10 = vector.load %arg4[%c0_6, %c0_7] : memref<64x32xbf16, #tpu.memory_space<vmem>>, vector<64x32xbf16>
    %cst_8 = arith.constant dense<0.000000e+00> : vector<16x32xf32>
    %11 = tpu.matmul %9, %10, %cst_8 {dimension_numbers = #tpu.dot_dimension_numbers<[1], [0], [0], [1], [0, 0, 1, 1], [], []>} : vector<16x64xbf16>, vector<64x32xbf16>, vector<16x32xf32> -> vector<16x32xf32>
    %c0_9 = arith.constant 0 : index
    %c0_10 = arith.constant 0 : index
    %12 = vector.load %arg5[%c0_9, %c0_10] : memref<1x32xf32, #tpu.memory_space<vmem>>, vector<1x32xf32>
    %13 = vector.broadcast %12 : vector<1x32xf32> to vector<16x32xf32>
    %14 = arith.addf %11, %13 : vector<16x32xf32>
    %15 = arith.addf %0, %14 : vector<16x32xf32>
    %cst_11 = arith.constant dense<0.000000e+00> : vector<16xf32>
    %16 = vector.multi_reduction <add>, %15, %cst_11 [1] : vector<16x32xf32> to vector<16xf32>
    %17 = vector.shape_cast %16 : vector<16xf32> to vector<16x1xf32>
    %cst_12 = arith.constant 3.200000e+01 : f32
    %18 = vector.broadcast %cst_12 : f32 to vector<16x1xf32>
    %19 = arith.divf %17, %18 : vector<16x1xf32>
    %20 = vector.broadcast %19 : vector<16x1xf32> to vector<16x32xf32>
    %21 = arith.subf %15, %20 : vector<16x32xf32>
    %22 = arith.mulf %21, %21 : vector<16x32xf32>
    %cst_13 = arith.constant dense<0.000000e+00> : vector<16xf32>
    %23 = vector.multi_reduction <add>, %22, %cst_13 [1] : vector<16x32xf32> to vector<16xf32>
    %24 = vector.shape_cast %23 : vector<16xf32> to vector<16x1xf32>
    %cst_14 = arith.constant 3.200000e+01 : f32
    %25 = vector.broadcast %cst_14 : f32 to vector<16x1xf32>
    %26 = arith.divf %24, %25 : vector<16x1xf32>
    %27 = vector.broadcast %19 : vector<16x1xf32> to vector<16x32xf32>
    %28 = arith.subf %15, %27 : vector<16x32xf32>
    %cst_15 = arith.constant 9.99999974E-6 : f32
    %29 = vector.broadcast %cst_15 : f32 to vector<16x1xf32>
    %30 = arith.addf %26, %29 : vector<16x1xf32>
    %31 = math.rsqrt %30 : vector<16x1xf32>
    %32 = vector.broadcast %31 : vector<16x1xf32> to vector<16x32xf32>
    %33 = arith.mulf %28, %32 : vector<16x32xf32>
    %c0_16 = arith.constant 0 : index
    %c0_17 = arith.constant 0 : index
    %34 = vector.load %arg6[%c0_16, %c0_17] : memref<1x32xf32, #tpu.memory_space<vmem>>, vector<1x32xf32>
    %35 = vector.broadcast %34 : vector<1x32xf32> to vector<16x32xf32>
    %36 = arith.mulf %33, %35 : vector<16x32xf32>
    %c0_18 = arith.constant 0 : index
    %c0_19 = arith.constant 0 : index
    %37 = vector.load %arg7[%c0_18, %c0_19] : memref<1x32xf32, #tpu.memory_space<vmem>>, vector<1x32xf32>
    %38 = vector.broadcast %37 : vector<1x32xf32> to vector<16x32xf32>
    %39 = arith.addf %36, %38 : vector<16x32xf32>
    %c0_20 = arith.constant 0 : index
    %c0_21 = arith.constant 0 : index
    %40 = vector.load %arg8[%c0_20, %c0_21] : memref<16x32xf32, #tpu.memory_space<vmem>>, vector<16x32xf32>
    tpu.vector_store %arg8[%c0_20, %c0_21], %39 {strides = array<i32>} : memref<16x32xf32, #tpu.memory_space<vmem>>, vector<16x32xf32>,
    return
  }
  func.func @transform_0(%arg0: i32) -> (i32, i32) {
    %c0_i32 = arith.constant 0 : i32
    %c0_i32_0 = arith.constant 0 : i32
    return %arg0, %c0_i32 : i32, i32
  }
  func.func @transform_1(%arg0: i32) -> (i32, i32) {
    %c0_i32 = arith.constant 0 : i32
    %c0_i32_0 = arith.constant 0 : i32
    %c0_i32_1 = arith.constant 0 : i32
    return %c0_i32, %c0_i32_0 : i32, i32
  }
  func.func @transform_2(%arg0: i32) -> (i32, i32) {
    %c0_i32 = arith.constant 0 : i32
    %c0_i32_0 = arith.constant 0 : i32
    %c0_i32_1 = arith.constant 0 : i32
    return %c0_i32, %c0_i32_0 : i32, i32
  }
  func.func @transform_3(%arg0: i32) -> (i32, i32) {
    %c0_i32 = arith.constant 0 : i32
    %c0_i32_0 = arith.constant 0 : i32
    %c0_i32_1 = arith.constant 0 : i32
    return %c0_i32, %c0_i32_0 : i32, i32
  }
  func.func @transform_4(%arg0: i32) -> (i32, i32) {
    %c0_i32 = arith.constant 0 : i32
    %c0_i32_0 = arith.constant 0 : i32
    %c0_i32_1 = arith.constant 0 : i32
    return %c0_i32, %c0_i32_0 : i32, i32
  }
  func.func @transform_5(%arg0: i32) -> (i32, i32) {
    %c0_i32 = arith.constant 0 : i32
    %c0_i32_0 = arith.constant 0 : i32
    %c0_i32_1 = arith.constant 0 : i32
    return %c0_i32, %c0_i32_0 : i32, i32
  }
  func.func @transform_6(%arg0: i32) -> (i32, i32) {
    %c0_i32 = arith.constant 0 : i32
    %c0_i32_0 = arith.constant 0 : i32
    %c0_i32_1 = arith.constant 0 : i32
    return %c0_i32, %c0_i32_0 : i32, i32
  }
  func.func @transform_7(%arg0: i32) -> (i32, i32) {
    %c0_i32 = arith.constant 0 : i32
    %c0_i32_0 = arith.constant 0 : i32
    return %arg0, %c0_i32 : i32, i32
  }
}

module attributes {stable_mosaic.version = 11 : i64} {
  func.func @_mha_block_kernel(%arg0: i32, %arg1: i32, %arg2: memref<1x8x32xf32, #tpu.memory_space<vmem>>, %arg3: memref<1x8x8xbf16, #tpu.memory_space<vmem>>, %arg4: memref<32x96xbf16, #tpu.memory_space<vmem>>, %arg5: memref<1x96xf32, #tpu.memory_space<vmem>>, %arg6: memref<32x32xbf16, #tpu.memory_space<vmem>>, %arg7: memref<1x32xf32, #tpu.memory_space<vmem>>, %arg8: memref<1x32xf32, #tpu.memory_space<vmem>>, %arg9: memref<1x32xf32, #tpu.memory_space<vmem>>, %arg10: memref<1x8x32xf32, #tpu.memory_space<vmem>>, %arg11: memref<1x4x8x8xf32, #tpu.memory_space<vmem>>, %arg12: memref<8x96xbf16, #tpu.memory_space<vmem>>, %arg13: memref<8x32xbf16, #tpu.memory_space<vmem>>) attributes {dimension_semantics = [#tpu.dimension_semantics<arbitrary>, #tpu.dimension_semantics<arbitrary>], iteration_bounds = array<i64: 2, 1>, scalar_prefetch = 0 : i64, scratch_operands = 2 : i64, tpu.core_type = #tpu.core_type<tc>, window_params = [{transform_indices = @transform_0, window_bounds = array<i64: 1, 8, 32>}, {transform_indices = @transform_1, window_bounds = array<i64: 1, 8, 8>}, {pipeline_mode = #tpu.pipeline_mode<synchronous>, transform_indices = @transform_2, window_bounds = array<i64: 32, 96>}, {pipeline_mode = #tpu.pipeline_mode<synchronous>, transform_indices = @transform_3, window_bounds = array<i64: 1, 96>}, {pipeline_mode = #tpu.pipeline_mode<synchronous>, transform_indices = @transform_4, window_bounds = array<i64: 32, 32>}, {pipeline_mode = #tpu.pipeline_mode<synchronous>, transform_indices = @transform_5, window_bounds = array<i64: 1, 32>}, {pipeline_mode = #tpu.pipeline_mode<synchronous>, transform_indices = @transform_6, window_bounds = array<i64: 1, 32>}, {pipeline_mode = #tpu.pipeline_mode<synchronous>, transform_indices = @transform_7, window_bounds = array<i64: 1, 32>}, {transform_indices = @transform_8, window_bounds = array<i64: 1, 8, 32>}, {transform_indices = @transform_9, window_bounds = array<i64: 1, 4, 8, 8>}]} {
    %c8_i32 = arith.constant 8 : i32
    %0 = arith.muli %arg1, %c8_i32 : i32
    %1 = tpu.assume_multiple %0, 8 : i32
    %c0_i32 = arith.constant 0 : i32
    %2 = arith.cmpi eq, %arg1, %c0_i32 : i32
    %3 = arith.extui %2 : i1 to i32
    %c0_i32_0 = arith.constant 0 : i32
    %4 = arith.cmpi ne, %3, %c0_i32_0 : i32
    scf.if %4 {
      %c0_64 = arith.constant 0 : index
      %c0_65 = arith.constant 0 : index
      %c0_66 = arith.constant 0 : index
      %133 = vector.load %arg2[%c0_64, %c0_65, %c0_66] : memref<1x8x32xf32, #tpu.memory_space<vmem>>, vector<1x8x32xf32>
      %134 = vector.shape_cast %133 : vector<1x8x32xf32> to vector<8x32xf32>
      %135 = arith.truncf %134 : vector<8x32xf32> to vector<8x32xbf16>
      %c0_67 = arith.constant 0 : index
      %c0_68 = arith.constant 0 : index
      %136 = vector.load %arg4[%c0_67, %c0_68] : memref<32x96xbf16, #tpu.memory_space<vmem>>, vector<32x96xbf16>
      %cst_69 = arith.constant dense<0.000000e+00> : vector<8x96xf32>
      %137 = tpu.matmul %135, %136, %cst_69 {dimension_numbers = #tpu.dot_dimension_numbers<[1], [0], [0], [1], [0, 0, 1, 1], [], []>} : vector<8x32xbf16>, vector<32x96xbf16>, vector<8x96xf32> -> vector<8x96xf32>
      %c0_70 = arith.constant 0 : index
      %c0_71 = arith.constant 0 : index
      %138 = vector.load %arg5[%c0_70, %c0_71] : memref<1x96xf32, #tpu.memory_space<vmem>>, vector<1x96xf32>
      %139 = vector.broadcast %138 : vector<1x96xf32> to vector<8x96xf32>
      %140 = arith.addf %137, %139 : vector<8x96xf32>
      %141 = arith.truncf %140 : vector<8x96xf32> to vector<8x96xbf16>
      %c0_72 = arith.constant 0 : index
      %c0_73 = arith.constant 0 : index
      %142 = vector.load %arg12[%c0_72, %c0_73] : memref<8x96xbf16, #tpu.memory_space<vmem>>, vector<8x96xbf16>
      tpu.vector_store %arg12[%c0_72, %c0_73], %141 {strides = array<i32>} : memref<8x96xbf16, #tpu.memory_space<vmem>>, vector<8x96xbf16>,
    } else {
    }
    %c0 = arith.constant 0 : index
    %5 = arith.index_cast %1 : i32 to index
    %c0_1 = arith.constant 0 : index
    %6 = vector.load %arg2[%c0, %5, %c0_1] : memref<1x8x32xf32, #tpu.memory_space<vmem>>, vector<1x8x32xf32>
    %7 = vector.shape_cast %6 : vector<1x8x32xf32> to vector<8x32xf32>
    %c0_2 = arith.constant 0 : index
    %c0_3 = arith.constant 0 : index
    %c0_4 = arith.constant 0 : index
    %8 = vector.load %arg3[%c0_2, %c0_3, %c0_4] : memref<1x8x8xbf16, #tpu.memory_space<vmem>>, vector<1x8x8xbf16>
    %9 = vector.shape_cast %8 : vector<1x8x8xbf16> to vector<8x8xbf16>
    %10 = arith.extf %9 : vector<8x8xbf16> to vector<8x8xf32>
    %11 = arith.index_cast %1 : i32 to index
    %c0_5 = arith.constant 0 : index
    %12 = vector.load %arg12[%11, %c0_5] : memref<8x96xbf16, #tpu.memory_space<vmem>>, vector<8x8xbf16>
    %c0_6 = arith.constant 0 : index
    %c32 = arith.constant 32 : index
    %13 = vector.load %arg12[%c0_6, %c32] : memref<8x96xbf16, #tpu.memory_space<vmem>>, vector<8x8xbf16>
    %c0_7 = arith.constant 0 : index
    %c64 = arith.constant 64 : index
    %14 = vector.load %arg12[%c0_7, %c64] : memref<8x96xbf16, #tpu.memory_space<vmem>>, vector<8x8xbf16>
    %cst = arith.constant dense<0.000000e+00> : vector<8x8xf32>
    %15 = tpu.matmul %12, %13, %cst {dimension_numbers = #tpu.dot_dimension_numbers<[1], [1], [0], [0], [0, 0, 1, 0], [], []>} : vector<8x8xbf16>, vector<8x8xbf16>, vector<8x8xf32> -> vector<8x8xf32>
    %16 = arith.addf %15, %10 : vector<8x8xf32>
    %cst_8 = arith.constant dense<0xFF800000> : vector<8xf32>
    %17 = vector.multi_reduction <maximumf>, %16, %cst_8 [1] : vector<8x8xf32> to vector<8xf32>
    %18 = vector.shape_cast %17 : vector<8xf32> to vector<8x1xf32>
    %19 = vector.broadcast %18 : vector<8x1xf32> to vector<8x8xf32>
    %20 = arith.subf %16, %19 : vector<8x8xf32>
    %21 = math.exp %20 : vector<8x8xf32>
    %cst_9 = arith.constant dense<0.000000e+00> : vector<8xf32>
    %22 = vector.multi_reduction <add>, %21, %cst_9 [1] : vector<8x8xf32> to vector<8xf32>
    %23 = vector.shape_cast %22 : vector<8xf32> to vector<8x1xf32>
    %24 = vector.broadcast %23 : vector<8x1xf32> to vector<8x8xf32>
    %25 = arith.divf %21, %24 : vector<8x8xf32>
    %c0_i32_10 = arith.constant 0 : i32
    %26 = arith.cmpi eq, %arg0, %c0_i32_10 : i32
    %27 = arith.extui %26 : i1 to i32
    %c0_i32_11 = arith.constant 0 : i32
    %28 = arith.cmpi ne, %27, %c0_i32_11 : i32
    scf.if %28 {
      %c0_64 = arith.constant 0 : index
      %c0_65 = arith.constant 0 : index
      %c0_66 = arith.constant 0 : index
      %c0_67 = arith.constant 0 : index
      %133 = vector.load %arg11[%c0_64, %c0_65, %c0_66, %c0_67] : memref<1x4x8x8xf32, #tpu.memory_space<vmem>>, vector<1x1x8x8xf32>
      %134 = vector.shape_cast %133 : vector<1x1x8x8xf32> to vector<8x8xf32>
      %135 = vector.shape_cast %25 : vector<8x8xf32> to vector<1x1x8x8xf32>
      tpu.vector_store %arg11[%c0_64, %c0_65, %c0_66, %c0_67], %135 {strides = array<i32>} : memref<1x4x8x8xf32, #tpu.memory_space<vmem>>, vector<1x1x8x8xf32>,
    } else {
    }
    %29 = arith.truncf %25 : vector<8x8xf32> to vector<8x8xbf16>
    %cst_12 = arith.constant dense<0.000000e+00> : vector<8x8xf32>
    %30 = tpu.matmul %29, %14, %cst_12 {dimension_numbers = #tpu.dot_dimension_numbers<[1], [0], [0], [1], [0, 0, 1, 1], [], []>} : vector<8x8xbf16>, vector<8x8xbf16>, vector<8x8xf32> -> vector<8x8xf32>
    %31 = arith.truncf %30 : vector<8x8xf32> to vector<8x8xbf16>
    %c0_13 = arith.constant 0 : index
    %c0_14 = arith.constant 0 : index
    %32 = vector.load %arg13[%c0_13, %c0_14] : memref<8x32xbf16, #tpu.memory_space<vmem>>, vector<8x8xbf16>
    tpu.vector_store %arg13[%c0_13, %c0_14], %31 {strides = array<i32>} : memref<8x32xbf16, #tpu.memory_space<vmem>>, vector<8x8xbf16>,
    %33 = arith.index_cast %1 : i32 to index
    %c8 = arith.constant 8 : index
    %34 = vector.load %arg12[%33, %c8] : memref<8x96xbf16, #tpu.memory_space<vmem>>, vector<8x8xbf16>
    %c0_15 = arith.constant 0 : index
    %c40 = arith.constant 40 : index
    %35 = vector.load %arg12[%c0_15, %c40] : memref<8x96xbf16, #tpu.memory_space<vmem>>, vector<8x8xbf16>
    %c0_16 = arith.constant 0 : index
    %c72 = arith.constant 72 : index
    %36 = vector.load %arg12[%c0_16, %c72] : memref<8x96xbf16, #tpu.memory_space<vmem>>, vector<8x8xbf16>
    %cst_17 = arith.constant dense<0.000000e+00> : vector<8x8xf32>
    %37 = tpu.matmul %34, %35, %cst_17 {dimension_numbers = #tpu.dot_dimension_numbers<[1], [1], [0], [0], [0, 0, 1, 0], [], []>} : vector<8x8xbf16>, vector<8x8xbf16>, vector<8x8xf32> -> vector<8x8xf32>
    %38 = arith.addf %37, %10 : vector<8x8xf32>
    %cst_18 = arith.constant dense<0xFF800000> : vector<8xf32>
    %39 = vector.multi_reduction <maximumf>, %38, %cst_18 [1] : vector<8x8xf32> to vector<8xf32>
    %40 = vector.shape_cast %39 : vector<8xf32> to vector<8x1xf32>
    %41 = vector.broadcast %40 : vector<8x1xf32> to vector<8x8xf32>
    %42 = arith.subf %38, %41 : vector<8x8xf32>
    %43 = math.exp %42 : vector<8x8xf32>
    %cst_19 = arith.constant dense<0.000000e+00> : vector<8xf32>
    %44 = vector.multi_reduction <add>, %43, %cst_19 [1] : vector<8x8xf32> to vector<8xf32>
    %45 = vector.shape_cast %44 : vector<8xf32> to vector<8x1xf32>
    %46 = vector.broadcast %45 : vector<8x1xf32> to vector<8x8xf32>
    %47 = arith.divf %43, %46 : vector<8x8xf32>
    %c0_i32_20 = arith.constant 0 : i32
    %48 = arith.cmpi eq, %arg0, %c0_i32_20 : i32
    %49 = arith.extui %48 : i1 to i32
    %c0_i32_21 = arith.constant 0 : i32
    %50 = arith.cmpi ne, %49, %c0_i32_21 : i32
    scf.if %50 {
      %c0_64 = arith.constant 0 : index
      %c1 = arith.constant 1 : index
      %c0_65 = arith.constant 0 : index
      %c0_66 = arith.constant 0 : index
      %133 = vector.load %arg11[%c0_64, %c1, %c0_65, %c0_66] : memref<1x4x8x8xf32, #tpu.memory_space<vmem>>, vector<1x1x8x8xf32>
      %134 = vector.shape_cast %133 : vector<1x1x8x8xf32> to vector<8x8xf32>
      %135 = vector.shape_cast %47 : vector<8x8xf32> to vector<1x1x8x8xf32>
      tpu.vector_store %arg11[%c0_64, %c1, %c0_65, %c0_66], %135 {strides = array<i32>} : memref<1x4x8x8xf32, #tpu.memory_space<vmem>>, vector<1x1x8x8xf32>,
    } else {
    }
    %51 = arith.truncf %47 : vector<8x8xf32> to vector<8x8xbf16>
    %cst_22 = arith.constant dense<0.000000e+00> : vector<8x8xf32>
    %52 = tpu.matmul %51, %36, %cst_22 {dimension_numbers = #tpu.dot_dimension_numbers<[1], [0], [0], [1], [0, 0, 1, 1], [], []>} : vector<8x8xbf16>, vector<8x8xbf16>, vector<8x8xf32> -> vector<8x8xf32>
    %53 = arith.truncf %52 : vector<8x8xf32> to vector<8x8xbf16>
    %c0_23 = arith.constant 0 : index
    %c8_24 = arith.constant 8 : index
    %54 = vector.load %arg13[%c0_23, %c8_24] : memref<8x32xbf16, #tpu.memory_space<vmem>>, vector<8x8xbf16>
    tpu.vector_store %arg13[%c0_23, %c8_24], %53 {strides = array<i32>} : memref<8x32xbf16, #tpu.memory_space<vmem>>, vector<8x8xbf16>,
    %55 = arith.index_cast %1 : i32 to index
    %c16 = arith.constant 16 : index
    %56 = vector.load %arg12[%55, %c16] : memref<8x96xbf16, #tpu.memory_space<vmem>>, vector<8x8xbf16>
    %c0_25 = arith.constant 0 : index
    %c48 = arith.constant 48 : index
    %57 = vector.load %arg12[%c0_25, %c48] : memref<8x96xbf16, #tpu.memory_space<vmem>>, vector<8x8xbf16>
    %c0_26 = arith.constant 0 : index
    %c80 = arith.constant 80 : index
    %58 = vector.load %arg12[%c0_26, %c80] : memref<8x96xbf16, #tpu.memory_space<vmem>>, vector<8x8xbf16>
    %cst_27 = arith.constant dense<0.000000e+00> : vector<8x8xf32>
    %59 = tpu.matmul %56, %57, %cst_27 {dimension_numbers = #tpu.dot_dimension_numbers<[1], [1], [0], [0], [0, 0, 1, 0], [], []>} : vector<8x8xbf16>, vector<8x8xbf16>, vector<8x8xf32> -> vector<8x8xf32>
    %60 = arith.addf %59, %10 : vector<8x8xf32>
    %cst_28 = arith.constant dense<0xFF800000> : vector<8xf32>
    %61 = vector.multi_reduction <maximumf>, %60, %cst_28 [1] : vector<8x8xf32> to vector<8xf32>
    %62 = vector.shape_cast %61 : vector<8xf32> to vector<8x1xf32>
    %63 = vector.broadcast %62 : vector<8x1xf32> to vector<8x8xf32>
    %64 = arith.subf %60, %63 : vector<8x8xf32>
    %65 = math.exp %64 : vector<8x8xf32>
    %cst_29 = arith.constant dense<0.000000e+00> : vector<8xf32>
    %66 = vector.multi_reduction <add>, %65, %cst_29 [1] : vector<8x8xf32> to vector<8xf32>
    %67 = vector.shape_cast %66 : vector<8xf32> to vector<8x1xf32>
    %68 = vector.broadcast %67 : vector<8x1xf32> to vector<8x8xf32>
    %69 = arith.divf %65, %68 : vector<8x8xf32>
    %c0_i32_30 = arith.constant 0 : i32
    %70 = arith.cmpi eq, %arg0, %c0_i32_30 : i32
    %71 = arith.extui %70 : i1 to i32
    %c0_i32_31 = arith.constant 0 : i32
    %72 = arith.cmpi ne, %71, %c0_i32_31 : i32
    scf.if %72 {
      %c0_64 = arith.constant 0 : index
      %c2 = arith.constant 2 : index
      %c0_65 = arith.constant 0 : index
      %c0_66 = arith.constant 0 : index
      %133 = vector.load %arg11[%c0_64, %c2, %c0_65, %c0_66] : memref<1x4x8x8xf32, #tpu.memory_space<vmem>>, vector<1x1x8x8xf32>
      %134 = vector.shape_cast %133 : vector<1x1x8x8xf32> to vector<8x8xf32>
      %135 = vector.shape_cast %69 : vector<8x8xf32> to vector<1x1x8x8xf32>
      tpu.vector_store %arg11[%c0_64, %c2, %c0_65, %c0_66], %135 {strides = array<i32>} : memref<1x4x8x8xf32, #tpu.memory_space<vmem>>, vector<1x1x8x8xf32>,
    } else {
    }
    %73 = arith.truncf %69 : vector<8x8xf32> to vector<8x8xbf16>
    %cst_32 = arith.constant dense<0.000000e+00> : vector<8x8xf32>
    %74 = tpu.matmul %73, %58, %cst_32 {dimension_numbers = #tpu.dot_dimension_numbers<[1], [0], [0], [1], [0, 0, 1, 1], [], []>} : vector<8x8xbf16>, vector<8x8xbf16>, vector<8x8xf32> -> vector<8x8xf32>
    %75 = arith.truncf %74 : vector<8x8xf32> to vector<8x8xbf16>
    %c0_33 = arith.constant 0 : index
    %c16_34 = arith.constant 16 : index
    %76 = vector.load %arg13[%c0_33, %c16_34] : memref<8x32xbf16, #tpu.memory_space<vmem>>, vector<8x8xbf16>
    tpu.vector_store %arg13[%c0_33, %c16_34], %75 {strides = array<i32>} : memref<8x32xbf16, #tpu.memory_space<vmem>>, vector<8x8xbf16>,
    %77 = arith.index_cast %1 : i32 to index
    %c24 = arith.constant 24 : index
    %78 = vector.load %arg12[%77, %c24] : memref<8x96xbf16, #tpu.memory_space<vmem>>, vector<8x8xbf16>
    %c0_35 = arith.constant 0 : index
    %c56 = arith.constant 56 : index
    %79 = vector.load %arg12[%c0_35, %c56] : memref<8x96xbf16, #tpu.memory_space<vmem>>, vector<8x8xbf16>
    %c0_36 = arith.constant 0 : index
    %c88 = arith.constant 88 : index
    %80 = vector.load %arg12[%c0_36, %c88] : memref<8x96xbf16, #tpu.memory_space<vmem>>, vector<8x8xbf16>
    %cst_37 = arith.constant dense<0.000000e+00> : vector<8x8xf32>
    %81 = tpu.matmul %78, %79, %cst_37 {dimension_numbers = #tpu.dot_dimension_numbers<[1], [1], [0], [0], [0, 0, 1, 0], [], []>} : vector<8x8xbf16>, vector<8x8xbf16>, vector<8x8xf32> -> vector<8x8xf32>
    %82 = arith.addf %81, %10 : vector<8x8xf32>
    %cst_38 = arith.constant dense<0xFF800000> : vector<8xf32>
    %83 = vector.multi_reduction <maximumf>, %82, %cst_38 [1] : vector<8x8xf32> to vector<8xf32>
    %84 = vector.shape_cast %83 : vector<8xf32> to vector<8x1xf32>
    %85 = vector.broadcast %84 : vector<8x1xf32> to vector<8x8xf32>
    %86 = arith.subf %82, %85 : vector<8x8xf32>
    %87 = math.exp %86 : vector<8x8xf32>
    %cst_39 = arith.constant dense<0.000000e+00> : vector<8xf32>
    %88 = vector.multi_reduction <add>, %87, %cst_39 [1] : vector<8x8xf32> to vector<8xf32>
    %89 = vector.shape_cast %88 : vector<8xf32> to vector<8x1xf32>
    %90 = vector.broadcast %89 : vector<8x1xf32> to vector<8x8xf32>
    %91 = arith.divf %87, %90 : vector<8x8xf32>
    %c0_i32_40 = arith.constant 0 : i32
    %92 = arith.cmpi eq, %arg0, %c0_i32_40 : i32
    %93 = arith.extui %92 : i1 to i32
    %c0_i32_41 = arith.constant 0 : i32
    %94 = arith.cmpi ne, %93, %c0_i32_41 : i32
    scf.if %94 {
      %c0_64 = arith.constant 0 : index
      %c3 = arith.constant 3 : index
      %c0_65 = arith.constant 0 : index
      %c0_66 = arith.constant 0 : index
      %133 = vector.load %arg11[%c0_64, %c3, %c0_65, %c0_66] : memref<1x4x8x8xf32, #tpu.memory_space<vmem>>, vector<1x1x8x8xf32>
      %134 = vector.shape_cast %133 : vector<1x1x8x8xf32> to vector<8x8xf32>
      %135 = vector.shape_cast %91 : vector<8x8xf32> to vector<1x1x8x8xf32>
      tpu.vector_store %arg11[%c0_64, %c3, %c0_65, %c0_66], %135 {strides = array<i32>} : memref<1x4x8x8xf32, #tpu.memory_space<vmem>>, vector<1x1x8x8xf32>,
    } else {
    }
    %95 = arith.truncf %91 : vector<8x8xf32> to vector<8x8xbf16>
    %cst_42 = arith.constant dense<0.000000e+00> : vector<8x8xf32>
    %96 = tpu.matmul %95, %80, %cst_42 {dimension_numbers = #tpu.dot_dimension_numbers<[1], [0], [0], [1], [0, 0, 1, 1], [], []>} : vector<8x8xbf16>, vector<8x8xbf16>, vector<8x8xf32> -> vector<8x8xf32>
    %97 = arith.truncf %96 : vector<8x8xf32> to vector<8x8xbf16>
    %c0_43 = arith.constant 0 : index
    %c24_44 = arith.constant 24 : index
    %98 = vector.load %arg13[%c0_43, %c24_44] : memref<8x32xbf16, #tpu.memory_space<vmem>>, vector<8x8xbf16>
    tpu.vector_store %arg13[%c0_43, %c24_44], %97 {strides = array<i32>} : memref<8x32xbf16, #tpu.memory_space<vmem>>, vector<8x8xbf16>,
    %c0_45 = arith.constant 0 : index
    %c0_46 = arith.constant 0 : index
    %99 = vector.load %arg13[%c0_45, %c0_46] : memref<8x32xbf16, #tpu.memory_space<vmem>>, vector<8x32xbf16>
    %c0_47 = arith.constant 0 : index
    %c0_48 = arith.constant 0 : index
    %100 = vector.load %arg6[%c0_47, %c0_48] : memref<32x32xbf16, #tpu.memory_space<vmem>>, vector<32x32xbf16>
    %cst_49 = arith.constant dense<0.000000e+00> : vector<8x32xf32>
    %101 = tpu.matmul %99, %100, %cst_49 {dimension_numbers = #tpu.dot_dimension_numbers<[1], [0], [0], [1], [0, 0, 1, 1], [], []>} : vector<8x32xbf16>, vector<32x32xbf16>, vector<8x32xf32> -> vector<8x32xf32>
    %c0_50 = arith.constant 0 : index
    %c0_51 = arith.constant 0 : index
    %102 = vector.load %arg7[%c0_50, %c0_51] : memref<1x32xf32, #tpu.memory_space<vmem>>, vector<1x32xf32>
    %103 = vector.broadcast %102 : vector<1x32xf32> to vector<8x32xf32>
    %104 = arith.addf %101, %103 : vector<8x32xf32>
    %105 = arith.addf %7, %104 : vector<8x32xf32>
    %cst_52 = arith.constant dense<0.000000e+00> : vector<8xf32>
    %106 = vector.multi_reduction <add>, %105, %cst_52 [1] : vector<8x32xf32> to vector<8xf32>
    %107 = vector.shape_cast %106 : vector<8xf32> to vector<8x1xf32>
    %cst_53 = arith.constant 3.200000e+01 : f32
    %108 = vector.broadcast %cst_53 : f32 to vector<8x1xf32>
    %109 = arith.divf %107, %108 : vector<8x1xf32>
    %110 = vector.broadcast %109 : vector<8x1xf32> to vector<8x32xf32>
    %111 = arith.subf %105, %110 : vector<8x32xf32>
    %112 = arith.mulf %111, %111 : vector<8x32xf32>
    %cst_54 = arith.constant dense<0.000000e+00> : vector<8xf32>
    %113 = vector.multi_reduction <add>, %112, %cst_54 [1] : vector<8x32xf32> to vector<8xf32>
    %114 = vector.shape_cast %113 : vector<8xf32> to vector<8x1xf32>
    %cst_55 = arith.constant 3.200000e+01 : f32
    %115 = vector.broadcast %cst_55 : f32 to vector<8x1xf32>
    %116 = arith.divf %114, %115 : vector<8x1xf32>
    %117 = vector.broadcast %109 : vector<8x1xf32> to vector<8x32xf32>
    %118 = arith.subf %105, %117 : vector<8x32xf32>
    %cst_56 = arith.constant 9.99999974E-6 : f32
    %119 = vector.broadcast %cst_56 : f32 to vector<8x1xf32>
    %120 = arith.addf %116, %119 : vector<8x1xf32>
    %121 = math.rsqrt %120 : vector<8x1xf32>
    %122 = vector.broadcast %121 : vector<8x1xf32> to vector<8x32xf32>
    %123 = arith.mulf %118, %122 : vector<8x32xf32>
    %c0_57 = arith.constant 0 : index
    %c0_58 = arith.constant 0 : index
    %124 = vector.load %arg8[%c0_57, %c0_58] : memref<1x32xf32, #tpu.memory_space<vmem>>, vector<1x32xf32>
    %125 = vector.broadcast %124 : vector<1x32xf32> to vector<8x32xf32>
    %126 = arith.mulf %123, %125 : vector<8x32xf32>
    %c0_59 = arith.constant 0 : index
    %c0_60 = arith.constant 0 : index
    %127 = vector.load %arg9[%c0_59, %c0_60] : memref<1x32xf32, #tpu.memory_space<vmem>>, vector<1x32xf32>
    %128 = vector.broadcast %127 : vector<1x32xf32> to vector<8x32xf32>
    %129 = arith.addf %126, %128 : vector<8x32xf32>
    %c0_61 = arith.constant 0 : index
    %c0_62 = arith.constant 0 : index
    %c0_63 = arith.constant 0 : index
    %130 = vector.load %arg10[%c0_61, %c0_62, %c0_63] : memref<1x8x32xf32, #tpu.memory_space<vmem>>, vector<1x8x32xf32>
    %131 = vector.shape_cast %130 : vector<1x8x32xf32> to vector<8x32xf32>
    %132 = vector.shape_cast %129 : vector<8x32xf32> to vector<1x8x32xf32>
    tpu.vector_store %arg10[%c0_61, %c0_62, %c0_63], %132 {strides = array<i32>} : memref<1x8x32xf32, #tpu.memory_space<vmem>>, vector<1x8x32xf32>,
    return
  }
  func.func @transform_0(%arg0: i32, %arg1: i32) -> (i32, i32, i32) {
    %c0_i32 = arith.constant 0 : i32
    %c0_i32_0 = arith.constant 0 : i32
    %c0_i32_1 = arith.constant 0 : i32
    return %arg0, %c0_i32, %c0_i32_0 : i32, i32, i32
  }
  func.func @transform_1(%arg0: i32, %arg1: i32) -> (i32, i32, i32) {
    %c0_i32 = arith.constant 0 : i32
    %c0_i32_0 = arith.constant 0 : i32
    return %arg0, %arg1, %c0_i32 : i32, i32, i32
  }
  func.func @transform_2(%arg0: i32, %arg1: i32) -> (i32, i32) {
    %c0_i32 = arith.constant 0 : i32
    %c0_i32_0 = arith.constant 0 : i32
    %c0_i32_1 = arith.constant 0 : i32
    return %c0_i32, %c0_i32_0 : i32, i32
  }
  func.func @transform_3(%arg0: i32, %arg1: i32) -> (i32, i32) {
    %c0_i32 = arith.constant 0 : i32
    %c0_i32_0 = arith.constant 0 : i32
    %c0_i32_1 = arith.constant 0 : i32
    return %c0_i32, %c0_i32_0 : i32, i32
  }
  func.func @transform_4(%arg0: i32, %arg1: i32) -> (i32, i32) {
    %c0_i32 = arith.constant 0 : i32
    %c0_i32_0 = arith.constant 0 : i32
    %c0_i32_1 = arith.constant 0 : i32
    return %c0_i32, %c0_i32_0 : i32, i32
  }
  func.func @transform_5(%arg0: i32, %arg1: i32) -> (i32, i32) {
    %c0_i32 = arith.constant 0 : i32
    %c0_i32_0 = arith.constant 0 : i32
    %c0_i32_1 = arith.constant 0 : i32
    return %c0_i32, %c0_i32_0 : i32, i32
  }
  func.func @transform_6(%arg0: i32, %arg1: i32) -> (i32, i32) {
    %c0_i32 = arith.constant 0 : i32
    %c0_i32_0 = arith.constant 0 : i32
    %c0_i32_1 = arith.constant 0 : i32
    return %c0_i32, %c0_i32_0 : i32, i32
  }
  func.func @transform_7(%arg0: i32, %arg1: i32) -> (i32, i32) {
    %c0_i32 = arith.constant 0 : i32
    %c0_i32_0 = arith.constant 0 : i32
    %c0_i32_1 = arith.constant 0 : i32
    return %c0_i32, %c0_i32_0 : i32, i32
  }
  func.func @transform_8(%arg0: i32, %arg1: i32) -> (i32, i32, i32) {
    %c0_i32 = arith.constant 0 : i32
    %c0_i32_0 = arith.constant 0 : i32
    return %arg0, %arg1, %c0_i32 : i32, i32, i32
  }
  func.func @transform_9(%arg0: i32, %arg1: i32) -> (i32, i32, i32, i32) {
    %c0_i32 = arith.constant 0 : i32
    %c0_i32_0 = arith.constant 0 : i32
    %c0_i32_1 = arith.constant 0 : i32
    %c0_i32_2 = arith.constant 0 : i32
    return %c0_i32, %c0_i32_0, %arg1, %c0_i32_1 : i32, i32, i32, i32
  }
}

module attributes {stable_mosaic.version = 11 : i64} {
  func.func @_mha_block_kernel(%arg0: i32, %arg1: i32, %arg2: memref<1x8x32xf32, #tpu.memory_space<vmem>>, %arg3: memref<1x8x32xf32, #tpu.memory_space<vmem>>, %arg4: memref<1x8x8xbf16, #tpu.memory_space<vmem>>, %arg5: memref<32x32xbf16, #tpu.memory_space<vmem>>, %arg6: memref<1x32xf32, #tpu.memory_space<vmem>>, %arg7: memref<32x64xbf16, #tpu.memory_space<vmem>>, %arg8: memref<1x64xf32, #tpu.memory_space<vmem>>, %arg9: memref<32x32xbf16, #tpu.memory_space<vmem>>, %arg10: memref<1x32xf32, #tpu.memory_space<vmem>>, %arg11: memref<1x32xf32, #tpu.memory_space<vmem>>, %arg12: memref<1x32xf32, #tpu.memory_space<vmem>>, %arg13: memref<1x8x32xf32, #tpu.memory_space<vmem>>, %arg14: memref<1x4x8x8xf32, #tpu.memory_space<vmem>>, %arg15: memref<8x64xbf16, #tpu.memory_space<vmem>>, %arg16: memref<8x32xbf16, #tpu.memory_space<vmem>>) attributes {dimension_semantics = [#tpu.dimension_semantics<arbitrary>, #tpu.dimension_semantics<arbitrary>], iteration_bounds = array<i64: 2, 1>, scalar_prefetch = 0 : i64, scratch_operands = 2 : i64, tpu.core_type = #tpu.core_type<tc>, window_params = [{transform_indices = @transform_0, window_bounds = array<i64: 1, 8, 32>}, {transform_indices = @transform_1, window_bounds = array<i64: 1, 8, 32>}, {transform_indices = @transform_2, window_bounds = array<i64: 1, 8, 8>}, {pipeline_mode = #tpu.pipeline_mode<synchronous>, transform_indices = @transform_3, window_bounds = array<i64: 32, 32>}, {pipeline_mode = #tpu.pipeline_mode<synchronous>, transform_indices = @transform_4, window_bounds = array<i64: 1, 32>}, {pipeline_mode = #tpu.pipeline_mode<synchronous>, transform_indices = @transform_5, window_bounds = array<i64: 32, 64>}, {pipeline_mode = #tpu.pipeline_mode<synchronous>, transform_indices = @transform_6, window_bounds = array<i64: 1, 64>}, {pipeline_mode = #tpu.pipeline_mode<synchronous>, transform_indices = @transform_7, window_bounds = array<i64: 32, 32>}, {pipeline_mode = #tpu.pipeline_mode<synchronous>, transform_indices = @transform_8, window_bounds = array<i64: 1, 32>}, {pipeline_mode = #tpu.pipeline_mode<synchronous>, transform_indices = @transform_9, window_bounds = array<i64: 1, 32>}, {pipeline_mode = #tpu.pipeline_mode<synchronous>, transform_indices = @transform_10, window_bounds = array<i64: 1, 32>}, {transform_indices = @transform_11, window_bounds = array<i64: 1, 8, 32>}, {transform_indices = @transform_12, window_bounds = array<i64: 1, 4, 8, 8>}]} {
    %c0_i32 = arith.constant 0 : i32
    %0 = arith.cmpi eq, %arg1, %c0_i32 : i32
    %1 = arith.extui %0 : i1 to i32
    %c0_i32_0 = arith.constant 0 : i32
    %2 = arith.cmpi ne, %1, %c0_i32_0 : i32
    scf.if %2 {
      %c0_70 = arith.constant 0 : index
      %c0_71 = arith.constant 0 : index
      %c0_72 = arith.constant 0 : index
      %133 = vector.load %arg3[%c0_70, %c0_71, %c0_72] : memref<1x8x32xf32, #tpu.memory_space<vmem>>, vector<1x8x32xf32>
      %134 = vector.shape_cast %133 : vector<1x8x32xf32> to vector<8x32xf32>
      %135 = arith.truncf %134 : vector<8x32xf32> to vector<8x32xbf16>
      %c0_73 = arith.constant 0 : index
      %c0_74 = arith.constant 0 : index
      %136 = vector.load %arg7[%c0_73, %c0_74] : memref<32x64xbf16, #tpu.memory_space<vmem>>, vector<32x64xbf16>
      %cst_75 = arith.constant dense<0.000000e+00> : vector<8x64xf32>
      %137 = tpu.matmul %135, %136, %cst_75 {dimension_numbers = #tpu.dot_dimension_numbers<[1], [0], [0], [1], [0, 0, 1, 1], [], []>} : vector<8x32xbf16>, vector<32x64xbf16>, vector<8x64xf32> -> vector<8x64xf32>
      %c0_76 = arith.constant 0 : index
      %c0_77 = arith.constant 0 : index
      %138 = vector.load %arg8[%c0_76, %c0_77] : memref<1x64xf32, #tpu.memory_space<vmem>>, vector<1x64xf32>
      %139 = vector.broadcast %138 : vector<1x64xf32> to vector<8x64xf32>
      %140 = arith.addf %137, %139 : vector<8x64xf32>
      %141 = arith.truncf %140 : vector<8x64xf32> to vector<8x64xbf16>
      %c0_78 = arith.constant 0 : index
      %c0_79 = arith.constant 0 : index
      %142 = vector.load %arg15[%c0_78, %c0_79] : memref<8x64xbf16, #tpu.memory_space<vmem>>, vector<8x64xbf16>
      tpu.vector_store %arg15[%c0_78, %c0_79], %141 {strides = array<i32>} : memref<8x64xbf16, #tpu.memory_space<vmem>>, vector<8x64xbf16>,
    } else {
    }
    %c0 = arith.constant 0 : index
    %c0_1 = arith.constant 0 : index
    %c0_2 = arith.constant 0 : index
    %3 = vector.load %arg2[%c0, %c0_1, %c0_2] : memref<1x8x32xf32, #tpu.memory_space<vmem>>, vector<1x8x32xf32>
    %4 = vector.shape_cast %3 : vector<1x8x32xf32> to vector<8x32xf32>
    %5 = arith.truncf %4 : vector<8x32xf32> to vector<8x32xbf16>
    %c0_3 = arith.constant 0 : index
    %c0_4 = arith.constant 0 : index
    %6 = vector.load %arg5[%c0_3, %c0_4] : memref<32x32xbf16, #tpu.memory_space<vmem>>, vector<32x32xbf16>
    %cst = arith.constant dense<0.000000e+00> : vector<8x32xf32>
    %7 = tpu.matmul %5, %6, %cst {dimension_numbers = #tpu.dot_dimension_numbers<[1], [0], [0], [1], [0, 0, 1, 1], [], []>} : vector<8x32xbf16>, vector<32x32xbf16>, vector<8x32xf32> -> vector<8x32xf32>
    %c0_5 = arith.constant 0 : index
    %c0_6 = arith.constant 0 : index
    %8 = vector.load %arg6[%c0_5, %c0_6] : memref<1x32xf32, #tpu.memory_space<vmem>>, vector<1x32xf32>
    %9 = vector.broadcast %8 : vector<1x32xf32> to vector<8x32xf32>
    %10 = arith.addf %7, %9 : vector<8x32xf32>
    %11 = arith.truncf %10 : vector<8x32xf32> to vector<8x32xbf16>
    %c0_7 = arith.constant 0 : index
    %c0_8 = arith.constant 0 : index
    %c0_9 = arith.constant 0 : index
    %12 = vector.load %arg4[%c0_7, %c0_8, %c0_9] : memref<1x8x8xbf16, #tpu.memory_space<vmem>>, vector<1x8x8xbf16>
    %13 = vector.shape_cast %12 : vector<1x8x8xbf16> to vector<8x8xbf16>
    %14 = arith.extf %13 : vector<8x8xbf16> to vector<8x8xf32>
    %15 = vector.extract_strided_slice %11 {offsets = [0, 0], sizes = [8, 8], strides = [1, 1]} : vector<8x32xbf16> to vector<8x8xbf16>
    %c0_10 = arith.constant 0 : index
    %c0_11 = arith.constant 0 : index
    %16 = vector.load %arg15[%c0_10, %c0_11] : memref<8x64xbf16, #tpu.memory_space<vmem>>, vector<8x8xbf16>
    %c0_12 = arith.constant 0 : index
    %c32 = arith.constant 32 : index
    %17 = vector.load %arg15[%c0_12, %c32] : memref<8x64xbf16, #tpu.memory_space<vmem>>, vector<8x8xbf16>
    %cst_13 = arith.constant dense<0.000000e+00> : vector<8x8xf32>
    %18 = tpu.matmul %15, %16, %cst_13 {dimension_numbers = #tpu.dot_dimension_numbers<[1], [1], [0], [0], [0, 0, 1, 0], [], []>} : vector<8x8xbf16>, vector<8x8xbf16>, vector<8x8xf32> -> vector<8x8xf32>
    %19 = arith.addf %18, %14 : vector<8x8xf32>
    %cst_14 = arith.constant dense<0xFF800000> : vector<8xf32>
    %20 = vector.multi_reduction <maximumf>, %19, %cst_14 [1] : vector<8x8xf32> to vector<8xf32>
    %21 = vector.shape_cast %20 : vector<8xf32> to vector<8x1xf32>
    %22 = vector.broadcast %21 : vector<8x1xf32> to vector<8x8xf32>
    %23 = arith.subf %19, %22 : vector<8x8xf32>
    %24 = math.exp %23 : vector<8x8xf32>
    %cst_15 = arith.constant dense<0.000000e+00> : vector<8xf32>
    %25 = vector.multi_reduction <add>, %24, %cst_15 [1] : vector<8x8xf32> to vector<8xf32>
    %26 = vector.shape_cast %25 : vector<8xf32> to vector<8x1xf32>
    %27 = vector.broadcast %26 : vector<8x1xf32> to vector<8x8xf32>
    %28 = arith.divf %24, %27 : vector<8x8xf32>
    %c0_i32_16 = arith.constant 0 : i32
    %29 = arith.cmpi eq, %arg0, %c0_i32_16 : i32
    %30 = arith.extui %29 : i1 to i32
    %c0_i32_17 = arith.constant 0 : i32
    %31 = arith.cmpi ne, %30, %c0_i32_17 : i32
    scf.if %31 {
      %c0_70 = arith.constant 0 : index
      %c0_71 = arith.constant 0 : index
      %c0_72 = arith.constant 0 : index
      %c0_73 = arith.constant 0 : index
      %133 = vector.load %arg14[%c0_70, %c0_71, %c0_72, %c0_73] : memref<1x4x8x8xf32, #tpu.memory_space<vmem>>, vector<1x1x8x8xf32>
      %134 = vector.shape_cast %133 : vector<1x1x8x8xf32> to vector<8x8xf32>
      %135 = vector.shape_cast %28 : vector<8x8xf32> to vector<1x1x8x8xf32>
      tpu.vector_store %arg14[%c0_70, %c0_71, %c0_72, %c0_73], %135 {strides = array<i32>} : memref<1x4x8x8xf32, #tpu.memory_space<vmem>>, vector<1x1x8x8xf32>,
    } else {
    }
    %32 = arith.truncf %28 : vector<8x8xf32> to vector<8x8xbf16>
    %cst_18 = arith.constant dense<0.000000e+00> : vector<8x8xf32>
    %33 = tpu.matmul %32, %17, %cst_18 {dimension_numbers = #tpu.dot_dimension_numbers<[1], [0], [0], [1], [0, 0, 1, 1], [], []>} : vector<8x8xbf16>, vector<8x8xbf16>, vector<8x8xf32> -> vector<8x8xf32>
    %34 = arith.truncf %33 : vector<8x8xf32> to vector<8x8xbf16>
    %c0_19 = arith.constant 0 : index
    %c0_20 = arith.constant 0 : index
    %35 = vector.load %arg16[%c0_19, %c0_20] : memref<8x32xbf16, #tpu.memory_space<vmem>>, vector<8x8xbf16>
    tpu.vector_store %arg16[%c0_19, %c0_20], %34 {strides = array<i32>} : memref<8x32xbf16, #tpu.memory_space<vmem>>, vector<8x8xbf16>,
    %36 = vector.extract_strided_slice %11 {offsets = [0, 8], sizes = [8, 8], strides = [1, 1]} : vector<8x32xbf16> to vector<8x8xbf16>
    %c0_21 = arith.constant 0 : index
    %c8 = arith.constant 8 : index
    %37 = vector.load %arg15[%c0_21, %c8] : memref<8x64xbf16, #tpu.memory_space<vmem>>, vector<8x8xbf16>
    %c0_22 = arith.constant 0 : index
    %c40 = arith.constant 40 : index
    %38 = vector.load %arg15[%c0_22, %c40] : memref<8x64xbf16, #tpu.memory_space<vmem>>, vector<8x8xbf16>
    %cst_23 = arith.constant dense<0.000000e+00> : vector<8x8xf32>
    %39 = tpu.matmul %36, %37, %cst_23 {dimension_numbers = #tpu.dot_dimension_numbers<[1], [1], [0], [0], [0, 0, 1, 0], [], []>} : vector<8x8xbf16>, vector<8x8xbf16>, vector<8x8xf32> -> vector<8x8xf32>
    %40 = arith.addf %39, %14 : vector<8x8xf32>
    %cst_24 = arith.constant dense<0xFF800000> : vector<8xf32>
    %41 = vector.multi_reduction <maximumf>, %40, %cst_24 [1] : vector<8x8xf32> to vector<8xf32>
    %42 = vector.shape_cast %41 : vector<8xf32> to vector<8x1xf32>
    %43 = vector.broadcast %42 : vector<8x1xf32> to vector<8x8xf32>
    %44 = arith.subf %40, %43 : vector<8x8xf32>
    %45 = math.exp %44 : vector<8x8xf32>
    %cst_25 = arith.constant dense<0.000000e+00> : vector<8xf32>
    %46 = vector.multi_reduction <add>, %45, %cst_25 [1] : vector<8x8xf32> to vector<8xf32>
    %47 = vector.shape_cast %46 : vector<8xf32> to vector<8x1xf32>
    %48 = vector.broadcast %47 : vector<8x1xf32> to vector<8x8xf32>
    %49 = arith.divf %45, %48 : vector<8x8xf32>
    %c0_i32_26 = arith.constant 0 : i32
    %50 = arith.cmpi eq, %arg0, %c0_i32_26 : i32
    %51 = arith.extui %50 : i1 to i32
    %c0_i32_27 = arith.constant 0 : i32
    %52 = arith.cmpi ne, %51, %c0_i32_27 : i32
    scf.if %52 {
      %c0_70 = arith.constant 0 : index
      %c1 = arith.constant 1 : index
      %c0_71 = arith.constant 0 : index
      %c0_72 = arith.constant 0 : index
      %133 = vector.load %arg14[%c0_70, %c1, %c0_71, %c0_72] : memref<1x4x8x8xf32, #tpu.memory_space<vmem>>, vector<1x1x8x8xf32>
      %134 = vector.shape_cast %133 : vector<1x1x8x8xf32> to vector<8x8xf32>
      %135 = vector.shape_cast %49 : vector<8x8xf32> to vector<1x1x8x8xf32>
      tpu.vector_store %arg14[%c0_70, %c1, %c0_71, %c0_72], %135 {strides = array<i32>} : memref<1x4x8x8xf32, #tpu.memory_space<vmem>>, vector<1x1x8x8xf32>,
    } else {
    }
    %53 = arith.truncf %49 : vector<8x8xf32> to vector<8x8xbf16>
    %cst_28 = arith.constant dense<0.000000e+00> : vector<8x8xf32>
    %54 = tpu.matmul %53, %38, %cst_28 {dimension_numbers = #tpu.dot_dimension_numbers<[1], [0], [0], [1], [0, 0, 1, 1], [], []>} : vector<8x8xbf16>, vector<8x8xbf16>, vector<8x8xf32> -> vector<8x8xf32>
    %55 = arith.truncf %54 : vector<8x8xf32> to vector<8x8xbf16>
    %c0_29 = arith.constant 0 : index
    %c8_30 = arith.constant 8 : index
    %56 = vector.load %arg16[%c0_29, %c8_30] : memref<8x32xbf16, #tpu.memory_space<vmem>>, vector<8x8xbf16>
    tpu.vector_store %arg16[%c0_29, %c8_30], %55 {strides = array<i32>} : memref<8x32xbf16, #tpu.memory_space<vmem>>, vector<8x8xbf16>,
    %57 = vector.extract_strided_slice %11 {offsets = [0, 16], sizes = [8, 8], strides = [1, 1]} : vector<8x32xbf16> to vector<8x8xbf16>
    %c0_31 = arith.constant 0 : index
    %c16 = arith.constant 16 : index
    %58 = vector.load %arg15[%c0_31, %c16] : memref<8x64xbf16, #tpu.memory_space<vmem>>, vector<8x8xbf16>
    %c0_32 = arith.constant 0 : index
    %c48 = arith.constant 48 : index
    %59 = vector.load %arg15[%c0_32, %c48] : memref<8x64xbf16, #tpu.memory_space<vmem>>, vector<8x8xbf16>
    %cst_33 = arith.constant dense<0.000000e+00> : vector<8x8xf32>
    %60 = tpu.matmul %57, %58, %cst_33 {dimension_numbers = #tpu.dot_dimension_numbers<[1], [1], [0], [0], [0, 0, 1, 0], [], []>} : vector<8x8xbf16>, vector<8x8xbf16>, vector<8x8xf32> -> vector<8x8xf32>
    %61 = arith.addf %60, %14 : vector<8x8xf32>
    %cst_34 = arith.constant dense<0xFF800000> : vector<8xf32>
    %62 = vector.multi_reduction <maximumf>, %61, %cst_34 [1] : vector<8x8xf32> to vector<8xf32>
    %63 = vector.shape_cast %62 : vector<8xf32> to vector<8x1xf32>
    %64 = vector.broadcast %63 : vector<8x1xf32> to vector<8x8xf32>
    %65 = arith.subf %61, %64 : vector<8x8xf32>
    %66 = math.exp %65 : vector<8x8xf32>
    %cst_35 = arith.constant dense<0.000000e+00> : vector<8xf32>
    %67 = vector.multi_reduction <add>, %66, %cst_35 [1] : vector<8x8xf32> to vector<8xf32>
    %68 = vector.shape_cast %67 : vector<8xf32> to vector<8x1xf32>
    %69 = vector.broadcast %68 : vector<8x1xf32> to vector<8x8xf32>
    %70 = arith.divf %66, %69 : vector<8x8xf32>
    %c0_i32_36 = arith.constant 0 : i32
    %71 = arith.cmpi eq, %arg0, %c0_i32_36 : i32
    %72 = arith.extui %71 : i1 to i32
    %c0_i32_37 = arith.constant 0 : i32
    %73 = arith.cmpi ne, %72, %c0_i32_37 : i32
    scf.if %73 {
      %c0_70 = arith.constant 0 : index
      %c2 = arith.constant 2 : index
      %c0_71 = arith.constant 0 : index
      %c0_72 = arith.constant 0 : index
      %133 = vector.load %arg14[%c0_70, %c2, %c0_71, %c0_72] : memref<1x4x8x8xf32, #tpu.memory_space<vmem>>, vector<1x1x8x8xf32>
      %134 = vector.shape_cast %133 : vector<1x1x8x8xf32> to vector<8x8xf32>
      %135 = vector.shape_cast %70 : vector<8x8xf32> to vector<1x1x8x8xf32>
      tpu.vector_store %arg14[%c0_70, %c2, %c0_71, %c0_72], %135 {strides = array<i32>} : memref<1x4x8x8xf32, #tpu.memory_space<vmem>>, vector<1x1x8x8xf32>,
    } else {
    }
    %74 = arith.truncf %70 : vector<8x8xf32> to vector<8x8xbf16>
    %cst_38 = arith.constant dense<0.000000e+00> : vector<8x8xf32>
    %75 = tpu.matmul %74, %59, %cst_38 {dimension_numbers = #tpu.dot_dimension_numbers<[1], [0], [0], [1], [0, 0, 1, 1], [], []>} : vector<8x8xbf16>, vector<8x8xbf16>, vector<8x8xf32> -> vector<8x8xf32>
    %76 = arith.truncf %75 : vector<8x8xf32> to vector<8x8xbf16>
    %c0_39 = arith.constant 0 : index
    %c16_40 = arith.constant 16 : index
    %77 = vector.load %arg16[%c0_39, %c16_40] : memref<8x32xbf16, #tpu.memory_space<vmem>>, vector<8x8xbf16>
    tpu.vector_store %arg16[%c0_39, %c16_40], %76 {strides = array<i32>} : memref<8x32xbf16, #tpu.memory_space<vmem>>, vector<8x8xbf16>,
    %78 = vector.extract_strided_slice %11 {offsets = [0, 24], sizes = [8, 8], strides = [1, 1]} : vector<8x32xbf16> to vector<8x8xbf16>
    %c0_41 = arith.constant 0 : index
    %c24 = arith.constant 24 : index
    %79 = vector.load %arg15[%c0_41, %c24] : memref<8x64xbf16, #tpu.memory_space<vmem>>, vector<8x8xbf16>
    %c0_42 = arith.constant 0 : index
    %c56 = arith.constant 56 : index
    %80 = vector.load %arg15[%c0_42, %c56] : memref<8x64xbf16, #tpu.memory_space<vmem>>, vector<8x8xbf16>
    %cst_43 = arith.constant dense<0.000000e+00> : vector<8x8xf32>
    %81 = tpu.matmul %78, %79, %cst_43 {dimension_numbers = #tpu.dot_dimension_numbers<[1], [1], [0], [0], [0, 0, 1, 0], [], []>} : vector<8x8xbf16>, vector<8x8xbf16>, vector<8x8xf32> -> vector<8x8xf32>
    %82 = arith.addf %81, %14 : vector<8x8xf32>
    %cst_44 = arith.constant dense<0xFF800000> : vector<8xf32>
    %83 = vector.multi_reduction <maximumf>, %82, %cst_44 [1] : vector<8x8xf32> to vector<8xf32>
    %84 = vector.shape_cast %83 : vector<8xf32> to vector<8x1xf32>
    %85 = vector.broadcast %84 : vector<8x1xf32> to vector<8x8xf32>
    %86 = arith.subf %82, %85 : vector<8x8xf32>
    %87 = math.exp %86 : vector<8x8xf32>
    %cst_45 = arith.constant dense<0.000000e+00> : vector<8xf32>
    %88 = vector.multi_reduction <add>, %87, %cst_45 [1] : vector<8x8xf32> to vector<8xf32>
    %89 = vector.shape_cast %88 : vector<8xf32> to vector<8x1xf32>
    %90 = vector.broadcast %89 : vector<8x1xf32> to vector<8x8xf32>
    %91 = arith.divf %87, %90 : vector<8x8xf32>
    %c0_i32_46 = arith.constant 0 : i32
    %92 = arith.cmpi eq, %arg0, %c0_i32_46 : i32
    %93 = arith.extui %92 : i1 to i32
    %c0_i32_47 = arith.constant 0 : i32
    %94 = arith.cmpi ne, %93, %c0_i32_47 : i32
    scf.if %94 {
      %c0_70 = arith.constant 0 : index
      %c3 = arith.constant 3 : index
      %c0_71 = arith.constant 0 : index
      %c0_72 = arith.constant 0 : index
      %133 = vector.load %arg14[%c0_70, %c3, %c0_71, %c0_72] : memref<1x4x8x8xf32, #tpu.memory_space<vmem>>, vector<1x1x8x8xf32>
      %134 = vector.shape_cast %133 : vector<1x1x8x8xf32> to vector<8x8xf32>
      %135 = vector.shape_cast %91 : vector<8x8xf32> to vector<1x1x8x8xf32>
      tpu.vector_store %arg14[%c0_70, %c3, %c0_71, %c0_72], %135 {strides = array<i32>} : memref<1x4x8x8xf32, #tpu.memory_space<vmem>>, vector<1x1x8x8xf32>,
    } else {
    }
    %95 = arith.truncf %91 : vector<8x8xf32> to vector<8x8xbf16>
    %cst_48 = arith.constant dense<0.000000e+00> : vector<8x8xf32>
    %96 = tpu.matmul %95, %80, %cst_48 {dimension_numbers = #tpu.dot_dimension_numbers<[1], [0], [0], [1], [0, 0, 1, 1], [], []>} : vector<8x8xbf16>, vector<8x8xbf16>, vector<8x8xf32> -> vector<8x8xf32>
    %97 = arith.truncf %96 : vector<8x8xf32> to vector<8x8xbf16>
    %c0_49 = arith.constant 0 : index
    %c24_50 = arith.constant 24 : index
    %98 = vector.load %arg16[%c0_49, %c24_50] : memref<8x32xbf16, #tpu.memory_space<vmem>>, vector<8x8xbf16>
    tpu.vector_store %arg16[%c0_49, %c24_50], %97 {strides = array<i32>} : memref<8x32xbf16, #tpu.memory_space<vmem>>, vector<8x8xbf16>,
    %c0_51 = arith.constant 0 : index
    %c0_52 = arith.constant 0 : index
    %99 = vector.load %arg16[%c0_51, %c0_52] : memref<8x32xbf16, #tpu.memory_space<vmem>>, vector<8x32xbf16>
    %c0_53 = arith.constant 0 : index
    %c0_54 = arith.constant 0 : index
    %100 = vector.load %arg9[%c0_53, %c0_54] : memref<32x32xbf16, #tpu.memory_space<vmem>>, vector<32x32xbf16>
    %cst_55 = arith.constant dense<0.000000e+00> : vector<8x32xf32>
    %101 = tpu.matmul %99, %100, %cst_55 {dimension_numbers = #tpu.dot_dimension_numbers<[1], [0], [0], [1], [0, 0, 1, 1], [], []>} : vector<8x32xbf16>, vector<32x32xbf16>, vector<8x32xf32> -> vector<8x32xf32>
    %c0_56 = arith.constant 0 : index
    %c0_57 = arith.constant 0 : index
    %102 = vector.load %arg10[%c0_56, %c0_57] : memref<1x32xf32, #tpu.memory_space<vmem>>, vector<1x32xf32>
    %103 = vector.broadcast %102 : vector<1x32xf32> to vector<8x32xf32>
    %104 = arith.addf %101, %103 : vector<8x32xf32>
    %105 = arith.addf %4, %104 : vector<8x32xf32>
    %cst_58 = arith.constant dense<0.000000e+00> : vector<8xf32>
    %106 = vector.multi_reduction <add>, %105, %cst_58 [1] : vector<8x32xf32> to vector<8xf32>
    %107 = vector.shape_cast %106 : vector<8xf32> to vector<8x1xf32>
    %cst_59 = arith.constant 3.200000e+01 : f32
    %108 = vector.broadcast %cst_59 : f32 to vector<8x1xf32>
    %109 = arith.divf %107, %108 : vector<8x1xf32>
    %110 = vector.broadcast %109 : vector<8x1xf32> to vector<8x32xf32>
    %111 = arith.subf %105, %110 : vector<8x32xf32>
    %112 = arith.mulf %111, %111 : vector<8x32xf32>
    %cst_60 = arith.constant dense<0.000000e+00> : vector<8xf32>
    %113 = vector.multi_reduction <add>, %112, %cst_60 [1] : vector<8x32xf32> to vector<8xf32>
    %114 = vector.shape_cast %113 : vector<8xf32> to vector<8x1xf32>
    %cst_61 = arith.constant 3.200000e+01 : f32
    %115 = vector.broadcast %cst_61 : f32 to vector<8x1xf32>
    %116 = arith.divf %114, %115 : vector<8x1xf32>
    %117 = vector.broadcast %109 : vector<8x1xf32> to vector<8x32xf32>
    %118 = arith.subf %105, %117 : vector<8x32xf32>
    %cst_62 = arith.constant 9.99999974E-6 : f32
    %119 = vector.broadcast %cst_62 : f32 to vector<8x1xf32>
    %120 = arith.addf %116, %119 : vector<8x1xf32>
    %121 = math.rsqrt %120 : vector<8x1xf32>
    %122 = vector.broadcast %121 : vector<8x1xf32> to vector<8x32xf32>
    %123 = arith.mulf %118, %122 : vector<8x32xf32>
    %c0_63 = arith.constant 0 : index
    %c0_64 = arith.constant 0 : index
    %124 = vector.load %arg11[%c0_63, %c0_64] : memref<1x32xf32, #tpu.memory_space<vmem>>, vector<1x32xf32>
    %125 = vector.broadcast %124 : vector<1x32xf32> to vector<8x32xf32>
    %126 = arith.mulf %123, %125 : vector<8x32xf32>
    %c0_65 = arith.constant 0 : index
    %c0_66 = arith.constant 0 : index
    %127 = vector.load %arg12[%c0_65, %c0_66] : memref<1x32xf32, #tpu.memory_space<vmem>>, vector<1x32xf32>
    %128 = vector.broadcast %127 : vector<1x32xf32> to vector<8x32xf32>
    %129 = arith.addf %126, %128 : vector<8x32xf32>
    %c0_67 = arith.constant 0 : index
    %c0_68 = arith.constant 0 : index
    %c0_69 = arith.constant 0 : index
    %130 = vector.load %arg13[%c0_67, %c0_68, %c0_69] : memref<1x8x32xf32, #tpu.memory_space<vmem>>, vector<1x8x32xf32>
    %131 = vector.shape_cast %130 : vector<1x8x32xf32> to vector<8x32xf32>
    %132 = vector.shape_cast %129 : vector<8x32xf32> to vector<1x8x32xf32>
    tpu.vector_store %arg13[%c0_67, %c0_68, %c0_69], %132 {strides = array<i32>} : memref<1x8x32xf32, #tpu.memory_space<vmem>>, vector<1x8x32xf32>,
    return
  }
  func.func @transform_0(%arg0: i32, %arg1: i32) -> (i32, i32, i32) {
    %c0_i32 = arith.constant 0 : i32
    %c0_i32_0 = arith.constant 0 : i32
    return %arg0, %arg1, %c0_i32 : i32, i32, i32
  }
  func.func @transform_1(%arg0: i32, %arg1: i32) -> (i32, i32, i32) {
    %c0_i32 = arith.constant 0 : i32
    %c0_i32_0 = arith.constant 0 : i32
    %c0_i32_1 = arith.constant 0 : i32
    return %arg0, %c0_i32, %c0_i32_0 : i32, i32, i32
  }
  func.func @transform_2(%arg0: i32, %arg1: i32) -> (i32, i32, i32) {
    %c0_i32 = arith.constant 0 : i32
    %c0_i32_0 = arith.constant 0 : i32
    return %arg0, %arg1, %c0_i32 : i32, i32, i32
  }
  func.func @transform_3(%arg0: i32, %arg1: i32) -> (i32, i32) {
    %c0_i32 = arith.constant 0 : i32
    %c0_i32_0 = arith.constant 0 : i32
    %c0_i32_1 = arith.constant 0 : i32
    return %c0_i32, %c0_i32_0 : i32, i32
  }
  func.func @transform_4(%arg0: i32, %arg1: i32) -> (i32, i32) {
    %c0_i32 = arith.constant 0 : i32
    %c0_i32_0 = arith.constant 0 : i32
    %c0_i32_1 = arith.constant 0 : i32
    return %c0_i32, %c0_i32_0 : i32, i32
  }
  func.func @transform_5(%arg0: i32, %arg1: i32) -> (i32, i32) {
    %c0_i32 = arith.constant 0 : i32
    %c0_i32_0 = arith.constant 0 : i32
    %c0_i32_1 = arith.constant 0 : i32
    return %c0_i32, %c0_i32_0 : i32, i32
  }
  func.func @transform_6(%arg0: i32, %arg1: i32) -> (i32, i32) {
    %c0_i32 = arith.constant 0 : i32
    %c0_i32_0 = arith.constant 0 : i32
    %c0_i32_1 = arith.constant 0 : i32
    return %c0_i32, %c0_i32_0 : i32, i32
  }
  func.func @transform_7(%arg0: i32, %arg1: i32) -> (i32, i32) {
    %c0_i32 = arith.constant 0 : i32
    %c0_i32_0 = arith.constant 0 : i32
    %c0_i32_1 = arith.constant 0 : i32
    return %c0_i32, %c0_i32_0 : i32, i32
  }
  func.func @transform_8(%arg0: i32, %arg1: i32) -> (i32, i32) {
    %c0_i32 = arith.constant 0 : i32
    %c0_i32_0 = arith.constant 0 : i32
    %c0_i32_1 = arith.constant 0 : i32
    return %c0_i32, %c0_i32_0 : i32, i32
  }
  func.func @transform_9(%arg0: i32, %arg1: i32) -> (i32, i32) {
    %c0_i32 = arith.constant 0 : i32
    %c0_i32_0 = arith.constant 0 : i32
    %c0_i32_1 = arith.constant 0 : i32
    return %c0_i32, %c0_i32_0 : i32, i32
  }
  func.func @transform_10(%arg0: i32, %arg1: i32) -> (i32, i32) {
    %c0_i32 = arith.constant 0 : i32
    %c0_i32_0 = arith.constant 0 : i32
    %c0_i32_1 = arith.constant 0 : i32
    return %c0_i32, %c0_i32_0 : i32, i32
  }
  func.func @transform_11(%arg0: i32, %arg1: i32) -> (i32, i32, i32) {
    %c0_i32 = arith.constant 0 : i32
    %c0_i32_0 = arith.constant 0 : i32
    return %arg0, %arg1, %c0_i32 : i32, i32, i32
  }
  func.func @transform_12(%arg0: i32, %arg1: i32) -> (i32, i32, i32, i32) {
    %c0_i32 = arith.constant 0 : i32
    %c0_i32_0 = arith.constant 0 : i32
    %c0_i32_1 = arith.constant 0 : i32
    %c0_i32_2 = arith.constant 0 : i32
    return %c0_i32, %c0_i32_0, %arg1, %c0_i32_1 : i32, i32, i32, i32
  }
}

module attributes {stable_mosaic.version = 11 : i64} {
  func.func @_linear_kernel(%arg0: i32, %arg1: i32, %arg2: memref<16x32xbf16, #tpu.memory_space<vmem>>, %arg3: memref<32x50xbf16, #tpu.memory_space<vmem>>, %arg4: memref<1x50xf32, #tpu.memory_space<vmem>>, %arg5: memref<16x50xf32, #tpu.memory_space<vmem>>) attributes {dimension_semantics = [#tpu.dimension_semantics<parallel>, #tpu.dimension_semantics<parallel>], iteration_bounds = array<i64: 1, 1>, scalar_prefetch = 0 : i64, scratch_operands = 0 : i64, tpu.core_type = #tpu.core_type<tc>, window_params = [{transform_indices = @transform_0, window_bounds = array<i64: 16, 32>}, {transform_indices = @transform_1, window_bounds = array<i64: 32, 50>}, {transform_indices = @transform_2, window_bounds = array<i64: 1, 50>}, {transform_indices = @transform_3, window_bounds = array<i64: 16, 50>}]} {
    %c0 = arith.constant 0 : index
    %c0_0 = arith.constant 0 : index
    %0 = vector.load %arg2[%c0, %c0_0] : memref<16x32xbf16, #tpu.memory_space<vmem>>, vector<16x32xbf16>
    %c0_1 = arith.constant 0 : index
    %c0_2 = arith.constant 0 : index
    %1 = vector.load %arg3[%c0_1, %c0_2] : memref<32x50xbf16, #tpu.memory_space<vmem>>, vector<32x50xbf16>
    %cst = arith.constant dense<0.000000e+00> : vector<16x50xf32>
    %2 = tpu.matmul %0, %1, %cst {dimension_numbers = #tpu.dot_dimension_numbers<[1], [0], [0], [1], [0, 0, 1, 1], [], []>} : vector<16x32xbf16>, vector<32x50xbf16>, vector<16x50xf32> -> vector<16x50xf32>
    %c0_3 = arith.constant 0 : index
    %c0_4 = arith.constant 0 : index
    %3 = vector.load %arg4[%c0_3, %c0_4] : memref<1x50xf32, #tpu.memory_space<vmem>>, vector<1x50xf32>
    %4 = vector.broadcast %3 : vector<1x50xf32> to vector<16x50xf32>
    %5 = arith.addf %2, %4 : vector<16x50xf32>
    %c0_5 = arith.constant 0 : index
    %c0_6 = arith.constant 0 : index
    %6 = vector.load %arg5[%c0_5, %c0_6] : memref<16x50xf32, #tpu.memory_space<vmem>>, vector<16x50xf32>
    tpu.vector_store %arg5[%c0_5, %c0_6], %5 {strides = array<i32>} : memref<16x50xf32, #tpu.memory_space<vmem>>, vector<16x50xf32>,
    return
  }
  func.func @transform_0(%arg0: i32, %arg1: i32) -> (i32, i32) {
    %c0_i32 = arith.constant 0 : i32
    %c0_i32_0 = arith.constant 0 : i32
    return %arg1, %c0_i32 : i32, i32
  }
  func.func @transform_1(%arg0: i32, %arg1: i32) -> (i32, i32) {
    %c0_i32 = arith.constant 0 : i32
    %c0_i32_0 = arith.constant 0 : i32
    return %c0_i32, %arg0 : i32, i32
  }
  func.func @transform_2(%arg0: i32, %arg1: i32) -> (i32, i32) {
    %c0_i32 = arith.constant 0 : i32
    %c0_i32_0 = arith.constant 0 : i32
    return %c0_i32, %arg0 : i32, i32
  }
  func.func @transform_3(%arg0: i32, %arg1: i32) -> (i32, i32) {
    %c0_i32 = arith.constant 0 : i32
    return %arg1, %arg0 : i32, i32
  }
}

</mosaic_0001>

<llo_original>
// kernel: decoder_forward.13
$region0: #{decoder_forward.13}
  #allocation0 [shape = 'u32[]', space=smem, size = 0x4, offset = 0x4, fixed_abs, tag = 'smem constant byte address 0x4 - core index']
  #allocation1 [shape = 'u32[144,128]{1,0:T(1,128)}', space=vmem, size = 0x12000, scoped, tag = 'internal scratch']
  %s0 = inlined_call_operand.vmem [shape: bf16[16,32], index: 0, kind: input, shape index: {}]
  %s1 = inlined_call_operand.vmem [shape: bf16[32,50], index: 1, kind: input, shape index: {}]
  %s2 = inlined_call_operand.vmem [shape: f32[1,50], index: 2, kind: input, shape index: {}]
  %s3 = inlined_call_operand.hbm [shape: f32[16,50], index: 3, kind: output, shape index: {}]
  %s4 = sld [smem:[#allocation0]]
  $region22: #{decoder_forward.13} parent=0
    _
  %s6 = ssub.s32 1, %s4
  %s7 = scalar_select 0, %s6, %s4
  $region1: #{decoder_forward.13} parent=0
    #allocation2 [shape = 'u8[8192]{0}', space=vmem, size = 0x2000, scoped, tag = 'output window, operand 0, single buffered']
    #allocation3 [shape = 's32[1]{0}', space=sflag, size = 0x4, scoped, tag = 'scoped memory for decoder_forward.13']
    %8 = vsyncpa [#allocation3], 0
    // Predicated region
    $region2: #{decoder_forward.13} parent=1 // pred_check
      _
    $region3: #{decoder_forward.13} parent=1 // pred_check_branch
      %10 = sbr.rel (0) target = $region5
    $region4: #{decoder_forward.13} parent=1 // pred_region
      _
    $region5: #{decoder_forward.13} parent=1 // pred_fallthru
      _
    // Predicated region
    $region6: #{decoder_forward.13} parent=1 // pred_check
      _
    $region7: #{decoder_forward.13} parent=1 // pred_check_branch
      %12 = sbr.rel (0) target = $region9
    $region8: #{decoder_forward.13} parent=1 // pred_region
      _
    $region9: #{decoder_forward.13} parent=1 // pred_fallthru
      _
    // Predicated region
    $region10: #{decoder_forward.13} parent=1 // pred_check
      _
    $region11: #{decoder_forward.13} parent=1 // pred_check_branch
      %14 = sbr.rel (0) target = $region13
    $region12: #{decoder_forward.13} parent=1 // pred_region
      _
    $region13: #{decoder_forward.13} parent=1 // pred_fallthru
      _
    %v16 = vld [vmem:[%s0] sm:$0xf]
    %v17 = vld [vmem:[%s0 + $0x4] sm:$0xf]
    %v18 = vld [vmem:[%s1] sm:$0xf]
    %v19 = vld [vmem:[%s1 + $0x4] sm:$0xf]
    %v20 = vld [vmem:[%s1 + $0x8] sm:$0xf]
    %v21 = vld [vmem:[%s1 + $0xc] sm:$0xf]
    %v22 = vld [vmem:[%s2] sm:$0x1]
    %v24 = vlaneseq
    %v25 = vshrl.u32 %v24, 7
    %v26 = vsub.s32 0, %v25
    %v27 = vrot.slane %v22, %v26
    %v31 = vunpack.c.l.b16 %v16
    %v32 = vunpack.c.l.b16 %v17
    %v33 = vpack.c.b16 %v32, %v31
    %v38 = vunpack.c.l.b16 %v18
    %v39 = vunpack.c.l.b16 %v19
    %v40 = vunpack.c.l.b16 %v20
    %v41 = vunpack.c.l.b16 %v21
    %v42 = vpack.c.b16 %v39, %v38
    %v43 = vpack.c.b16 %v41, %v40
    %vm46 = vcmask 261120
    %v48 = vsel %vm46, %v33, 0
    %50 = vmatprep.subr.bf16.mxu0 0
    %51 = vmatpush1.bf16.msra.mxu0 %v42
    %52 = vmatprep.subr.bf16.mxu0 0
    %53 = vmatpush1.bf16.msra.mxu0 %v43
    %54 = vmatprep.subr.bf16.mxu0 0
    %55 = vmatpush1.bf16.msra.mxu0 0
    %56 = vmatprep.subr.bf16.mxu0 0
    %57 = vmatpush1.bf16.msra.mxu0 0
    %58 = vmatprep.subr.bf16.mxu0 0
    %59 = vmatpush1.bf16.msra.mxu0 0
    %60 = vmatprep.subr.bf16.mxu0 0
    %61 = vmatpush1.bf16.msra.mxu0 0
    %62 = vmatprep.subr.bf16.mxu0 0
    %63 = vmatpush1.bf16.msra.mxu0 0
    %64 = vmatprep.subr.bf16.mxu0 0
    %65 = vmatpush1.bf16.msra.mxu0 0
    %66 = vmatprep.subr.bf16.mxu0 0
    %67 = vmatpush1.bf16.msra.mxu0 0
    %68 = vmatprep.subr.bf16.mxu0 0
    %69 = vmatpush1.bf16.msra.mxu0 0
    %70 = vmatprep.subr.bf16.mxu0 0
    %71 = vmatpush1.bf16.msra.mxu0 0
    %72 = vmatprep.subr.bf16.mxu0 0
    %73 = vmatpush1.bf16.msra.mxu0 0
    %74 = vmatprep.subr.bf16.mxu0 0
    %75 = vmatpush1.bf16.msra.mxu0 0
    %76 = vmatprep.subr.bf16.mxu0 0
    %77 = vmatpush1.bf16.msra.mxu0 0
    %78 = vmatprep.subr.bf16.mxu0 0
    %79 = vmatpush1.bf16.msra.mxu0 0
    %80 = vmatprep.subr.bf16.mxu0 0
    %81 = vmatpush1.bf16.msra.mxu0 0
    %82 = vmatprep.mubr.bf16.mxu0 0
    %83 = vmatmul.mubr.bf16.gmra.mrb[0].mxu0 %v48
    %v84 = vpop.f32.mrb[0].mxu0
    %v85 = vadd.f32 %v27, %v84
    %v86 = vpop.f32.mrb[0].mxu0
    %v87 = vpop.f32.mrb[0].mxu0
    %v88 = vadd.f32 %v27, %v87
    %v89 = vpop.f32.mrb[0].mxu0
    %90 = vdwg.mxu0
    %vm91 = vcmask 408576
    %92 = vst.msk [vmem:[#allocation2] sm:$0xff] %vm91, %v85
    %93 = vst.msk [vmem:[#allocation2 + $0x8] sm:$0xff] %vm91, %v88
    // Predicated region
    $region14: #{decoder_forward.13} parent=1 // pred_check
      _
    $region15: #{decoder_forward.13} parent=1 // pred_check_branch
      %95 = sbr.rel (0) target = $region17
    $region16: #{decoder_forward.13} parent=1 // pred_region
      %s97 = ssub.s32 256, 256
      %98 = vsyncadd [#allocation3], %s97
      %s99 = sshll.u32 [#allocation2], 4
      %s100 = int_to_ptr.vmem [resolvable:$true] %s99
      %105 = dma.vmem_to_hbm [thread:$0]  %s100, 256, %s3, [#allocation3], 128, 128, 8
    $region17: #{decoder_forward.13} parent=1 // pred_fallthru
      _
    // Predicated region
    $region18: #{decoder_forward.13} parent=1 // pred_check
      _
    $region19: #{decoder_forward.13} parent=1 // pred_check_branch
      %107 = sbr.rel (0) target = $region21
    $region20: #{decoder_forward.13} parent=1 // pred_region
      %108 = dma.done [#allocation3], 256
    $region21: #{decoder_forward.13} parent=1 // pred_fallthru
      _
    %109 = vsyncpa [#allocation3], 1

// kernel: decoder_forward.9
$region0: #{decoder_forward.9}
  #allocation0 [shape = 'u32[]', space=smem, size = 0x4, offset = 0x4, fixed_abs, tag = 'smem constant byte address 0x4 - core index']
  #allocation1 [shape = 'u32[144,128]{1,0:T(1,128)}', space=vmem, size = 0x12000, scoped, tag = 'internal scratch']
  %s0 = inlined_call_operand.vmem [shape: f32[16,32], index: 0, kind: input, shape index: {}]
  %s1 = inlined_call_operand.vmem [shape: bf16[32,64], index: 1, kind: input, shape index: {}]
  %s2 = inlined_call_operand.vmem [shape: f32[1,64], index: 2, kind: input, shape index: {}]
  %s3 = inlined_call_operand.vmem [shape: bf16[64,32], index: 3, kind: input, shape index: {}]
  %s4 = inlined_call_operand.vmem [shape: f32[1,32], index: 4, kind: input, shape index: {}]
  %s5 = inlined_call_operand.vmem [shape: f32[1,32], index: 5, kind: input, shape index: {}]
  %s6 = inlined_call_operand.vmem [shape: f32[1,32], index: 6, kind: input, shape index: {}]
  %s7 = inlined_call_operand.vmem [shape: f32[16,32], index: 7, kind: output, shape index: {}]
  %s8 = sld [smem:[#allocation0]]
  $region38: #{decoder_forward.9} parent=0
    _
  %s10 = ssub.s32 1, %s8
  %s11 = scalar_select 0, %s10, %s8
  // Predicated region
  $region2: #{decoder_forward.9} parent=0 // pred_check
    _
  $region3: #{decoder_forward.9} parent=0 // pred_check_branch
    %13 = sbr.rel (0) target = $region5
  $region4: #{decoder_forward.9} parent=0 // pred_region
    _
  $region5: #{decoder_forward.9} parent=0 // pred_fallthru
    _
  // Predicated region
  $region6: #{decoder_forward.9} parent=0 // pred_check
    _
  $region7: #{decoder_forward.9} parent=0 // pred_check_branch
    %15 = sbr.rel (0) target = $region9
  $region8: #{decoder_forward.9} parent=0 // pred_region
    _
  $region9: #{decoder_forward.9} parent=0 // pred_fallthru
    _
  // Predicated region
  $region10: #{decoder_forward.9} parent=0 // pred_check
    _
  $region11: #{decoder_forward.9} parent=0 // pred_check_branch
    %17 = sbr.rel (0) target = $region13
  $region12: #{decoder_forward.9} parent=0 // pred_region
    _
  $region13: #{decoder_forward.9} parent=0 // pred_fallthru
    _
  // Predicated region
  $region14: #{decoder_forward.9} parent=0 // pred_check
    _
  $region15: #{decoder_forward.9} parent=0 // pred_check_branch
    %19 = sbr.rel (0) target = $region17
  $region16: #{decoder_forward.9} parent=0 // pred_region
    _
  $region17: #{decoder_forward.9} parent=0 // pred_fallthru
    _
  // Predicated region
  $region18: #{decoder_forward.9} parent=0 // pred_check
    _
  $region19: #{decoder_forward.9} parent=0 // pred_check_branch
    %21 = sbr.rel (0) target = $region21
  $region20: #{decoder_forward.9} parent=0 // pred_region
    _
  $region21: #{decoder_forward.9} parent=0 // pred_fallthru
    _
  // Predicated region
  $region22: #{decoder_forward.9} parent=0 // pred_check
    _
  $region23: #{decoder_forward.9} parent=0 // pred_check_branch
    %23 = sbr.rel (0) target = $region25
  $region24: #{decoder_forward.9} parent=0 // pred_region
    _
  $region25: #{decoder_forward.9} parent=0 // pred_fallthru
    _
  // Predicated region
  $region26: #{decoder_forward.9} parent=0 // pred_check
    _
  $region27: #{decoder_forward.9} parent=0 // pred_check_branch
    %25 = sbr.rel (0) target = $region29
  $region28: #{decoder_forward.9} parent=0 // pred_region
    _
  $region29: #{decoder_forward.9} parent=0 // pred_fallthru
    _
  %v27 = vld [vmem:[%s0] sm:$0xff]
  %v28 = vld [vmem:[%s0 + $0x8] sm:$0xff]
  %v29 = vpack.c.bf16 %v28, %v27
  %v30 = vld [vmem:[%s1] sm:$0xf]
  %v31 = vld [vmem:[%s1 + $0x4] sm:$0xf]
  %v32 = vld [vmem:[%s1 + $0x8] sm:$0xf]
  %v33 = vld [vmem:[%s1 + $0xc] sm:$0xf]
  %v34 = vld [vmem:[%s2] sm:$0x1]
  %v36 = vlaneseq
  %v37 = vshrl.u32 %v36, 7
  %v38 = vsub.s32 0, %v37
  %v39 = vrot.slane %v34, %v38
  %v45 = vunpack.c.l.b16 %v30
  %v46 = vunpack.c.l.b16 %v31
  %v47 = vunpack.c.l.b16 %v32
  %v48 = vunpack.c.l.b16 %v33
  %v49 = vpack.c.b16 %v46, %v45
  %v50 = vpack.c.b16 %v48, %v47
  %vm53 = vcmask 261120
  %v55 = vsel %vm53, %v29, 0
  %57 = vmatprep.subr.bf16.mxu0 0
  %58 = vmatpush1.bf16.msra.mxu0 %v49
  %59 = vmatprep.subr.bf16.mxu0 0
  %60 = vmatpush1.bf16.msra.mxu0 %v50
  %61 = vmatprep.subr.bf16.mxu0 0
  %62 = vmatpush1.bf16.msra.mxu0 0
  %63 = vmatprep.subr.bf16.mxu0 0
  %64 = vmatpush1.bf16.msra.mxu0 0
  %65 = vmatprep.subr.bf16.mxu0 0
  %66 = vmatpush1.bf16.msra.mxu0 0
  %67 = vmatprep.subr.bf16.mxu0 0
  %68 = vmatpush1.bf16.msra.mxu0 0
  %69 = vmatprep.subr.bf16.mxu0 0
  %70 = vmatpush1.bf16.msra.mxu0 0
  %71 = vmatprep.subr.bf16.mxu0 0
  %72 = vmatpush1.bf16.msra.mxu0 0
  %73 = vmatprep.subr.bf16.mxu0 0
  %74 = vmatpush1.bf16.msra.mxu0 0
  %75 = vmatprep.subr.bf16.mxu0 0
  %76 = vmatpush1.bf16.msra.mxu0 0
  %77 = vmatprep.subr.bf16.mxu0 0
  %78 = vmatpush1.bf16.msra.mxu0 0
  %79 = vmatprep.subr.bf16.mxu0 0
  %80 = vmatpush1.bf16.msra.mxu0 0
  %81 = vmatprep.subr.bf16.mxu0 0
  %82 = vmatpush1.bf16.msra.mxu0 0
  %83 = vmatprep.subr.bf16.mxu0 0
  %84 = vmatpush1.bf16.msra.mxu0 0
  %85 = vmatprep.subr.bf16.mxu0 0
  %86 = vmatpush1.bf16.msra.mxu0 0
  %87 = vmatprep.subr.bf16.mxu0 0
  %88 = vmatpush1.bf16.msra.mxu0 0
  %89 = vmatprep.mubr.bf16.mxu0 0
  %90 = vmatmul.mubr.bf16.gmra.mrb[0].mxu0 %v55
  %v91 = vpop.f32.mrb[0].mxu0
  %v92 = vadd.f32 %v39, %v91
  %v93 = vpop.f32.mrb[0].mxu0
  %v94 = vpop.f32.mrb[0].mxu0
  %v95 = vadd.f32 %v39, %v94
  %v96 = vpop.f32.mrb[0].mxu0
  %97 = vdwg.mxu0
  %v98 = vmax.f32 %v92, 0.0
  %v99 = vmax.f32 %v95, 0.0
  %v100 = vpack.c.bf16 %v99, %v98
  %v101 = vld [vmem:[%s3] sm:$0xf]
  %v102 = vld [vmem:[%s3 + $0x4] sm:$0xf]
  %v103 = vld [vmem:[%s3 + $0x8] sm:$0xf]
  %v104 = vld [vmem:[%s3 + $0xc] sm:$0xf]
  %v105 = vld [vmem:[%s3 + $0x10] sm:$0xf]
  %v106 = vld [vmem:[%s3 + $0x14] sm:$0xf]
  %v107 = vld [vmem:[%s3 + $0x18] sm:$0xf]
  %v108 = vld [vmem:[%s3 + $0x1c] sm:$0xf]
  %v109 = vld [vmem:[%s4] sm:$0x1]
  %v111 = vlaneseq
  %v112 = vshrl.u32 %v111, 7
  %v113 = vsub.s32 0, %v112
  %v114 = vrot.slane %v109, %v113
  %v124 = vunpack.c.l.b16 %v101
  %v125 = vunpack.c.l.b16 %v102
  %v126 = vunpack.c.l.b16 %v103
  %v127 = vunpack.c.l.b16 %v104
  %v128 = vunpack.c.l.b16 %v105
  %v129 = vunpack.c.l.b16 %v106
  %v130 = vunpack.c.l.b16 %v107
  %v131 = vunpack.c.l.b16 %v108
  %v132 = vpack.c.b16 %v125, %v124
  %v133 = vpack.c.b16 %v127, %v126
  %v134 = vpack.c.b16 %v129, %v128
  %v135 = vpack.c.b16 %v131, %v130
  %vm140 = vcmask 523264
  %v142 = vsel %vm140, %v100, 0
  %144 = vmatprep.subr.bf16.mxu0 0
  %145 = vmatpush1.bf16.msra.mxu0 %v132
  %146 = vmatprep.subr.bf16.mxu0 0
  %147 = vmatpush1.bf16.msra.mxu0 %v133
  %148 = vmatprep.subr.bf16.mxu0 0
  %149 = vmatpush1.bf16.msra.mxu0 %v134
  %150 = vmatprep.subr.bf16.mxu0 0
  %151 = vmatpush1.bf16.msra.mxu0 %v135
  %152 = vmatprep.subr.bf16.mxu0 0
  %153 = vmatpush1.bf16.msra.mxu0 0
  %154 = vmatprep.subr.bf16.mxu0 0
  %155 = vmatpush1.bf16.msra.mxu0 0
  %156 = vmatprep.subr.bf16.mxu0 0
  %157 = vmatpush1.bf16.msra.mxu0 0
  %158 = vmatprep.subr.bf16.mxu0 0
  %159 = vmatpush1.bf16.msra.mxu0 0
  %160 = vmatprep.subr.bf16.mxu0 0
  %161 = vmatpush1.bf16.msra.mxu0 0
  %162 = vmatprep.subr.bf16.mxu0 0
  %163 = vmatpush1.bf16.msra.mxu0 0
  %164 = vmatprep.subr.bf16.mxu0 0
  %165 = vmatpush1.bf16.msra.mxu0 0
  %166 = vmatprep.subr.bf16.mxu0 0
  %167 = vmatpush1.bf16.msra.mxu0 0
  %168 = vmatprep.subr.bf16.mxu0 0
  %169 = vmatpush1.bf16.msra.mxu0 0
  %170 = vmatprep.subr.bf16.mxu0 0
  %171 = vmatpush1.bf16.msra.mxu0 0
  %172 = vmatprep.subr.bf16.mxu0 0
  %173 = vmatpush1.bf16.msra.mxu0 0
  %174 = vmatprep.subr.bf16.mxu0 0
  %175 = vmatpush1.bf16.msra.mxu0 0
  %176 = vmatprep.mubr.bf16.mxu0 0
  %177 = vmatmul.mubr.bf16.gmra.mrb[0].mxu0 %v142
  %v178 = vpop.f32.mrb[0].mxu0
  %v179 = vadd.f32 %v114, %v178
  %v180 = vpop.f32.mrb[0].mxu0
  %v181 = vpop.f32.mrb[0].mxu0
  %v182 = vadd.f32 %v114, %v181
  %v183 = vpop.f32.mrb[0].mxu0
  %184 = vdwg.mxu0
  %v185 = vadd.f32 %v27, %v179
  %v186 = vadd.f32 %v28, %v182
  %v187 = vsel %vm53, %v185, 0.0
  %188 = vadd.xlane.f32.xlu0 %v187
  %v189 = vpop.xlane.xlu0 %188
  %v190 = vsel %vm53, %v186, 0.0
  %191 = vadd.xlane.f32.xlu0 %v190
  %v192 = vpop.xlane.xlu0 %191
  %v193 = vrcp.pop 32.0
  %v194 = vmul.f32 %v189, %v193
  %v195 = vmul.f32 %v192, %v193
  %v196 = vsub.f32 %v185, %v194
  %v197 = vsub.f32 %v186, %v195
  %v198 = vmul.f32 %v196, %v196
  %v199 = vmul.f32 %v197, %v197
  %v200 = vsel %vm53, %v198, 0.0
  %201 = vadd.xlane.f32.xlu0 %v200
  %v202 = vpop.xlane.xlu0 %201
  %v203 = vsel %vm53, %v199, 0.0
  %204 = vadd.xlane.f32.xlu0 %v203
  %v205 = vpop.xlane.xlu0 %204
  %v206 = vmul.f32 %v202, %v193
  %v207 = vmul.f32 %v205, %v193
  %v208 = vadd.f32 %v206, 1e-05
  %v209 = vadd.f32 %v207, 1e-05
  %v210 = vrsqrt.pop %v208
  %v211 = vrsqrt.pop %v209
  %v212 = vmul.f32 %v196, %v210
  %v213 = vmul.f32 %v197, %v211
  %v214 = vld [vmem:[%s5] sm:$0x1]
  %v216 = vlaneseq
  %v217 = vshrl.u32 %v216, 7
  %v218 = vsub.s32 0, %v217
  %v219 = vrot.slane %v214, %v218
  %v221 = vmul.f32 %v212, %v219
  %v222 = vmul.f32 %v213, %v219
  %v223 = vld [vmem:[%s6] sm:$0x1]
  %v225 = vlaneseq
  %v226 = vshrl.u32 %v225, 7
  %v227 = vsub.s32 0, %v226
  %v228 = vrot.slane %v223, %v227
  %v230 = vadd.f32 %v221, %v228
  %v231 = vadd.f32 %v222, %v228
  %232 = vst.msk [vmem:[%s7] sm:$0xff] %vm53, %v230
  %233 = vst.msk [vmem:[%s7 + $0x8] sm:$0xff] %vm53, %v231
  // Predicated region
  $region30: #{decoder_forward.9} parent=0 // pred_check
    _
  $region31: #{decoder_forward.9} parent=0 // pred_check_branch
    %235 = sbr.rel (0) target = $region33
  $region32: #{decoder_forward.9} parent=0 // pred_region
    _
  $region33: #{decoder_forward.9} parent=0 // pred_fallthru
    _
  // Predicated region
  $region34: #{decoder_forward.9} parent=0 // pred_check
    _
  $region35: #{decoder_forward.9} parent=0 // pred_check_branch
    %237 = sbr.rel (0) target = $region37
  $region36: #{decoder_forward.9} parent=0 // pred_region
    _
  $region37: #{decoder_forward.9} parent=0 // pred_fallthru
    _

// kernel: decoder_forward.7
$region0: #{decoder_forward.7}
  #allocation0 [shape = 'u32[]', space=smem, size = 0x4, offset = 0x4, fixed_abs, tag = 'smem constant byte address 0x4 - core index']
  #allocation1 [shape = 'u32[144,128]{1,0:T(1,128)}', space=vmem, size = 0x12000, scoped, tag = 'internal scratch']
  #allocation2 [shape = 'bf16[8,96]{1,0:T(8,128)(2,1)}', space=vmem, size = 0x800, scoped, tag = 'scratch operand']
  #allocation3 [shape = 'bf16[8,32]{1,0:T(8,128)(2,1)}', space=vmem, size = 0x800, scoped, tag = 'scratch operand']
  %s0 = inlined_call_operand.vmem [shape: f32[2,8,32], index: 0, kind: input, shape index: {}]
  %s1 = inlined_call_operand.vmem [shape: bf16[2,8,8], index: 1, kind: input, shape index: {}]
  %s2 = inlined_call_operand.vmem [shape: bf16[32,96], index: 2, kind: input, shape index: {}]
  %s3 = inlined_call_operand.vmem [shape: f32[1,96], index: 3, kind: input, shape index: {}]
  %s4 = inlined_call_operand.vmem [shape: bf16[32,32], index: 4, kind: input, shape index: {}]
  %s5 = inlined_call_operand.vmem [shape: f32[1,32], index: 5, kind: input, shape index: {}]
  %s6 = inlined_call_operand.vmem [shape: f32[1,32], index: 6, kind: input, shape index: {}]
  %s7 = inlined_call_operand.vmem [shape: f32[1,32], index: 7, kind: input, shape index: {}]
  %s8 = inlined_call_operand.vmem [shape: f32[2,8,32], index: 8, kind: output, shape index: {0}]
  %s9 = inlined_call_operand.vmem [shape: f32[1,4,8,8], index: 9, kind: output, shape index: {1}]
  %10 = xla_tuple %s8, %s9
  %s11 = sld [smem:[#allocation0]]
  $region93: #{decoder_forward.7} parent=0
    _
  %s13 = ssub.s32 1, %s11
  %s14 = scalar_select 0, %s13, %s11
  loop: start=0, step=1, limit=4
  $region2: #{decoder_forward.7} parent=0 // loop_pre_header
    _
  $region3: #{decoder_forward.7} parent=0 // loop_header
    %s16 = sphi 0, %s20
    %p17 = scmp.ge.s32.totalorder %s16, 4
    %s23 = sphi 0, %s35
    %s24 = sphi 0, %s31
    %s25 = sphi 0, %s23
    %s26 = sphi 0, %s24
    %s27 = sphi 0, %s25
    %s28 = sphi 0, %s26
    %s38 = sphi 0, %s40
    %s41 = sphi 0, %s38
    %s42 = sphi 0, %s41
    %s58 = sphi 0, %s42
    %s66 = sphi 0, %s68
    %s69 = sphi 0, %s66
    %s70 = sphi 0, %s69
    %s86 = sphi 0, %s70
    %s90 = sphi 0, %s90
    %s92 = sphi 0, %s90
    %s93 = sphi 0, %s92
    %s107 = sphi 0, %s93
    %s111 = sphi 0, %s111
    %s113 = sphi 0, %s111
    %s114 = sphi 0, %s113
    %s128 = sphi 0, %s114
    %s132 = sphi 0, %s132
    %s134 = sphi 0, %s132
    %s135 = sphi 0, %s134
    %s149 = sphi 0, %s135
    %s153 = sphi 0, %s153
    %s155 = sphi 0, %s153
    %s156 = sphi 0, %s155
    %s170 = sphi 0, %s156
    %s174 = sphi 0, %s174
    %s176 = sphi 0, %s174
    %s177 = sphi 0, %s176
    %s191 = sphi 0, %s177
    %s195 = sphi 0, %s195
    %s197 = sphi 0, %s195
    %s198 = sphi 0, %s197
    %s212 = sphi 0, %s198
    %s220 = sphi 0, %s222
    %s223 = sphi 0, %s220
    %s224 = sphi 0, %s223
    %s240 = sphi 0, %s224
    %s246 = sphi 0, %s248
    %s249 = sphi 0, %s246
    %s250 = sphi 0, %s249
    %s266 = sphi 0, %s250
  $region4: #{decoder_forward.7} parent=0 // loop_header_branch
    %19 = sbr.rel (%p17) target = $region8
  $region5: #{decoder_forward.7} parent=0 // loop_body
    %s21 = ssub.s32 %s16, 1
    %s22 = ssub.s32 %s16, 2
    %s29 = sadd.s32 1, %s24
    %p30 = scmp.ge.s32.totalorder %s29, 1
    %s31 = scalar_select %p30, 0, %s29
    %s32 = sadd.s32 1, %s23
    %s33 = scalar_select %p30, %s32, %s23
    %p34 = scmp.ge.s32.totalorder %s33, 2
    %s35 = scalar_select %p34, 0, %s33
    %s36 = ssub.s32 %s23, %s35
    %p37 = scmp.eq.s32.totalorder %s36, 0
    %s39 = sadd.s32 %s38, 1
    %s40 = scalar_select %p37, %s38, %s39
    %p43 = pneg %p37
    %p44 = scmp.eq.s32.totalorder %s16, 1
    %p45 = por %p43, %p44
    %p46 = scmp.ne.s32.totalorder %s38, %s41
    %p47 = scmp.eq.s32.totalorder %s16, 0
    %p48 = por %p46, %p47
    %p49 = scmp.ne.s32.totalorder %s38, %s41
    %p50 = scmp.eq.s32.totalorder %s21, 1
    %p51 = por %p49, %p50
    %p52 = scmp.ne.s32.totalorder %s41, %s42
    %p53 = scmp.eq.s32.totalorder %s21, 0
    %p54 = por %p52, %p53
    %p55 = scmp.ne.s32.totalorder %s41, %s42
    %p56 = scmp.eq.s32.totalorder %s22, 1
    %p57 = por %p55, %p56
    %p59 = scmp.ne.s32.totalorder %s42, %s58
    %p60 = scmp.eq.s32.totalorder %s22, 0
    %p61 = por %p59, %p60
    %s62 = ssub.s32 %s23, %s35
    %s63 = ssub.s32 %s24, %s31
    %s64 = sor.u32 %s62, %s63
    %p65 = scmp.eq.s32.totalorder %s64, 0
    %s67 = sadd.s32 %s66, 1
    %s68 = scalar_select %p65, %s66, %s67
    %p71 = pneg %p65
    %p72 = scmp.eq.s32.totalorder %s16, 1
    %p73 = por %p71, %p72
    %p74 = scmp.ne.s32.totalorder %s66, %s69
    %p75 = scmp.eq.s32.totalorder %s16, 0
    %p76 = por %p74, %p75
    %p77 = scmp.ne.s32.totalorder %s66, %s69
    %p78 = scmp.eq.s32.totalorder %s21, 1
    %p79 = por %p77, %p78
    %p80 = scmp.ne.s32.totalorder %s69, %s70
    %p81 = scmp.eq.s32.totalorder %s21, 0
    %p82 = por %p80, %p81
    %p83 = scmp.ne.s32.totalorder %s69, %s70
    %p84 = scmp.eq.s32.totalorder %s22, 1
    %p85 = por %p83, %p84
    %p87 = scmp.ne.s32.totalorder %s70, %s86
    %p88 = scmp.eq.s32.totalorder %s22, 0
    %p89 = por %p87, %p88
    %s91 = sadd.s32 %s90, 1
    %p94 = scmp.eq.s32.totalorder %s16, 1
    %p95 = scmp.ne.s32.totalorder %s90, %s92
    %p96 = scmp.eq.s32.totalorder %s16, 0
    %p97 = por %p95, %p96
    %p98 = scmp.ne.s32.totalorder %s90, %s92
    %p99 = scmp.eq.s32.totalorder %s21, 1
    %p100 = por %p98, %p99
    %p101 = scmp.ne.s32.totalorder %s92, %s93
    %p102 = scmp.eq.s32.totalorder %s21, 0
    %p103 = por %p101, %p102
    %p104 = scmp.ne.s32.totalorder %s92, %s93
    %p105 = scmp.eq.s32.totalorder %s22, 1
    %p106 = por %p104, %p105
    %p108 = scmp.ne.s32.totalorder %s93, %s107
    %p109 = scmp.eq.s32.totalorder %s22, 0
    %p110 = por %p108, %p109
    %s112 = sadd.s32 %s111, 1
    %p115 = scmp.eq.s32.totalorder %s16, 1
    %p116 = scmp.ne.s32.totalorder %s111, %s113
    %p117 = scmp.eq.s32.totalorder %s16, 0
    %p118 = por %p116, %p117
    %p119 = scmp.ne.s32.totalorder %s111, %s113
    %p120 = scmp.eq.s32.totalorder %s21, 1
    %p121 = por %p119, %p120
    %p122 = scmp.ne.s32.totalorder %s113, %s114
    %p123 = scmp.eq.s32.totalorder %s21, 0
    %p124 = por %p122, %p123
    %p125 = scmp.ne.s32.totalorder %s113, %s114
    %p126 = scmp.eq.s32.totalorder %s22, 1
    %p127 = por %p125, %p126
    %p129 = scmp.ne.s32.totalorder %s114, %s128
    %p130 = scmp.eq.s32.totalorder %s22, 0
    %p131 = por %p129, %p130
    %s133 = sadd.s32 %s132, 1
    %p136 = scmp.eq.s32.totalorder %s16, 1
    %p137 = scmp.ne.s32.totalorder %s132, %s134
    %p138 = scmp.eq.s32.totalorder %s16, 0
    %p139 = por %p137, %p138
    %p140 = scmp.ne.s32.totalorder %s132, %s134
    %p141 = scmp.eq.s32.totalorder %s21, 1
    %p142 = por %p140, %p141
    %p143 = scmp.ne.s32.totalorder %s134, %s135
    %p144 = scmp.eq.s32.totalorder %s21, 0
    %p145 = por %p143, %p144
    %p146 = scmp.ne.s32.totalorder %s134, %s135
    %p147 = scmp.eq.s32.totalorder %s22, 1
    %p148 = por %p146, %p147
    %p150 = scmp.ne.s32.totalorder %s135, %s149
    %p151 = scmp.eq.s32.totalorder %s22, 0
    %p152 = por %p150, %p151
    %s154 = sadd.s32 %s153, 1
    %p157 = scmp.eq.s32.totalorder %s16, 1
    %p158 = scmp.ne.s32.totalorder %s153, %s155
    %p159 = scmp.eq.s32.totalorder %s16, 0
    %p160 = por %p158, %p159
    %p161 = scmp.ne.s32.totalorder %s153, %s155
    %p162 = scmp.eq.s32.totalorder %s21, 1
    %p163 = por %p161, %p162
    %p164 = scmp.ne.s32.totalorder %s155, %s156
    %p165 = scmp.eq.s32.totalorder %s21, 0
    %p166 = por %p164, %p165
    %p167 = scmp.ne.s32.totalorder %s155, %s156
    %p168 = scmp.eq.s32.totalorder %s22, 1
    %p169 = por %p167, %p168
    %p171 = scmp.ne.s32.totalorder %s156, %s170
    %p172 = scmp.eq.s32.totalorder %s22, 0
    %p173 = por %p171, %p172
    %s175 = sadd.s32 %s174, 1
    %p178 = scmp.eq.s32.totalorder %s16, 1
    %p179 = scmp.ne.s32.totalorder %s174, %s176
    %p180 = scmp.eq.s32.totalorder %s16, 0
    %p181 = por %p179, %p180
    %p182 = scmp.ne.s32.totalorder %s174, %s176
    %p183 = scmp.eq.s32.totalorder %s21, 1
    %p184 = por %p182, %p183
    %p185 = scmp.ne.s32.totalorder %s176, %s177
    %p186 = scmp.eq.s32.totalorder %s21, 0
    %p187 = por %p185, %p186
    %p188 = scmp.ne.s32.totalorder %s176, %s177
    %p189 = scmp.eq.s32.totalorder %s22, 1
    %p190 = por %p188, %p189
    %p192 = scmp.ne.s32.totalorder %s177, %s191
    %p193 = scmp.eq.s32.totalorder %s22, 0
    %p194 = por %p192, %p193
    %s196 = sadd.s32 %s195, 1
    %p199 = scmp.eq.s32.totalorder %s16, 1
    %p200 = scmp.ne.s32.totalorder %s195, %s197
    %p201 = scmp.eq.s32.totalorder %s16, 0
    %p202 = por %p200, %p201
    %p203 = scmp.ne.s32.totalorder %s195, %s197
    %p204 = scmp.eq.s32.totalorder %s21, 1
    %p205 = por %p203, %p204
    %p206 = scmp.ne.s32.totalorder %s197, %s198
    %p207 = scmp.eq.s32.totalorder %s21, 0
    %p208 = por %p206, %p207
    %p209 = scmp.ne.s32.totalorder %s197, %s198
    %p210 = scmp.eq.s32.totalorder %s22, 1
    %p211 = por %p209, %p210
    %p213 = scmp.ne.s32.totalorder %s198, %s212
    %p214 = scmp.eq.s32.totalorder %s22, 0
    %p215 = por %p213, %p214
    %s216 = ssub.s32 %s23, %s35
    %s217 = ssub.s32 %s24, %s31
    %s218 = sor.u32 %s216, %s217
    %p219 = scmp.eq.s32.totalorder %s218, 0
    %s221 = sadd.s32 %s220, 1
    %s222 = scalar_select %p219, %s220, %s221
    %p225 = pneg %p219
    %p226 = scmp.eq.s32.totalorder %s16, 1
    %p227 = por %p225, %p226
    %p228 = scmp.ne.s32.totalorder %s220, %s223
    %p229 = scmp.eq.s32.totalorder %s16, 0
    %p230 = por %p228, %p229
    %p231 = scmp.ne.s32.totalorder %s220, %s223
    %p232 = scmp.eq.s32.totalorder %s21, 1
    %p233 = por %p231, %p232
    %p234 = scmp.ne.s32.totalorder %s223, %s224
    %p235 = scmp.eq.s32.totalorder %s21, 0
    %p236 = por %p234, %p235
    %p237 = scmp.ne.s32.totalorder %s223, %s224
    %p238 = scmp.eq.s32.totalorder %s22, 1
    %p239 = por %p237, %p238
    %p241 = scmp.ne.s32.totalorder %s224, %s240
    %p242 = scmp.eq.s32.totalorder %s22, 0
    %p243 = por %p241, %p242
    %s244 = ssub.s32 %s24, %s31
    %p245 = scmp.eq.s32.totalorder %s244, 0
    %s247 = sadd.s32 %s246, 1
    %s248 = scalar_select %p245, %s246, %s247
    %p251 = pneg %p245
    %p252 = scmp.eq.s32.totalorder %s16, 1
    %p253 = por %p251, %p252
    %p254 = scmp.ne.s32.totalorder %s246, %s249
    %p255 = scmp.eq.s32.totalorder %s16, 0
    %p256 = por %p254, %p255
    %p257 = scmp.ne.s32.totalorder %s246, %s249
    %p258 = scmp.eq.s32.totalorder %s21, 1
    %p259 = por %p257, %p258
    %p260 = scmp.ne.s32.totalorder %s249, %s250
    %p261 = scmp.eq.s32.totalorder %s21, 0
    %p262 = por %p260, %p261
    %p263 = scmp.ne.s32.totalorder %s249, %s250
    %p264 = scmp.eq.s32.totalorder %s22, 1
    %p265 = por %p263, %p264
    %p267 = scmp.ne.s32.totalorder %s250, %s266
    %p268 = scmp.eq.s32.totalorder %s22, 0
    %p269 = por %p267, %p268
    %p270 = scmp.le.s32.totalorder 1, %s16
    %p271 = scmp.lt.s32.totalorder %s16, 3
    %p272 = pnand %p270, %p271
    %p273 = pneg %p272
    // Predicated region
    $region9: #{decoder_forward.7} parent=5 // pred_check
      _
    $region10: #{decoder_forward.7} parent=5 // pred_check_branch
      %275 = sbr.rel (%p272) target = $region12
    $region11: #{decoder_forward.7} parent=5 // pred_region
      %s276 = ssub.s32 %s16, 1
      // Predicated region
      $region13: #{decoder_forward.7} parent=11 // pred_check
        %p277 = pneg %p103
      $region14: #{decoder_forward.7} parent=11 // pred_check_branch
        %279 = sbr.rel (%p277) target = $region16
      $region15: #{decoder_forward.7} parent=11 // pred_region
        _
      $region16: #{decoder_forward.7} parent=11 // pred_fallthru
        _
      // Predicated region
      $region17: #{decoder_forward.7} parent=11 // pred_check
        %p280 = pneg %p124
      $region18: #{decoder_forward.7} parent=11 // pred_check_branch
        %282 = sbr.rel (%p280) target = $region20
      $region19: #{decoder_forward.7} parent=11 // pred_region
        _
      $region20: #{decoder_forward.7} parent=11 // pred_fallthru
        _
      // Predicated region
      $region21: #{decoder_forward.7} parent=11 // pred_check
        %p283 = pneg %p145
      $region22: #{decoder_forward.7} parent=11 // pred_check_branch
        %285 = sbr.rel (%p283) target = $region24
      $region23: #{decoder_forward.7} parent=11 // pred_region
        _
      $region24: #{decoder_forward.7} parent=11 // pred_fallthru
        _
      // Predicated region
      $region25: #{decoder_forward.7} parent=11 // pred_check
        %p286 = pneg %p166
      $region26: #{decoder_forward.7} parent=11 // pred_check_branch
        %288 = sbr.rel (%p286) target = $region28
      $region27: #{decoder_forward.7} parent=11 // pred_region
        _
      $region28: #{decoder_forward.7} parent=11 // pred_fallthru
        _
      // Predicated region
      $region29: #{decoder_forward.7} parent=11 // pred_check
        %p289 = pneg %p187
      $region30: #{decoder_forward.7} parent=11 // pred_check_branch
        %291 = sbr.rel (%p289) target = $region32
      $region31: #{decoder_forward.7} parent=11 // pred_region
        _
      $region32: #{decoder_forward.7} parent=11 // pred_fallthru
        _
      // Predicated region
      $region33: #{decoder_forward.7} parent=11 // pred_check
        %p292 = pneg %p208
      $region34: #{decoder_forward.7} parent=11 // pred_check_branch
        %294 = sbr.rel (%p292) target = $region36
      $region35: #{decoder_forward.7} parent=11 // pred_region
        _
      $region36: #{decoder_forward.7} parent=11 // pred_fallthru
        _
    $region12: #{decoder_forward.7} parent=5 // pred_fallthru
      _
    %p295 = scmp.lt.s32.totalorder %s16, 2
    // Predicated region
    $region37: #{decoder_forward.7} parent=5 // pred_check
      %p296 = pneg %p295
    $region38: #{decoder_forward.7} parent=5 // pred_check_branch
      %298 = sbr.rel (%p296) target = $region40
    $region39: #{decoder_forward.7} parent=5 // pred_region
      // Predicated region
      $region41: #{decoder_forward.7} parent=39 // pred_check
        %p299 = pneg %p48
      $region42: #{decoder_forward.7} parent=39 // pred_check_branch
        %301 = sbr.rel (%p299) target = $region44
      $region43: #{decoder_forward.7} parent=39 // pred_region
        %p302 = scmp.lt.s32.totalorder %s23, 1
        %s303 = scalar_select %p302, %s23, 1
        %s304 = smul.addr %s303, 8
        %s305 = scalar_lea.vmem %s0, %s304
      $region44: #{decoder_forward.7} parent=39 // pred_fallthru
        _
      // Predicated region
      $region45: #{decoder_forward.7} parent=39 // pred_check
        %p306 = pneg %p76
      $region46: #{decoder_forward.7} parent=39 // pred_check_branch
        %308 = sbr.rel (%p306) target = $region48
      $region47: #{decoder_forward.7} parent=39 // pred_region
        %p309 = scmp.lt.s32.totalorder %s23, 1
        %s310 = scalar_select %p309, %s23, 1
        %p311 = scmp.lt.s32.totalorder %s24, 0
        %s312 = scalar_select %p311, %s24, 0
        %s313 = sadd.s32 %s312, %s310
        %s314 = smul.addr %s313, 4
        %s315 = scalar_lea.vmem %s1, %s314
      $region48: #{decoder_forward.7} parent=39 // pred_fallthru
        _
    $region40: #{decoder_forward.7} parent=5 // pred_fallthru
      _
    %p316 = scmp.le.s32.totalorder 1, %s16
    %p317 = scmp.lt.s32.totalorder %s16, 3
    %p318 = pnand %p316, %p317
    %p319 = pneg %p318
    // Predicated region
    $region49: #{decoder_forward.7} parent=5 // pred_check
      _
    $region50: #{decoder_forward.7} parent=5 // pred_check_branch
      %321 = sbr.rel (%p318) target = $region52
    $region51: #{decoder_forward.7} parent=5 // pred_region
      %s322 = ssub.s32 %s16, 1
      %p323 = scmp.lt.s32.totalorder %s25, 1
      %s324 = scalar_select %p323, %s25, 1
      %s325 = smul.addr %s324, 8
      %s326 = scalar_lea.vmem %s0, %s325
      %p327 = pneg %p54
      %p328 = pneg %p51
      %p329 = scmp.lt.s32.totalorder %s25, 1
      %s330 = scalar_select %p329, %s25, 1
      %p331 = scmp.lt.s32.totalorder %s26, 0
      %s332 = scalar_select %p331, %s26, 0
      %s333 = sadd.s32 %s332, %s330
      %s334 = smul.addr %s333, 4
      %s335 = scalar_lea.vmem %s1, %s334
      %p336 = pneg %p82
      %p337 = pneg %p79
      %p338 = pneg %p103
      %p339 = pneg %p100
      %p340 = pneg %p124
      %p341 = pneg %p121
      %p342 = pneg %p145
      %p343 = pneg %p142
      %p344 = pneg %p166
      %p345 = pneg %p163
      %p346 = pneg %p187
      %p347 = pneg %p184
      %p348 = pneg %p208
      %p349 = pneg %p205
      %p350 = pneg %p236
      %p351 = pneg %p233
      %p352 = scmp.lt.s32.totalorder %s25, 1
      %s353 = scalar_select %p352, %s25, 1
      %p354 = scmp.lt.s32.totalorder %s26, 0
      %s355 = scalar_select %p354, %s26, 0
      %s356 = sadd.s32 %s355, %s353
      %s357 = smul.addr %s356, 8
      %s358 = scalar_lea.vmem %s8, %s357
      %p359 = pneg %p262
      %p360 = pneg %p259
      %p361 = scmp.lt.s32.totalorder %s26, 0
      %s362 = scalar_select %p361, %s26, 0
      %s363 = smul.addr %s362, 8
      %s364 = scalar_lea.vmem %s9, %s363
      %p365 = scmp.lt.s32.totalorder %s25, 1
      %s366 = scalar_select %p365, %s25, 1
      %s367 = smul.addr %s366, 8
      %s368 = scalar_lea.vmem %s0, %s367
      %p369 = scmp.lt.s32.totalorder %s25, 1
      %s370 = scalar_select %p369, %s25, 1
      %p371 = scmp.lt.s32.totalorder %s26, 0
      %s372 = scalar_select %p371, %s26, 0
      %s373 = sadd.s32 %s372, %s370
      %s374 = smul.addr %s373, 4
      %s375 = scalar_lea.vmem %s1, %s374
      %p376 = scmp.lt.s32.totalorder %s25, 1
      %s377 = scalar_select %p376, %s25, 1
      %p378 = scmp.lt.s32.totalorder %s26, 0
      %s379 = scalar_select %p378, %s26, 0
      %s380 = sadd.s32 %s379, %s377
      %s381 = smul.addr %s380, 8
      %s382 = scalar_lea.vmem %s8, %s381
      %p383 = scmp.lt.s32.totalorder %s26, 0
      %s384 = scalar_select %p383, %s26, 0
      %s385 = smul.addr %s384, 8
      %s386 = scalar_lea.vmem %s9, %s385
      %s388 = smul.u32 %s26, 8
      %p389 = scmp.eq.s32.totalorder %s26, 0
      // Predicated region
      $region53: #{decoder_forward.7} parent=51 // pred_check
        %p390 = pneg %p389
      $region54: #{decoder_forward.7} parent=51 // pred_check_branch
        %392 = sbr.rel (%p390) target = $region56
      $region55: #{decoder_forward.7} parent=51 // pred_region
        %v393 = vld [vmem:[%s368] sm:$0xff]
        %v394 = vpack.c.bf16 %v393, %v393
        %v395 = vld [vmem:[%s2] sm:$0xf]
        %v396 = vld [vmem:[%s2 + $0x4] sm:$0xf]
        %v397 = vld [vmem:[%s2 + $0x8] sm:$0xf]
        %v398 = vld [vmem:[%s2 + $0xc] sm:$0xf]
        %v399 = vld [vmem:[%s3] sm:$0x1]
        %v401 = vlaneseq
        %v402 = vshrl.u32 %v401, 7
        %v403 = vsub.s32 0, %v402
        %v404 = vrot.slane %v399, %v403
        %v410 = vunpack.c.l.b16 %v395
        %v411 = vunpack.c.l.b16 %v396
        %v412 = vunpack.c.l.b16 %v397
        %v413 = vunpack.c.l.b16 %v398
        %v414 = vpack.c.b16 %v411, %v410
        %v415 = vpack.c.b16 %v413, %v412
        %vm418 = vcmask 261120
        %v420 = vsel %vm418, %v394, 0
        %422 = vmatprep.subr.bf16.mxu0 0
        %423 = vmatpush1.bf16.msra.mxu0 %v414
        %424 = vmatprep.subr.bf16.mxu0 0
        %425 = vmatpush1.bf16.msra.mxu0 %v415
        %426 = vmatprep.subr.bf16.mxu0 0
        %427 = vmatpush1.bf16.msra.mxu0 0
        %428 = vmatprep.subr.bf16.mxu0 0
        %429 = vmatpush1.bf16.msra.mxu0 0
        %430 = vmatprep.subr.bf16.mxu0 0
        %431 = vmatpush1.bf16.msra.mxu0 0
        %432 = vmatprep.subr.bf16.mxu0 0
        %433 = vmatpush1.bf16.msra.mxu0 0
        %434 = vmatprep.subr.bf16.mxu0 0
        %435 = vmatpush1.bf16.msra.mxu0 0
        %436 = vmatprep.subr.bf16.mxu0 0
        %437 = vmatpush1.bf16.msra.mxu0 0
        %438 = vmatprep.subr.bf16.mxu0 0
        %439 = vmatpush1.bf16.msra.mxu0 0
        %440 = vmatprep.subr.bf16.mxu0 0
        %441 = vmatpush1.bf16.msra.mxu0 0
        %442 = vmatprep.subr.bf16.mxu0 0
        %443 = vmatpush1.bf16.msra.mxu0 0
        %444 = vmatprep.subr.bf16.mxu0 0
        %445 = vmatpush1.bf16.msra.mxu0 0
        %446 = vmatprep.subr.bf16.mxu0 0
        %447 = vmatpush1.bf16.msra.mxu0 0
        %448 = vmatprep.subr.bf16.mxu0 0
        %449 = vmatpush1.bf16.msra.mxu0 0
        %450 = vmatprep.subr.bf16.mxu0 0
        %451 = vmatpush1.bf16.msra.mxu0 0
        %452 = vmatprep.subr.bf16.mxu0 0
        %453 = vmatpush1.bf16.msra.mxu0 0
        %454 = vmatprep.mubr.bf16.mxu0 0
        %455 = vmatmul.mubr.bf16.gmra.mrb[0].mxu0 %v420
        %v456 = vpop.f32.mrb[0].mxu0
        %v457 = vadd.f32 %v404, %v456
        %v458 = vpop.f32.mrb[0].mxu0
        %v459 = vpop.f32.mrb[0].mxu0
        %v460 = vpop.f32.mrb[0].mxu0
        %461 = vdwg.mxu0
        %v462 = vpack.c.bf16 %v457, %v457
        %vm463 = vcmask 781312
        %464 = vst.msk [vmem:[#allocation2] sm:$0xf] %vm463, %v462
      $region56: #{decoder_forward.7} parent=51 // pred_fallthru
        _
      %s465 = scalar_lea.vmem %s368, %s388
      %v466 = vld [vmem:[%s465] sm:$0xff]
      %v467 = vld [vmem:[%s375] sm:$0xf]
      %v468 = vunpack.c.l.bf16 %v467
      %s469 = sshra.s32 %s388, 3
      %s470 = sand.u32 %s388, 7
      %s471 = smul.addr %s469, 4
      %s472 = scalar_lea.vmem [#allocation2], %s471
      %v473 = vld [vmem:[%s472] sm:$0xf]
      %v474 = vld [vmem:[#allocation2] sm:$0xf]
      %v476 = vunpack.c.l.b16 %v474
      %v477 = vpack.c.b16 %v476, %v476
      %478 = vrot.lane.b32.xlu0 %v477, 96
      %v479 = vpop.permute.xlu0 %478
      %vm480 = vcmask 64512
      %v482 = vsel %vm480, %v473, 0
      %v485 = vsel %vm480, %v479, 0
      %487 = vmatprep.subr.bf16.mxu0 0
      %488 = vmatpush1.bf16.xpose.msra.mxu0 %v485
      %489 = vmatprep.subr.bf16.mxu0 0
      %490 = vmatpush1.bf16.xpose.msra.mxu0 0
      %491 = vmatprep.subr.bf16.mxu0 0
      %492 = vmatpush1.bf16.xpose.msra.mxu0 0
      %493 = vmatprep.subr.bf16.mxu0 0
      %494 = vmatpush1.bf16.xpose.msra.mxu0 0
      %495 = vmatprep.subr.bf16.mxu0 0
      %496 = vmatpush1.bf16.xpose.msra.mxu0 0
      %497 = vmatprep.subr.bf16.mxu0 0
      %498 = vmatpush1.bf16.xpose.msra.mxu0 0
      %499 = vmatprep.subr.bf16.mxu0 0
      %500 = vmatpush1.bf16.xpose.msra.mxu0 0
      %501 = vmatprep.subr.bf16.mxu0 0
      %502 = vmatpush1.bf16.xpose.msra.mxu0 0
      %503 = vmatprep.subr.bf16.mxu0 0
      %504 = vmatpush1.bf16.xpose.msra.mxu0 0
      %505 = vmatprep.subr.bf16.mxu0 0
      %506 = vmatpush1.bf16.xpose.msra.mxu0 0
      %507 = vmatprep.subr.bf16.mxu0 0
      %508 = vmatpush1.bf16.xpose.msra.mxu0 0
      %509 = vmatprep.subr.bf16.mxu0 0
      %510 = vmatpush1.bf16.xpose.msra.mxu0 0
      %511 = vmatprep.subr.bf16.mxu0 0
      %512 = vmatpush1.bf16.xpose.msra.mxu0 0
      %513 = vmatprep.subr.bf16.mxu0 0
      %514 = vmatpush1.bf16.xpose.msra.mxu0 0
      %515 = vmatprep.subr.bf16.mxu0 0
      %516 = vmatpush1.bf16.xpose.msra.mxu0 0
      %517 = vmatprep.subr.bf16.mxu0 0
      %518 = vmatpush1.bf16.xpose.msra.mxu0 0
      %519 = vmatprep.mubr.bf16.mxu0 0
      %520 = vmatmul.mubr.bf16.gmra.mrb[0].mxu0 %v482
      %v521 = vpop.f32.mrb[0].mxu0
      %v522 = vadd.f32 %v468, %v521
      %v523 = vpop.f32.mrb[0].mxu0
      %v524 = vpop.f32.mrb[0].mxu0
      %v525 = vpop.f32.mrb[0].mxu0
      %526 = vdwg.mxu0
      %v527 = vsel %vm480, %v522, -inf
      %528 = vmax.xlane.f32.xlu0 %v527
      %v529 = vpop.xlane.xlu0 %528
      %v530 = vsub.f32 %v522, %v529
      %v531 = vmul.f32 %v530, 1.442695
      %v532 = vpow.pop %v531
      %v533 = vsel %vm480, %v532, 0.0
      %534 = vadd.xlane.f32.xlu0 %v533
      %v535 = vpop.xlane.xlu0 %534
      %v536 = vrcp.pop %v535
      %v537 = vmul.f32 %v532, %v536
      %p538 = scmp.eq.s32.totalorder %s25, 0
      // Predicated region
      $region57: #{decoder_forward.7} parent=51 // pred_check
        %p539 = pneg %p538
      $region58: #{decoder_forward.7} parent=51 // pred_check_branch
        %541 = sbr.rel (%p539) target = $region60
      $region59: #{decoder_forward.7} parent=51 // pred_region
        %542 = vst.msk [vmem:[%s386] sm:$0xff] %vm480, %v537
      $region60: #{decoder_forward.7} parent=51 // pred_fallthru
        _
      %v543 = vpack.c.bf16 %v537, %v537
      %544 = vrot.lane.b32.xlu0 %v477, 64
      %v545 = vpop.permute.xlu0 %544
      %v547 = vsel %vm480, %v543, 0
      %vm549 = vcmask 1043456
      %v551 = vsel %vm549, %v545, 0
      %553 = vmatprep.subr.bf16.mxu0 0
      %554 = vmatpush1.bf16.msra.mxu0 %v551
      %555 = vmatprep.subr.bf16.mxu0 0
      %556 = vmatpush1.bf16.msra.mxu0 0
      %557 = vmatprep.subr.bf16.mxu0 0
      %558 = vmatpush1.bf16.msra.mxu0 0
      %559 = vmatprep.subr.bf16.mxu0 0
      %560 = vmatpush1.bf16.msra.mxu0 0
      %561 = vmatprep.subr.bf16.mxu0 0
      %562 = vmatpush1.bf16.msra.mxu0 0
      %563 = vmatprep.subr.bf16.mxu0 0
      %564 = vmatpush1.bf16.msra.mxu0 0
      %565 = vmatprep.subr.bf16.mxu0 0
      %566 = vmatpush1.bf16.msra.mxu0 0
      %567 = vmatprep.subr.bf16.mxu0 0
      %568 = vmatpush1.bf16.msra.mxu0 0
      %569 = vmatprep.subr.bf16.mxu0 0
      %570 = vmatpush1.bf16.msra.mxu0 0
      %571 = vmatprep.subr.bf16.mxu0 0
      %572 = vmatpush1.bf16.msra.mxu0 0
      %573 = vmatprep.subr.bf16.mxu0 0
      %574 = vmatpush1.bf16.msra.mxu0 0
      %575 = vmatprep.subr.bf16.mxu0 0
      %576 = vmatpush1.bf16.msra.mxu0 0
      %577 = vmatprep.subr.bf16.mxu0 0
      %578 = vmatpush1.bf16.msra.mxu0 0
      %579 = vmatprep.subr.bf16.mxu0 0
      %580 = vmatpush1.bf16.msra.mxu0 0
      %581 = vmatprep.subr.bf16.mxu0 0
      %582 = vmatpush1.bf16.msra.mxu0 0
      %583 = vmatprep.subr.bf16.mxu0 0
      %584 = vmatpush1.bf16.msra.mxu0 0
      %585 = vmatprep.mubr.bf16.mxu0 0
      %586 = vmatmul.mubr.bf16.gmra.mrb[0].mxu0 %v547
      %v587 = vpop.f32.mrb[0].mxu0
      %v588 = vadd.f32 0.0, %v587
      %v589 = vpop.f32.mrb[0].mxu0
      %v590 = vpop.f32.mrb[0].mxu0
      %v591 = vpop.f32.mrb[0].mxu0
      %592 = vdwg.mxu0
      %v593 = vpack.c.bf16 %v588, %v588
      %vm594 = vcmask 60416
      %595 = vst.msk [vmem:[#allocation3] sm:$0xf] %vm594, %v593
      %v596 = vld [vmem:[%s472] sm:$0xf]
      %v597 = vld [vmem:[#allocation2] sm:$0xf]
      %v599 = vunpack.c.l.b16 %v596
      %v600 = vpack.c.b16 %v599, %v599
      %601 = vrot.lane.b32.xlu0 %v600, 120
      %v602 = vpop.permute.xlu0 %601
      %v604 = vunpack.c.l.b16 %v597
      %v605 = vpack.c.b16 %v604, %v604
      %606 = vrot.lane.b32.xlu0 %v605, 88
      %v607 = vpop.permute.xlu0 %606
      %v609 = vsel %vm480, %v602, 0
      %v612 = vsel %vm480, %v607, 0
      %614 = vmatprep.subr.bf16.mxu0 0
      %615 = vmatpush1.bf16.xpose.msra.mxu0 %v612
      %616 = vmatprep.subr.bf16.mxu0 0
      %617 = vmatpush1.bf16.xpose.msra.mxu0 0
      %618 = vmatprep.subr.bf16.mxu0 0
      %619 = vmatpush1.bf16.xpose.msra.mxu0 0
      %620 = vmatprep.subr.bf16.mxu0 0
      %621 = vmatpush1.bf16.xpose.msra.mxu0 0
      %622 = vmatprep.subr.bf16.mxu0 0
      %623 = vmatpush1.bf16.xpose.msra.mxu0 0
      %624 = vmatprep.subr.bf16.mxu0 0
      %625 = vmatpush1.bf16.xpose.msra.mxu0 0
      %626 = vmatprep.subr.bf16.mxu0 0
      %627 = vmatpush1.bf16.xpose.msra.mxu0 0
      %628 = vmatprep.subr.bf16.mxu0 0
      %629 = vmatpush1.bf16.xpose.msra.mxu0 0
      %630 = vmatprep.subr.bf16.mxu0 0
      %631 = vmatpush1.bf16.xpose.msra.mxu0 0
      %632 = vmatprep.subr.bf16.mxu0 0
      %633 = vmatpush1.bf16.xpose.msra.mxu0 0
      %634 = vmatprep.subr.bf16.mxu0 0
      %635 = vmatpush1.bf16.xpose.msra.mxu0 0
      %636 = vmatprep.subr.bf16.mxu0 0
      %637 = vmatpush1.bf16.xpose.msra.mxu0 0
      %638 = vmatprep.subr.bf16.mxu0 0
      %639 = vmatpush1.bf16.xpose.msra.mxu0 0
      %640 = vmatprep.subr.bf16.mxu0 0
      %641 = vmatpush1.bf16.xpose.msra.mxu0 0
      %642 = vmatprep.subr.bf16.mxu0 0
      %643 = vmatpush1.bf16.xpose.msra.mxu0 0
      %644 = vmatprep.subr.bf16.mxu0 0
      %645 = vmatpush1.bf16.xpose.msra.mxu0 0
      %646 = vmatprep.mubr.bf16.mxu0 0
      %647 = vmatmul.mubr.bf16.gmra.mrb[0].mxu0 %v609
      %v648 = vpop.f32.mrb[0].mxu0
      %v649 = vadd.f32 %v468, %v648
      %v650 = vpop.f32.mrb[0].mxu0
      %v651 = vpop.f32.mrb[0].mxu0
      %v652 = vpop.f32.mrb[0].mxu0
      %653 = vdwg.mxu0
      %v654 = vsel %vm480, %v649, -inf
      %655 = vmax.xlane.f32.xlu0 %v654
      %v656 = vpop.xlane.xlu0 %655
      %v657 = vsub.f32 %v649, %v656
      %v658 = vmul.f32 %v657, 1.442695
      %v659 = vpow.pop %v658
      %v660 = vsel %vm480, %v659, 0.0
      %661 = vadd.xlane.f32.xlu0 %v660
      %v662 = vpop.xlane.xlu0 %661
      %v663 = vrcp.pop %v662
      %v664 = vmul.f32 %v659, %v663
      // Predicated region
      $region61: #{decoder_forward.7} parent=51 // pred_check
        %p665 = pneg %p538
      $region62: #{decoder_forward.7} parent=51 // pred_check_branch
        %667 = sbr.rel (%p665) target = $region64
      $region63: #{decoder_forward.7} parent=51 // pred_region
        %s668 = scalar_lea.vmem %s386, 8
        %669 = vst.msk [vmem:[%s668] sm:$0xff] %vm480, %v664
      $region64: #{decoder_forward.7} parent=51 // pred_fallthru
        _
      %v670 = vpack.c.bf16 %v664, %v664
      %671 = vrot.lane.b32.xlu0 %v605, 56
      %v672 = vpop.permute.xlu0 %671
      %v674 = vsel %vm480, %v670, 0
      %v677 = vsel %vm549, %v672, 0
      %679 = vmatprep.subr.bf16.mxu0 0
      %680 = vmatpush1.bf16.msra.mxu0 %v677
      %681 = vmatprep.subr.bf16.mxu0 0
      %682 = vmatpush1.bf16.msra.mxu0 0
      %683 = vmatprep.subr.bf16.mxu0 0
      %684 = vmatpush1.bf16.msra.mxu0 0
      %685 = vmatprep.subr.bf16.mxu0 0
      %686 = vmatpush1.bf16.msra.mxu0 0
      %687 = vmatprep.subr.bf16.mxu0 0
      %688 = vmatpush1.bf16.msra.mxu0 0
      %689 = vmatprep.subr.bf16.mxu0 0
      %690 = vmatpush1.bf16.msra.mxu0 0
      %691 = vmatprep.subr.bf16.mxu0 0
      %692 = vmatpush1.bf16.msra.mxu0 0
      %693 = vmatprep.subr.bf16.mxu0 0
      %694 = vmatpush1.bf16.msra.mxu0 0
      %695 = vmatprep.subr.bf16.mxu0 0
      %696 = vmatpush1.bf16.msra.mxu0 0
      %697 = vmatprep.subr.bf16.mxu0 0
      %698 = vmatpush1.bf16.msra.mxu0 0
      %699 = vmatprep.subr.bf16.mxu0 0
      %700 = vmatpush1.bf16.msra.mxu0 0
      %701 = vmatprep.subr.bf16.mxu0 0
      %702 = vmatpush1.bf16.msra.mxu0 0
      %703 = vmatprep.subr.bf16.mxu0 0
      %704 = vmatpush1.bf16.msra.mxu0 0
      %705 = vmatprep.subr.bf16.mxu0 0
      %706 = vmatpush1.bf16.msra.mxu0 0
      %707 = vmatprep.subr.bf16.mxu0 0
      %708 = vmatpush1.bf16.msra.mxu0 0
      %709 = vmatprep.subr.bf16.mxu0 0
      %710 = vmatpush1.bf16.msra.mxu0 0
      %711 = vmatprep.mubr.bf16.mxu0 0
      %712 = vmatmul.mubr.bf16.gmra.mrb[0].mxu0 %v674
      %v713 = vpop.f32.mrb[0].mxu0
      %v714 = vadd.f32 0.0, %v713
      %v715 = vpop.f32.mrb[0].mxu0
      %v716 = vpop.f32.mrb[0].mxu0
      %v717 = vpop.f32.mrb[0].mxu0
      %718 = vdwg.mxu0
      %v719 = vpack.c.bf16 %v714, %v714
      %v721 = vunpack.c.l.b16 %v719
      %v722 = vpack.c.b16 %v721, %v721
      %723 = vrot.lane.b32.xlu0 %v722, 8
      %v724 = vpop.permute.xlu0 %723
      %vm726 = vcmask 126016
      %727 = vst.msk [vmem:[#allocation3] sm:$0xf] %vm726, %v724
      %v728 = vld [vmem:[%s472] sm:$0xf]
      %v729 = vld [vmem:[#allocation2] sm:$0xf]
      %v731 = vunpack.c.l.b16 %v728
      %v732 = vpack.c.b16 %v731, %v731
      %733 = vrot.lane.b32.xlu0 %v732, 112
      %v734 = vpop.permute.xlu0 %733
      %v736 = vunpack.c.l.b16 %v729
      %v737 = vpack.c.b16 %v736, %v736
      %738 = vrot.lane.b32.xlu0 %v737, 80
      %v739 = vpop.permute.xlu0 %738
      %v741 = vsel %vm480, %v734, 0
      %v744 = vsel %vm480, %v739, 0
      %746 = vmatprep.subr.bf16.mxu0 0
      %747 = vmatpush1.bf16.xpose.msra.mxu0 %v744
      %748 = vmatprep.subr.bf16.mxu0 0
      %749 = vmatpush1.bf16.xpose.msra.mxu0 0
      %750 = vmatprep.subr.bf16.mxu0 0
      %751 = vmatpush1.bf16.xpose.msra.mxu0 0
      %752 = vmatprep.subr.bf16.mxu0 0
      %753 = vmatpush1.bf16.xpose.msra.mxu0 0
      %754 = vmatprep.subr.bf16.mxu0 0
      %755 = vmatpush1.bf16.xpose.msra.mxu0 0
      %756 = vmatprep.subr.bf16.mxu0 0
      %757 = vmatpush1.bf16.xpose.msra.mxu0 0
      %758 = vmatprep.subr.bf16.mxu0 0
      %759 = vmatpush1.bf16.xpose.msra.mxu0 0
      %760 = vmatprep.subr.bf16.mxu0 0
      %761 = vmatpush1.bf16.xpose.msra.mxu0 0
      %762 = vmatprep.subr.bf16.mxu0 0
      %763 = vmatpush1.bf16.xpose.msra.mxu0 0
      %764 = vmatprep.subr.bf16.mxu0 0
      %765 = vmatpush1.bf16.xpose.msra.mxu0 0
      %766 = vmatprep.subr.bf16.mxu0 0
      %767 = vmatpush1.bf16.xpose.msra.mxu0 0
      %768 = vmatprep.subr.bf16.mxu0 0
      %769 = vmatpush1.bf16.xpose.msra.mxu0 0
      %770 = vmatprep.subr.bf16.mxu0 0
      %771 = vmatpush1.bf16.xpose.msra.mxu0 0
      %772 = vmatprep.subr.bf16.mxu0 0
      %773 = vmatpush1.bf16.xpose.msra.mxu0 0
      %774 = vmatprep.subr.bf16.mxu0 0
      %775 = vmatpush1.bf16.xpose.msra.mxu0 0
      %776 = vmatprep.subr.bf16.mxu0 0
      %777 = vmatpush1.bf16.xpose.msra.mxu0 0
      %778 = vmatprep.mubr.bf16.mxu0 0
      %779 = vmatmul.mubr.bf16.gmra.mrb[0].mxu0 %v741
      %v780 = vpop.f32.mrb[0].mxu0
      %v781 = vadd.f32 %v468, %v780
      %v782 = vpop.f32.mrb[0].mxu0
      %v783 = vpop.f32.mrb[0].mxu0
      %v784 = vpop.f32.mrb[0].mxu0
      %785 = vdwg.mxu0
      %v786 = vsel %vm480, %v781, -inf
      %787 = vmax.xlane.f32.xlu0 %v786
      %v788 = vpop.xlane.xlu0 %787
      %v789 = vsub.f32 %v781, %v788
      %v790 = vmul.f32 %v789, 1.442695
      %v791 = vpow.pop %v790
      %v792 = vsel %vm480, %v791, 0.0
      %793 = vadd.xlane.f32.xlu0 %v792
      %v794 = vpop.xlane.xlu0 %793
      %v795 = vrcp.pop %v794
      %v796 = vmul.f32 %v791, %v795
      // Predicated region
      $region65: #{decoder_forward.7} parent=51 // pred_check
        %p797 = pneg %p538
      $region66: #{decoder_forward.7} parent=51 // pred_check_branch
        %799 = sbr.rel (%p797) target = $region68
      $region67: #{decoder_forward.7} parent=51 // pred_region
        %s800 = scalar_lea.vmem %s386, 16
        %801 = vst.msk [vmem:[%s800] sm:$0xff] %vm480, %v796
      $region68: #{decoder_forward.7} parent=51 // pred_fallthru
        _
      %v802 = vpack.c.bf16 %v796, %v796
      %803 = vrot.lane.b32.xlu0 %v737, 48
      %v804 = vpop.permute.xlu0 %803
      %v806 = vsel %vm480, %v802, 0
      %v809 = vsel %vm549, %v804, 0
      %811 = vmatprep.subr.bf16.mxu0 0
      %812 = vmatpush1.bf16.msra.mxu0 %v809
      %813 = vmatprep.subr.bf16.mxu0 0
      %814 = vmatpush1.bf16.msra.mxu0 0
      %815 = vmatprep.subr.bf16.mxu0 0
      %816 = vmatpush1.bf16.msra.mxu0 0
      %817 = vmatprep.subr.bf16.mxu0 0
      %818 = vmatpush1.bf16.msra.mxu0 0
      %819 = vmatprep.subr.bf16.mxu0 0
      %820 = vmatpush1.bf16.msra.mxu0 0
      %821 = vmatprep.subr.bf16.mxu0 0
      %822 = vmatpush1.bf16.msra.mxu0 0
      %823 = vmatprep.subr.bf16.mxu0 0
      %824 = vmatpush1.bf16.msra.mxu0 0
      %825 = vmatprep.subr.bf16.mxu0 0
      %826 = vmatpush1.bf16.msra.mxu0 0
      %827 = vmatprep.subr.bf16.mxu0 0
      %828 = vmatpush1.bf16.msra.mxu0 0
      %829 = vmatprep.subr.bf16.mxu0 0
      %830 = vmatpush1.bf16.msra.mxu0 0
      %831 = vmatprep.subr.bf16.mxu0 0
      %832 = vmatpush1.bf16.msra.mxu0 0
      %833 = vmatprep.subr.bf16.mxu0 0
      %834 = vmatpush1.bf16.msra.mxu0 0
      %835 = vmatprep.subr.bf16.mxu0 0
      %836 = vmatpush1.bf16.msra.mxu0 0
      %837 = vmatprep.subr.bf16.mxu0 0
      %838 = vmatpush1.bf16.msra.mxu0 0
      %839 = vmatprep.subr.bf16.mxu0 0
      %840 = vmatpush1.bf16.msra.mxu0 0
      %841 = vmatprep.subr.bf16.mxu0 0
      %842 = vmatpush1.bf16.msra.mxu0 0
      %843 = vmatprep.mubr.bf16.mxu0 0
      %844 = vmatmul.mubr.bf16.gmra.mrb[0].mxu0 %v806
      %v845 = vpop.f32.mrb[0].mxu0
      %v846 = vadd.f32 0.0, %v845
      %v847 = vpop.f32.mrb[0].mxu0
      %v848 = vpop.f32.mrb[0].mxu0
      %v849 = vpop.f32.mrb[0].mxu0
      %850 = vdwg.mxu0
      %v851 = vpack.c.bf16 %v846, %v846
      %v853 = vunpack.c.l.b16 %v851
      %v854 = vpack.c.b16 %v853, %v853
      %855 = vrot.lane.b32.xlu0 %v854, 16
      %v856 = vpop.permute.xlu0 %855
      %vm858 = vcmask 191616
      %859 = vst.msk [vmem:[#allocation3] sm:$0xf] %vm858, %v856
      %v860 = vld [vmem:[%s472] sm:$0xf]
      %v861 = vld [vmem:[#allocation2] sm:$0xf]
      %v863 = vunpack.c.l.b16 %v860
      %v864 = vpack.c.b16 %v863, %v863
      %865 = vrot.lane.b32.xlu0 %v864, 104
      %v866 = vpop.permute.xlu0 %865
      %v868 = vunpack.c.l.b16 %v861
      %v869 = vpack.c.b16 %v868, %v868
      %870 = vrot.lane.b32.xlu0 %v869, 72
      %v871 = vpop.permute.xlu0 %870
      %v873 = vsel %vm480, %v866, 0
      %v876 = vsel %vm480, %v871, 0
      %878 = vmatprep.subr.bf16.mxu0 0
      %879 = vmatpush1.bf16.xpose.msra.mxu0 %v876
      %880 = vmatprep.subr.bf16.mxu0 0
      %881 = vmatpush1.bf16.xpose.msra.mxu0 0
      %882 = vmatprep.subr.bf16.mxu0 0
      %883 = vmatpush1.bf16.xpose.msra.mxu0 0
      %884 = vmatprep.subr.bf16.mxu0 0
      %885 = vmatpush1.bf16.xpose.msra.mxu0 0
      %886 = vmatprep.subr.bf16.mxu0 0
      %887 = vmatpush1.bf16.xpose.msra.mxu0 0
      %888 = vmatprep.subr.bf16.mxu0 0
      %889 = vmatpush1.bf16.xpose.msra.mxu0 0
      %890 = vmatprep.subr.bf16.mxu0 0
      %891 = vmatpush1.bf16.xpose.msra.mxu0 0
      %892 = vmatprep.subr.bf16.mxu0 0
      %893 = vmatpush1.bf16.xpose.msra.mxu0 0
      %894 = vmatprep.subr.bf16.mxu0 0
      %895 = vmatpush1.bf16.xpose.msra.mxu0 0
      %896 = vmatprep.subr.bf16.mxu0 0
      %897 = vmatpush1.bf16.xpose.msra.mxu0 0
      %898 = vmatprep.subr.bf16.mxu0 0
      %899 = vmatpush1.bf16.xpose.msra.mxu0 0
      %900 = vmatprep.subr.bf16.mxu0 0
      %901 = vmatpush1.bf16.xpose.msra.mxu0 0
      %902 = vmatprep.subr.bf16.mxu0 0
      %903 = vmatpush1.bf16.xpose.msra.mxu0 0
      %904 = vmatprep.subr.bf16.mxu0 0
      %905 = vmatpush1.bf16.xpose.msra.mxu0 0
      %906 = vmatprep.subr.bf16.mxu0 0
      %907 = vmatpush1.bf16.xpose.msra.mxu0 0
      %908 = vmatprep.subr.bf16.mxu0 0
      %909 = vmatpush1.bf16.xpose.msra.mxu0 0
      %910 = vmatprep.mubr.bf16.mxu0 0
      %911 = vmatmul.mubr.bf16.gmra.mrb[0].mxu0 %v873
      %v912 = vpop.f32.mrb[0].mxu0
      %v913 = vadd.f32 %v468, %v912
      %v914 = vpop.f32.mrb[0].mxu0
      %v915 = vpop.f32.mrb[0].mxu0
      %v916 = vpop.f32.mrb[0].mxu0
      %917 = vdwg.mxu0
      %v918 = vsel %vm480, %v913, -inf
      %919 = vmax.xlane.f32.xlu0 %v918
      %v920 = vpop.xlane.xlu0 %919
      %v921 = vsub.f32 %v913, %v920
      %v922 = vmul.f32 %v921, 1.442695
      %v923 = vpow.pop %v922
      %v924 = vsel %vm480, %v923, 0.0
      %925 = vadd.xlane.f32.xlu0 %v924
      %v926 = vpop.xlane.xlu0 %925
      %v927 = vrcp.pop %v926
      %v928 = vmul.f32 %v923, %v927
      // Predicated region
      $region69: #{decoder_forward.7} parent=51 // pred_check
        %p929 = pneg %p538
      $region70: #{decoder_forward.7} parent=51 // pred_check_branch
        %931 = sbr.rel (%p929) target = $region72
      $region71: #{decoder_forward.7} parent=51 // pred_region
        %s932 = scalar_lea.vmem %s386, 24
        %933 = vst.msk [vmem:[%s932] sm:$0xff] %vm480, %v928
      $region72: #{decoder_forward.7} parent=51 // pred_fallthru
        _
      %v934 = vpack.c.bf16 %v928, %v928
      %935 = vrot.lane.b32.xlu0 %v869, 40
      %v936 = vpop.permute.xlu0 %935
      %v938 = vsel %vm480, %v934, 0
      %v941 = vsel %vm549, %v936, 0
      %943 = vmatprep.subr.bf16.mxu0 0
      %944 = vmatpush1.bf16.msra.mxu0 %v941
      %945 = vmatprep.subr.bf16.mxu0 0
      %946 = vmatpush1.bf16.msra.mxu0 0
      %947 = vmatprep.subr.bf16.mxu0 0
      %948 = vmatpush1.bf16.msra.mxu0 0
      %949 = vmatprep.subr.bf16.mxu0 0
      %950 = vmatpush1.bf16.msra.mxu0 0
      %951 = vmatprep.subr.bf16.mxu0 0
      %952 = vmatpush1.bf16.msra.mxu0 0
      %953 = vmatprep.subr.bf16.mxu0 0
      %954 = vmatpush1.bf16.msra.mxu0 0
      %955 = vmatprep.subr.bf16.mxu0 0
      %956 = vmatpush1.bf16.msra.mxu0 0
      %957 = vmatprep.subr.bf16.mxu0 0
      %958 = vmatpush1.bf16.msra.mxu0 0
      %959 = vmatprep.subr.bf16.mxu0 0
      %960 = vmatpush1.bf16.msra.mxu0 0
      %961 = vmatprep.subr.bf16.mxu0 0
      %962 = vmatpush1.bf16.msra.mxu0 0
      %963 = vmatprep.subr.bf16.mxu0 0
      %964 = vmatpush1.bf16.msra.mxu0 0
      %965 = vmatprep.subr.bf16.mxu0 0
      %966 = vmatpush1.bf16.msra.mxu0 0
      %967 = vmatprep.subr.bf16.mxu0 0
      %968 = vmatpush1.bf16.msra.mxu0 0
      %969 = vmatprep.subr.bf16.mxu0 0
      %970 = vmatpush1.bf16.msra.mxu0 0
      %971 = vmatprep.subr.bf16.mxu0 0
      %972 = vmatpush1.bf16.msra.mxu0 0
      %973 = vmatprep.subr.bf16.mxu0 0
      %974 = vmatpush1.bf16.msra.mxu0 0
      %975 = vmatprep.mubr.bf16.mxu0 0
      %976 = vmatmul.mubr.bf16.gmra.mrb[0].mxu0 %v938
      %v977 = vpop.f32.mrb[0].mxu0
      %v978 = vadd.f32 0.0, %v977
      %v979 = vpop.f32.mrb[0].mxu0
      %v980 = vpop.f32.mrb[0].mxu0
      %v981 = vpop.f32.mrb[0].mxu0
      %982 = vdwg.mxu0
      %v983 = vpack.c.bf16 %v978, %v978
      %v985 = vunpack.c.l.b16 %v983
      %v986 = vpack.c.b16 %v985, %v985
      %987 = vrot.lane.b32.xlu0 %v986, 24
      %v988 = vpop.permute.xlu0 %987
      %vm990 = vcmask 257216
      %991 = vst.msk [vmem:[#allocation3] sm:$0xf] %vm990, %v988
      %v992 = vld [vmem:[#allocation3] sm:$0xf]
      %v993 = vld [vmem:[%s4] sm:$0xf]
      %v994 = vld [vmem:[%s4 + $0x4] sm:$0xf]
      %v995 = vld [vmem:[%s4 + $0x8] sm:$0xf]
      %v996 = vld [vmem:[%s4 + $0xc] sm:$0xf]
      %v997 = vld [vmem:[%s5] sm:$0x1]
      %v999 = vlaneseq
      %v1000 = vshrl.u32 %v999, 7
      %v1001 = vsub.s32 0, %v1000
      %v1002 = vrot.slane %v997, %v1001
      %v1008 = vunpack.c.l.b16 %v993
      %v1009 = vunpack.c.l.b16 %v994
      %v1010 = vunpack.c.l.b16 %v995
      %v1011 = vunpack.c.l.b16 %v996
      %v1012 = vpack.c.b16 %v1009, %v1008
      %v1013 = vpack.c.b16 %v1011, %v1010
      %vm1016 = vcmask 261120
      %v1018 = vsel %vm1016, %v992, 0
      %1020 = vmatprep.subr.bf16.mxu0 0
      %1021 = vmatpush1.bf16.msra.mxu0 %v1012
      %1022 = vmatprep.subr.bf16.mxu0 0
      %1023 = vmatpush1.bf16.msra.mxu0 %v1013
      %1024 = vmatprep.subr.bf16.mxu0 0
      %1025 = vmatpush1.bf16.msra.mxu0 0
      %1026 = vmatprep.subr.bf16.mxu0 0
      %1027 = vmatpush1.bf16.msra.mxu0 0
      %1028 = vmatprep.subr.bf16.mxu0 0
      %1029 = vmatpush1.bf16.msra.mxu0 0
      %1030 = vmatprep.subr.bf16.mxu0 0
      %1031 = vmatpush1.bf16.msra.mxu0 0
      %1032 = vmatprep.subr.bf16.mxu0 0
      %1033 = vmatpush1.bf16.msra.mxu0 0
      %1034 = vmatprep.subr.bf16.mxu0 0
      %1035 = vmatpush1.bf16.msra.mxu0 0
      %1036 = vmatprep.subr.bf16.mxu0 0
      %1037 = vmatpush1.bf16.msra.mxu0 0
      %1038 = vmatprep.subr.bf16.mxu0 0
      %1039 = vmatpush1.bf16.msra.mxu0 0
      %1040 = vmatprep.subr.bf16.mxu0 0
      %1041 = vmatpush1.bf16.msra.mxu0 0
      %1042 = vmatprep.subr.bf16.mxu0 0
      %1043 = vmatpush1.bf16.msra.mxu0 0
      %1044 = vmatprep.subr.bf16.mxu0 0
      %1045 = vmatpush1.bf16.msra.mxu0 0
      %1046 = vmatprep.subr.bf16.mxu0 0
      %1047 = vmatpush1.bf16.msra.mxu0 0
      %1048 = vmatprep.subr.bf16.mxu0 0
      %1049 = vmatpush1.bf16.msra.mxu0 0
      %1050 = vmatprep.subr.bf16.mxu0 0
      %1051 = vmatpush1.bf16.msra.mxu0 0
      %1052 = vmatprep.mubr.bf16.mxu0 0
      %1053 = vmatmul.mubr.bf16.gmra.mrb[0].mxu0 %v1018
      %v1054 = vpop.f32.mrb[0].mxu0
      %v1055 = vadd.f32 %v1002, %v1054
      %v1056 = vpop.f32.mrb[0].mxu0
      %v1057 = vpop.f32.mrb[0].mxu0
      %v1058 = vpop.f32.mrb[0].mxu0
      %1059 = vdwg.mxu0
      %v1060 = vadd.f32 %v466, %v1055
      %v1061 = vsel %vm1016, %v1060, 0.0
      %1062 = vadd.xlane.f32.xlu0 %v1061
      %v1063 = vpop.xlane.xlu0 %1062
      %v1064 = vrcp.pop 32.0
      %v1065 = vmul.f32 %v1063, %v1064
      %v1066 = vsub.f32 %v1060, %v1065
      %v1067 = vmul.f32 %v1066, %v1066
      %v1068 = vsel %vm1016, %v1067, 0.0
      %1069 = vadd.xlane.f32.xlu0 %v1068
      %v1070 = vpop.xlane.xlu0 %1069
      %v1071 = vmul.f32 %v1070, %v1064
      %v1072 = vadd.f32 %v1071, 1e-05
      %v1073 = vrsqrt.pop %v1072
      %v1074 = vmul.f32 %v1066, %v1073
      %v1075 = vld [vmem:[%s6] sm:$0x1]
      %v1077 = vlaneseq
      %v1078 = vshrl.u32 %v1077, 7
      %v1079 = vsub.s32 0, %v1078
      %v1080 = vrot.slane %v1075, %v1079
      %v1082 = vmul.f32 %v1074, %v1080
      %v1083 = vld [vmem:[%s7] sm:$0x1]
      %v1085 = vlaneseq
      %v1086 = vshrl.u32 %v1085, 7
      %v1087 = vsub.s32 0, %v1086
      %v1088 = vrot.slane %v1083, %v1087
      %v1090 = vadd.f32 %v1082, %v1088
      %1091 = vst.msk [vmem:[%s382] sm:$0xff] %vm1016, %v1090
      %p1092 = scmp.lt.s32.totalorder %s25, 1
      %s1093 = scalar_select %p1092, %s25, 1
      %p1094 = scmp.lt.s32.totalorder %s26, 0
      %s1095 = scalar_select %p1094, %s26, 0
      %s1096 = sadd.s32 %s1095, %s1093
      %s1097 = smul.addr %s1096, 8
      %s1098 = scalar_lea.vmem %s8, %s1097
      %p1099 = scmp.lt.s32.totalorder %s26, 0
      %s1100 = scalar_select %p1099, %s26, 0
      %s1101 = smul.addr %s1100, 8
      %s1102 = scalar_lea.vmem %s9, %s1101
      // Predicated region
      $region73: #{decoder_forward.7} parent=51 // pred_check
        %p1103 = pneg %p233
      $region74: #{decoder_forward.7} parent=51 // pred_check_branch
        %1105 = sbr.rel (%p1103) target = $region76
      $region75: #{decoder_forward.7} parent=51 // pred_region
        _
      $region76: #{decoder_forward.7} parent=51 // pred_fallthru
        _
      // Predicated region
      $region77: #{decoder_forward.7} parent=51 // pred_check
        %p1106 = pneg %p259
      $region78: #{decoder_forward.7} parent=51 // pred_check_branch
        %1108 = sbr.rel (%p1106) target = $region80
      $region79: #{decoder_forward.7} parent=51 // pred_region
        _
      $region80: #{decoder_forward.7} parent=51 // pred_fallthru
        _
      // Predicated region
      $region81: #{decoder_forward.7} parent=51 // pred_check
        %p1109 = pneg %p259
      $region82: #{decoder_forward.7} parent=51 // pred_check_branch
        %1111 = sbr.rel (%p1109) target = $region84
      $region83: #{decoder_forward.7} parent=51 // pred_region
        %p1112 = scmp.lt.s32.totalorder %s26, 0
        %s1113 = scalar_select %p1112, %s26, 0
        %s1114 = smul.addr %s1113, 8
        %s1115 = scalar_lea.vmem %s9, %s1114
      $region84: #{decoder_forward.7} parent=51 // pred_fallthru
        _
    $region52: #{decoder_forward.7} parent=5 // pred_fallthru
      _
    %p1116 = scmp.le.s32.totalorder 2, %s16
    // Predicated region
    $region85: #{decoder_forward.7} parent=5 // pred_check
      %p1117 = pneg %p1116
    $region86: #{decoder_forward.7} parent=5 // pred_check_branch
      %1119 = sbr.rel (%p1117) target = $region88
    $region87: #{decoder_forward.7} parent=5 // pred_region
      %s1120 = ssub.s32 %s16, 2
      // Predicated region
      $region89: #{decoder_forward.7} parent=87 // pred_check
        %p1121 = pneg %p239
      $region90: #{decoder_forward.7} parent=87 // pred_check_branch
        %1123 = sbr.rel (%p1121) target = $region92
      $region91: #{decoder_forward.7} parent=87 // pred_region
        %p1124 = scmp.lt.s32.totalorder %s27, 1
        %s1125 = scalar_select %p1124, %s27, 1
        %p1126 = scmp.lt.s32.totalorder %s28, 0
        %s1127 = scalar_select %p1126, %s28, 0
        %s1128 = sadd.s32 %s1127, %s1125
        %s1129 = smul.addr %s1128, 8
        %s1130 = scalar_lea.vmem %s8, %s1129
      $region92: #{decoder_forward.7} parent=87 // pred_fallthru
        _
    $region88: #{decoder_forward.7} parent=5 // pred_fallthru
      _
  $region6: #{decoder_forward.7} parent=0 // loop_footer
    %s20 = sadd.s32 1, %s16
  $region7: #{decoder_forward.7} parent=0 // loop_footer_branch
    %15 = sbr.rel target = $region3
  $region8: #{decoder_forward.7} parent=0 // loop_exit
    _

// kernel: decoder_forward.8
$region0: #{decoder_forward.8}
  #allocation0 [shape = 'u32[]', space=smem, size = 0x4, offset = 0x4, fixed_abs, tag = 'smem constant byte address 0x4 - core index']
  #allocation1 [shape = 'u32[144,128]{1,0:T(1,128)}', space=vmem, size = 0x12000, scoped, tag = 'internal scratch']
  #allocation2 [shape = 'bf16[8,64]{1,0:T(8,128)(2,1)}', space=vmem, size = 0x800, scoped, tag = 'scratch operand']
  #allocation3 [shape = 'bf16[8,32]{1,0:T(8,128)(2,1)}', space=vmem, size = 0x800, scoped, tag = 'scratch operand']
  %s0 = inlined_call_operand.vmem [shape: f32[2,8,32], index: 0, kind: input, shape index: {}]
  %s1 = inlined_call_operand.vmem [shape: f32[2,8,32], index: 1, kind: input, shape index: {}]
  %s2 = inlined_call_operand.vmem [shape: bf16[2,8,8], index: 2, kind: input, shape index: {}]
  %s3 = inlined_call_operand.vmem [shape: bf16[32,32], index: 3, kind: input, shape index: {}]
  %s4 = inlined_call_operand.vmem [shape: f32[1,32], index: 4, kind: input, shape index: {}]
  %s5 = inlined_call_operand.vmem [shape: bf16[32,64], index: 5, kind: input, shape index: {}]
  %s6 = inlined_call_operand.vmem [shape: f32[1,64], index: 6, kind: input, shape index: {}]
  %s7 = inlined_call_operand.vmem [shape: bf16[32,32], index: 7, kind: input, shape index: {}]
  %s8 = inlined_call_operand.vmem [shape: f32[1,32], index: 8, kind: input, shape index: {}]
  %s9 = inlined_call_operand.vmem [shape: f32[1,32], index: 9, kind: input, shape index: {}]
  %s10 = inlined_call_operand.vmem [shape: f32[1,32], index: 10, kind: input, shape index: {}]
  %s11 = inlined_call_operand.vmem [shape: f32[2,8,32], index: 11, kind: output, shape index: {0}]
  %s12 = inlined_call_operand.vmem [shape: f32[1,4,8,8], index: 12, kind: output, shape index: {1}]
  %13 = xla_tuple %s11, %s12
  %s14 = sld [smem:[#allocation0]]
  $region105: #{decoder_forward.8} parent=0
    _
  %s16 = ssub.s32 1, %s14
  %s17 = scalar_select 0, %s16, %s14
  loop: start=0, step=1, limit=4
  $region2: #{decoder_forward.8} parent=0 // loop_pre_header
    _
  $region3: #{decoder_forward.8} parent=0 // loop_header
    %s19 = sphi 0, %s23
    %p20 = scmp.ge.s32.totalorder %s19, 4
    %s26 = sphi 0, %s38
    %s27 = sphi 0, %s34
    %s28 = sphi 0, %s26
    %s29 = sphi 0, %s27
    %s30 = sphi 0, %s28
    %s31 = sphi 0, %s29
    %s43 = sphi 0, %s45
    %s46 = sphi 0, %s43
    %s47 = sphi 0, %s46
    %s63 = sphi 0, %s47
    %s69 = sphi 0, %s71
    %s72 = sphi 0, %s69
    %s73 = sphi 0, %s72
    %s89 = sphi 0, %s73
    %s97 = sphi 0, %s99
    %s100 = sphi 0, %s97
    %s101 = sphi 0, %s100
    %s117 = sphi 0, %s101
    %s121 = sphi 0, %s121
    %s123 = sphi 0, %s121
    %s124 = sphi 0, %s123
    %s138 = sphi 0, %s124
    %s142 = sphi 0, %s142
    %s144 = sphi 0, %s142
    %s145 = sphi 0, %s144
    %s159 = sphi 0, %s145
    %s163 = sphi 0, %s163
    %s165 = sphi 0, %s163
    %s166 = sphi 0, %s165
    %s180 = sphi 0, %s166
    %s184 = sphi 0, %s184
    %s186 = sphi 0, %s184
    %s187 = sphi 0, %s186
    %s201 = sphi 0, %s187
    %s205 = sphi 0, %s205
    %s207 = sphi 0, %s205
    %s208 = sphi 0, %s207
    %s222 = sphi 0, %s208
    %s226 = sphi 0, %s226
    %s228 = sphi 0, %s226
    %s229 = sphi 0, %s228
    %s243 = sphi 0, %s229
    %s247 = sphi 0, %s247
    %s249 = sphi 0, %s247
    %s250 = sphi 0, %s249
    %s264 = sphi 0, %s250
    %s268 = sphi 0, %s268
    %s270 = sphi 0, %s268
    %s271 = sphi 0, %s270
    %s285 = sphi 0, %s271
    %s293 = sphi 0, %s295
    %s296 = sphi 0, %s293
    %s297 = sphi 0, %s296
    %s313 = sphi 0, %s297
    %s319 = sphi 0, %s321
    %s322 = sphi 0, %s319
    %s323 = sphi 0, %s322
    %s339 = sphi 0, %s323
  $region4: #{decoder_forward.8} parent=0 // loop_header_branch
    %22 = sbr.rel (%p20) target = $region8
  $region5: #{decoder_forward.8} parent=0 // loop_body
    %s24 = ssub.s32 %s19, 1
    %s25 = ssub.s32 %s19, 2
    %s32 = sadd.s32 1, %s27
    %p33 = scmp.ge.s32.totalorder %s32, 1
    %s34 = scalar_select %p33, 0, %s32
    %s35 = sadd.s32 1, %s26
    %s36 = scalar_select %p33, %s35, %s26
    %p37 = scmp.ge.s32.totalorder %s36, 2
    %s38 = scalar_select %p37, 0, %s36
    %s39 = ssub.s32 %s26, %s38
    %s40 = ssub.s32 %s27, %s34
    %s41 = sor.u32 %s39, %s40
    %p42 = scmp.eq.s32.totalorder %s41, 0
    %s44 = sadd.s32 %s43, 1
    %s45 = scalar_select %p42, %s43, %s44
    %p48 = pneg %p42
    %p49 = scmp.eq.s32.totalorder %s19, 1
    %p50 = por %p48, %p49
    %p51 = scmp.ne.s32.totalorder %s43, %s46
    %p52 = scmp.eq.s32.totalorder %s19, 0
    %p53 = por %p51, %p52
    %p54 = scmp.ne.s32.totalorder %s43, %s46
    %p55 = scmp.eq.s32.totalorder %s24, 1
    %p56 = por %p54, %p55
    %p57 = scmp.ne.s32.totalorder %s46, %s47
    %p58 = scmp.eq.s32.totalorder %s24, 0
    %p59 = por %p57, %p58
    %p60 = scmp.ne.s32.totalorder %s46, %s47
    %p61 = scmp.eq.s32.totalorder %s25, 1
    %p62 = por %p60, %p61
    %p64 = scmp.ne.s32.totalorder %s47, %s63
    %p65 = scmp.eq.s32.totalorder %s25, 0
    %p66 = por %p64, %p65
    %s67 = ssub.s32 %s26, %s38
    %p68 = scmp.eq.s32.totalorder %s67, 0
    %s70 = sadd.s32 %s69, 1
    %s71 = scalar_select %p68, %s69, %s70
    %p74 = pneg %p68
    %p75 = scmp.eq.s32.totalorder %s19, 1
    %p76 = por %p74, %p75
    %p77 = scmp.ne.s32.totalorder %s69, %s72
    %p78 = scmp.eq.s32.totalorder %s19, 0
    %p79 = por %p77, %p78
    %p80 = scmp.ne.s32.totalorder %s69, %s72
    %p81 = scmp.eq.s32.totalorder %s24, 1
    %p82 = por %p80, %p81
    %p83 = scmp.ne.s32.totalorder %s72, %s73
    %p84 = scmp.eq.s32.totalorder %s24, 0
    %p85 = por %p83, %p84
    %p86 = scmp.ne.s32.totalorder %s72, %s73
    %p87 = scmp.eq.s32.totalorder %s25, 1
    %p88 = por %p86, %p87
    %p90 = scmp.ne.s32.totalorder %s73, %s89
    %p91 = scmp.eq.s32.totalorder %s25, 0
    %p92 = por %p90, %p91
    %s93 = ssub.s32 %s26, %s38
    %s94 = ssub.s32 %s27, %s34
    %s95 = sor.u32 %s93, %s94
    %p96 = scmp.eq.s32.totalorder %s95, 0
    %s98 = sadd.s32 %s97, 1
    %s99 = scalar_select %p96, %s97, %s98
    %p102 = pneg %p96
    %p103 = scmp.eq.s32.totalorder %s19, 1
    %p104 = por %p102, %p103
    %p105 = scmp.ne.s32.totalorder %s97, %s100
    %p106 = scmp.eq.s32.totalorder %s19, 0
    %p107 = por %p105, %p106
    %p108 = scmp.ne.s32.totalorder %s97, %s100
    %p109 = scmp.eq.s32.totalorder %s24, 1
    %p110 = por %p108, %p109
    %p111 = scmp.ne.s32.totalorder %s100, %s101
    %p112 = scmp.eq.s32.totalorder %s24, 0
    %p113 = por %p111, %p112
    %p114 = scmp.ne.s32.totalorder %s100, %s101
    %p115 = scmp.eq.s32.totalorder %s25, 1
    %p116 = por %p114, %p115
    %p118 = scmp.ne.s32.totalorder %s101, %s117
    %p119 = scmp.eq.s32.totalorder %s25, 0
    %p120 = por %p118, %p119
    %s122 = sadd.s32 %s121, 1
    %p125 = scmp.eq.s32.totalorder %s19, 1
    %p126 = scmp.ne.s32.totalorder %s121, %s123
    %p127 = scmp.eq.s32.totalorder %s19, 0
    %p128 = por %p126, %p127
    %p129 = scmp.ne.s32.totalorder %s121, %s123
    %p130 = scmp.eq.s32.totalorder %s24, 1
    %p131 = por %p129, %p130
    %p132 = scmp.ne.s32.totalorder %s123, %s124
    %p133 = scmp.eq.s32.totalorder %s24, 0
    %p134 = por %p132, %p133
    %p135 = scmp.ne.s32.totalorder %s123, %s124
    %p136 = scmp.eq.s32.totalorder %s25, 1
    %p137 = por %p135, %p136
    %p139 = scmp.ne.s32.totalorder %s124, %s138
    %p140 = scmp.eq.s32.totalorder %s25, 0
    %p141 = por %p139, %p140
    %s143 = sadd.s32 %s142, 1
    %p146 = scmp.eq.s32.totalorder %s19, 1
    %p147 = scmp.ne.s32.totalorder %s142, %s144
    %p148 = scmp.eq.s32.totalorder %s19, 0
    %p149 = por %p147, %p148
    %p150 = scmp.ne.s32.totalorder %s142, %s144
    %p151 = scmp.eq.s32.totalorder %s24, 1
    %p152 = por %p150, %p151
    %p153 = scmp.ne.s32.totalorder %s144, %s145
    %p154 = scmp.eq.s32.totalorder %s24, 0
    %p155 = por %p153, %p154
    %p156 = scmp.ne.s32.totalorder %s144, %s145
    %p157 = scmp.eq.s32.totalorder %s25, 1
    %p158 = por %p156, %p157
    %p160 = scmp.ne.s32.totalorder %s145, %s159
    %p161 = scmp.eq.s32.totalorder %s25, 0
    %p162 = por %p160, %p161
    %s164 = sadd.s32 %s163, 1
    %p167 = scmp.eq.s32.totalorder %s19, 1
    %p168 = scmp.ne.s32.totalorder %s163, %s165
    %p169 = scmp.eq.s32.totalorder %s19, 0
    %p170 = por %p168, %p169
    %p171 = scmp.ne.s32.totalorder %s163, %s165
    %p172 = scmp.eq.s32.totalorder %s24, 1
    %p173 = por %p171, %p172
    %p174 = scmp.ne.s32.totalorder %s165, %s166
    %p175 = scmp.eq.s32.totalorder %s24, 0
    %p176 = por %p174, %p175
    %p177 = scmp.ne.s32.totalorder %s165, %s166
    %p178 = scmp.eq.s32.totalorder %s25, 1
    %p179 = por %p177, %p178
    %p181 = scmp.ne.s32.totalorder %s166, %s180
    %p182 = scmp.eq.s32.totalorder %s25, 0
    %p183 = por %p181, %p182
    %s185 = sadd.s32 %s184, 1
    %p188 = scmp.eq.s32.totalorder %s19, 1
    %p189 = scmp.ne.s32.totalorder %s184, %s186
    %p190 = scmp.eq.s32.totalorder %s19, 0
    %p191 = por %p189, %p190
    %p192 = scmp.ne.s32.totalorder %s184, %s186
    %p193 = scmp.eq.s32.totalorder %s24, 1
    %p194 = por %p192, %p193
    %p195 = scmp.ne.s32.totalorder %s186, %s187
    %p196 = scmp.eq.s32.totalorder %s24, 0
    %p197 = por %p195, %p196
    %p198 = scmp.ne.s32.totalorder %s186, %s187
    %p199 = scmp.eq.s32.totalorder %s25, 1
    %p200 = por %p198, %p199
    %p202 = scmp.ne.s32.totalorder %s187, %s201
    %p203 = scmp.eq.s32.totalorder %s25, 0
    %p204 = por %p202, %p203
    %s206 = sadd.s32 %s205, 1
    %p209 = scmp.eq.s32.totalorder %s19, 1
    %p210 = scmp.ne.s32.totalorder %s205, %s207
    %p211 = scmp.eq.s32.totalorder %s19, 0
    %p212 = por %p210, %p211
    %p213 = scmp.ne.s32.totalorder %s205, %s207
    %p214 = scmp.eq.s32.totalorder %s24, 1
    %p215 = por %p213, %p214
    %p216 = scmp.ne.s32.totalorder %s207, %s208
    %p217 = scmp.eq.s32.totalorder %s24, 0
    %p218 = por %p216, %p217
    %p219 = scmp.ne.s32.totalorder %s207, %s208
    %p220 = scmp.eq.s32.totalorder %s25, 1
    %p221 = por %p219, %p220
    %p223 = scmp.ne.s32.totalorder %s208, %s222
    %p224 = scmp.eq.s32.totalorder %s25, 0
    %p225 = por %p223, %p224
    %s227 = sadd.s32 %s226, 1
    %p230 = scmp.eq.s32.totalorder %s19, 1
    %p231 = scmp.ne.s32.totalorder %s226, %s228
    %p232 = scmp.eq.s32.totalorder %s19, 0
    %p233 = por %p231, %p232
    %p234 = scmp.ne.s32.totalorder %s226, %s228
    %p235 = scmp.eq.s32.totalorder %s24, 1
    %p236 = por %p234, %p235
    %p237 = scmp.ne.s32.totalorder %s228, %s229
    %p238 = scmp.eq.s32.totalorder %s24, 0
    %p239 = por %p237, %p238
    %p240 = scmp.ne.s32.totalorder %s228, %s229
    %p241 = scmp.eq.s32.totalorder %s25, 1
    %p242 = por %p240, %p241
    %p244 = scmp.ne.s32.totalorder %s229, %s243
    %p245 = scmp.eq.s32.totalorder %s25, 0
    %p246 = por %p244, %p245
    %s248 = sadd.s32 %s247, 1
    %p251 = scmp.eq.s32.totalorder %s19, 1
    %p252 = scmp.ne.s32.totalorder %s247, %s249
    %p253 = scmp.eq.s32.totalorder %s19, 0
    %p254 = por %p252, %p253
    %p255 = scmp.ne.s32.totalorder %s247, %s249
    %p256 = scmp.eq.s32.totalorder %s24, 1
    %p257 = por %p255, %p256
    %p258 = scmp.ne.s32.totalorder %s249, %s250
    %p259 = scmp.eq.s32.totalorder %s24, 0
    %p260 = por %p258, %p259
    %p261 = scmp.ne.s32.totalorder %s249, %s250
    %p262 = scmp.eq.s32.totalorder %s25, 1
    %p263 = por %p261, %p262
    %p265 = scmp.ne.s32.totalorder %s250, %s264
    %p266 = scmp.eq.s32.totalorder %s25, 0
    %p267 = por %p265, %p266
    %s269 = sadd.s32 %s268, 1
    %p272 = scmp.eq.s32.totalorder %s19, 1
    %p273 = scmp.ne.s32.totalorder %s268, %s270
    %p274 = scmp.eq.s32.totalorder %s19, 0
    %p275 = por %p273, %p274
    %p276 = scmp.ne.s32.totalorder %s268, %s270
    %p277 = scmp.eq.s32.totalorder %s24, 1
    %p278 = por %p276, %p277
    %p279 = scmp.ne.s32.totalorder %s270, %s271
    %p280 = scmp.eq.s32.totalorder %s24, 0
    %p281 = por %p279, %p280
    %p282 = scmp.ne.s32.totalorder %s270, %s271
    %p283 = scmp.eq.s32.totalorder %s25, 1
    %p284 = por %p282, %p283
    %p286 = scmp.ne.s32.totalorder %s271, %s285
    %p287 = scmp.eq.s32.totalorder %s25, 0
    %p288 = por %p286, %p287
    %s289 = ssub.s32 %s26, %s38
    %s290 = ssub.s32 %s27, %s34
    %s291 = sor.u32 %s289, %s290
    %p292 = scmp.eq.s32.totalorder %s291, 0
    %s294 = sadd.s32 %s293, 1
    %s295 = scalar_select %p292, %s293, %s294
    %p298 = pneg %p292
    %p299 = scmp.eq.s32.totalorder %s19, 1
    %p300 = por %p298, %p299
    %p301 = scmp.ne.s32.totalorder %s293, %s296
    %p302 = scmp.eq.s32.totalorder %s19, 0
    %p303 = por %p301, %p302
    %p304 = scmp.ne.s32.totalorder %s293, %s296
    %p305 = scmp.eq.s32.totalorder %s24, 1
    %p306 = por %p304, %p305
    %p307 = scmp.ne.s32.totalorder %s296, %s297
    %p308 = scmp.eq.s32.totalorder %s24, 0
    %p309 = por %p307, %p308
    %p310 = scmp.ne.s32.totalorder %s296, %s297
    %p311 = scmp.eq.s32.totalorder %s25, 1
    %p312 = por %p310, %p311
    %p314 = scmp.ne.s32.totalorder %s297, %s313
    %p315 = scmp.eq.s32.totalorder %s25, 0
    %p316 = por %p314, %p315
    %s317 = ssub.s32 %s27, %s34
    %p318 = scmp.eq.s32.totalorder %s317, 0
    %s320 = sadd.s32 %s319, 1
    %s321 = scalar_select %p318, %s319, %s320
    %p324 = pneg %p318
    %p325 = scmp.eq.s32.totalorder %s19, 1
    %p326 = por %p324, %p325
    %p327 = scmp.ne.s32.totalorder %s319, %s322
    %p328 = scmp.eq.s32.totalorder %s19, 0
    %p329 = por %p327, %p328
    %p330 = scmp.ne.s32.totalorder %s319, %s322
    %p331 = scmp.eq.s32.totalorder %s24, 1
    %p332 = por %p330, %p331
    %p333 = scmp.ne.s32.totalorder %s322, %s323
    %p334 = scmp.eq.s32.totalorder %s24, 0
    %p335 = por %p333, %p334
    %p336 = scmp.ne.s32.totalorder %s322, %s323
    %p337 = scmp.eq.s32.totalorder %s25, 1
    %p338 = por %p336, %p337
    %p340 = scmp.ne.s32.totalorder %s323, %s339
    %p341 = scmp.eq.s32.totalorder %s25, 0
    %p342 = por %p340, %p341
    %p343 = scmp.le.s32.totalorder 1, %s19
    %p344 = scmp.lt.s32.totalorder %s19, 3
    %p345 = pnand %p343, %p344
    %p346 = pneg %p345
    // Predicated region
    $region9: #{decoder_forward.8} parent=5 // pred_check
      _
    $region10: #{decoder_forward.8} parent=5 // pred_check_branch
      %348 = sbr.rel (%p345) target = $region12
    $region11: #{decoder_forward.8} parent=5 // pred_region
      %s349 = ssub.s32 %s19, 1
      // Predicated region
      $region13: #{decoder_forward.8} parent=11 // pred_check
        %p350 = pneg %p134
      $region14: #{decoder_forward.8} parent=11 // pred_check_branch
        %352 = sbr.rel (%p350) target = $region16
      $region15: #{decoder_forward.8} parent=11 // pred_region
        _
      $region16: #{decoder_forward.8} parent=11 // pred_fallthru
        _
      // Predicated region
      $region17: #{decoder_forward.8} parent=11 // pred_check
        %p353 = pneg %p155
      $region18: #{decoder_forward.8} parent=11 // pred_check_branch
        %355 = sbr.rel (%p353) target = $region20
      $region19: #{decoder_forward.8} parent=11 // pred_region
        _
      $region20: #{decoder_forward.8} parent=11 // pred_fallthru
        _
      // Predicated region
      $region21: #{decoder_forward.8} parent=11 // pred_check
        %p356 = pneg %p176
      $region22: #{decoder_forward.8} parent=11 // pred_check_branch
        %358 = sbr.rel (%p356) target = $region24
      $region23: #{decoder_forward.8} parent=11 // pred_region
        _
      $region24: #{decoder_forward.8} parent=11 // pred_fallthru
        _
      // Predicated region
      $region25: #{decoder_forward.8} parent=11 // pred_check
        %p359 = pneg %p197
      $region26: #{decoder_forward.8} parent=11 // pred_check_branch
        %361 = sbr.rel (%p359) target = $region28
      $region27: #{decoder_forward.8} parent=11 // pred_region
        _
      $region28: #{decoder_forward.8} parent=11 // pred_fallthru
        _
      // Predicated region
      $region29: #{decoder_forward.8} parent=11 // pred_check
        %p362 = pneg %p218
      $region30: #{decoder_forward.8} parent=11 // pred_check_branch
        %364 = sbr.rel (%p362) target = $region32
      $region31: #{decoder_forward.8} parent=11 // pred_region
        _
      $region32: #{decoder_forward.8} parent=11 // pred_fallthru
        _
      // Predicated region
      $region33: #{decoder_forward.8} parent=11 // pred_check
        %p365 = pneg %p239
      $region34: #{decoder_forward.8} parent=11 // pred_check_branch
        %367 = sbr.rel (%p365) target = $region36
      $region35: #{decoder_forward.8} parent=11 // pred_region
        _
      $region36: #{decoder_forward.8} parent=11 // pred_fallthru
        _
      // Predicated region
      $region37: #{decoder_forward.8} parent=11 // pred_check
        %p368 = pneg %p260
      $region38: #{decoder_forward.8} parent=11 // pred_check_branch
        %370 = sbr.rel (%p368) target = $region40
      $region39: #{decoder_forward.8} parent=11 // pred_region
        _
      $region40: #{decoder_forward.8} parent=11 // pred_fallthru
        _
      // Predicated region
      $region41: #{decoder_forward.8} parent=11 // pred_check
        %p371 = pneg %p281
      $region42: #{decoder_forward.8} parent=11 // pred_check_branch
        %373 = sbr.rel (%p371) target = $region44
      $region43: #{decoder_forward.8} parent=11 // pred_region
        _
      $region44: #{decoder_forward.8} parent=11 // pred_fallthru
        _
    $region12: #{decoder_forward.8} parent=5 // pred_fallthru
      _
    %p374 = scmp.lt.s32.totalorder %s19, 2
    // Predicated region
    $region45: #{decoder_forward.8} parent=5 // pred_check
      %p375 = pneg %p374
    $region46: #{decoder_forward.8} parent=5 // pred_check_branch
      %377 = sbr.rel (%p375) target = $region48
    $region47: #{decoder_forward.8} parent=5 // pred_region
      // Predicated region
      $region49: #{decoder_forward.8} parent=47 // pred_check
        %p378 = pneg %p53
      $region50: #{decoder_forward.8} parent=47 // pred_check_branch
        %380 = sbr.rel (%p378) target = $region52
      $region51: #{decoder_forward.8} parent=47 // pred_region
        %p381 = scmp.lt.s32.totalorder %s26, 1
        %s382 = scalar_select %p381, %s26, 1
        %p383 = scmp.lt.s32.totalorder %s27, 0
        %s384 = scalar_select %p383, %s27, 0
        %s385 = sadd.s32 %s384, %s382
        %s386 = smul.addr %s385, 8
        %s387 = scalar_lea.vmem %s0, %s386
      $region52: #{decoder_forward.8} parent=47 // pred_fallthru
        _
      // Predicated region
      $region53: #{decoder_forward.8} parent=47 // pred_check
        %p388 = pneg %p79
      $region54: #{decoder_forward.8} parent=47 // pred_check_branch
        %390 = sbr.rel (%p388) target = $region56
      $region55: #{decoder_forward.8} parent=47 // pred_region
        %p391 = scmp.lt.s32.totalorder %s26, 1
        %s392 = scalar_select %p391, %s26, 1
        %s393 = smul.addr %s392, 8
        %s394 = scalar_lea.vmem %s1, %s393
      $region56: #{decoder_forward.8} parent=47 // pred_fallthru
        _
      // Predicated region
      $region57: #{decoder_forward.8} parent=47 // pred_check
        %p395 = pneg %p107
      $region58: #{decoder_forward.8} parent=47 // pred_check_branch
        %397 = sbr.rel (%p395) target = $region60
      $region59: #{decoder_forward.8} parent=47 // pred_region
        %p398 = scmp.lt.s32.totalorder %s26, 1
        %s399 = scalar_select %p398, %s26, 1
        %p400 = scmp.lt.s32.totalorder %s27, 0
        %s401 = scalar_select %p400, %s27, 0
        %s402 = sadd.s32 %s401, %s399
        %s403 = smul.addr %s402, 4
        %s404 = scalar_lea.vmem %s2, %s403
      $region60: #{decoder_forward.8} parent=47 // pred_fallthru
        _
    $region48: #{decoder_forward.8} parent=5 // pred_fallthru
      _
    %p405 = scmp.le.s32.totalorder 1, %s19
    %p406 = scmp.lt.s32.totalorder %s19, 3
    %p407 = pnand %p405, %p406
    %p408 = pneg %p407
    // Predicated region
    $region61: #{decoder_forward.8} parent=5 // pred_check
      _
    $region62: #{decoder_forward.8} parent=5 // pred_check_branch
      %410 = sbr.rel (%p407) target = $region64
    $region63: #{decoder_forward.8} parent=5 // pred_region
      %s411 = ssub.s32 %s19, 1
      %p412 = scmp.lt.s32.totalorder %s28, 1
      %s413 = scalar_select %p412, %s28, 1
      %p414 = scmp.lt.s32.totalorder %s29, 0
      %s415 = scalar_select %p414, %s29, 0
      %s416 = sadd.s32 %s415, %s413
      %s417 = smul.addr %s416, 8
      %s418 = scalar_lea.vmem %s0, %s417
      %p419 = pneg %p59
      %p420 = pneg %p56
      %p421 = scmp.lt.s32.totalorder %s28, 1
      %s422 = scalar_select %p421, %s28, 1
      %s423 = smul.addr %s422, 8
      %s424 = scalar_lea.vmem %s1, %s423
      %p425 = pneg %p85
      %p426 = pneg %p82
      %p427 = scmp.lt.s32.totalorder %s28, 1
      %s428 = scalar_select %p427, %s28, 1
      %p429 = scmp.lt.s32.totalorder %s29, 0
      %s430 = scalar_select %p429, %s29, 0
      %s431 = sadd.s32 %s430, %s428
      %s432 = smul.addr %s431, 4
      %s433 = scalar_lea.vmem %s2, %s432
      %p434 = pneg %p113
      %p435 = pneg %p110
      %p436 = pneg %p134
      %p437 = pneg %p131
      %p438 = pneg %p155
      %p439 = pneg %p152
      %p440 = pneg %p176
      %p441 = pneg %p173
      %p442 = pneg %p197
      %p443 = pneg %p194
      %p444 = pneg %p218
      %p445 = pneg %p215
      %p446 = pneg %p239
      %p447 = pneg %p236
      %p448 = pneg %p260
      %p449 = pneg %p257
      %p450 = pneg %p281
      %p451 = pneg %p278
      %p452 = pneg %p309
      %p453 = pneg %p306
      %p454 = scmp.lt.s32.totalorder %s28, 1
      %s455 = scalar_select %p454, %s28, 1
      %p456 = scmp.lt.s32.totalorder %s29, 0
      %s457 = scalar_select %p456, %s29, 0
      %s458 = sadd.s32 %s457, %s455
      %s459 = smul.addr %s458, 8
      %s460 = scalar_lea.vmem %s11, %s459
      %p461 = pneg %p335
      %p462 = pneg %p332
      %p463 = scmp.lt.s32.totalorder %s29, 0
      %s464 = scalar_select %p463, %s29, 0
      %s465 = smul.addr %s464, 8
      %s466 = scalar_lea.vmem %s12, %s465
      %p467 = scmp.lt.s32.totalorder %s28, 1
      %s468 = scalar_select %p467, %s28, 1
      %p469 = scmp.lt.s32.totalorder %s29, 0
      %s470 = scalar_select %p469, %s29, 0
      %s471 = sadd.s32 %s470, %s468
      %s472 = smul.addr %s471, 8
      %s473 = scalar_lea.vmem %s0, %s472
      %p474 = scmp.lt.s32.totalorder %s28, 1
      %s475 = scalar_select %p474, %s28, 1
      %s476 = smul.addr %s475, 8
      %s477 = scalar_lea.vmem %s1, %s476
      %p478 = scmp.lt.s32.totalorder %s28, 1
      %s479 = scalar_select %p478, %s28, 1
      %p480 = scmp.lt.s32.totalorder %s29, 0
      %s481 = scalar_select %p480, %s29, 0
      %s482 = sadd.s32 %s481, %s479
      %s483 = smul.addr %s482, 4
      %s484 = scalar_lea.vmem %s2, %s483
      %p485 = scmp.lt.s32.totalorder %s28, 1
      %s486 = scalar_select %p485, %s28, 1
      %p487 = scmp.lt.s32.totalorder %s29, 0
      %s488 = scalar_select %p487, %s29, 0
      %s489 = sadd.s32 %s488, %s486
      %s490 = smul.addr %s489, 8
      %s491 = scalar_lea.vmem %s11, %s490
      %p492 = scmp.lt.s32.totalorder %s29, 0
      %s493 = scalar_select %p492, %s29, 0
      %s494 = smul.addr %s493, 8
      %s495 = scalar_lea.vmem %s12, %s494
      %p497 = scmp.eq.s32.totalorder %s29, 0
      // Predicated region
      $region65: #{decoder_forward.8} parent=63 // pred_check
        %p498 = pneg %p497
      $region66: #{decoder_forward.8} parent=63 // pred_check_branch
        %500 = sbr.rel (%p498) target = $region68
      $region67: #{decoder_forward.8} parent=63 // pred_region
        %v501 = vld [vmem:[%s477] sm:$0xff]
        %v502 = vpack.c.bf16 %v501, %v501
        %v503 = vld [vmem:[%s5] sm:$0xf]
        %v504 = vld [vmem:[%s5 + $0x4] sm:$0xf]
        %v505 = vld [vmem:[%s5 + $0x8] sm:$0xf]
        %v506 = vld [vmem:[%s5 + $0xc] sm:$0xf]
        %v507 = vld [vmem:[%s6] sm:$0x1]
        %v509 = vlaneseq
        %v510 = vshrl.u32 %v509, 7
        %v511 = vsub.s32 0, %v510
        %v512 = vrot.slane %v507, %v511
        %v518 = vunpack.c.l.b16 %v503
        %v519 = vunpack.c.l.b16 %v504
        %v520 = vunpack.c.l.b16 %v505
        %v521 = vunpack.c.l.b16 %v506
        %v522 = vpack.c.b16 %v519, %v518
        %v523 = vpack.c.b16 %v521, %v520
        %vm526 = vcmask 261120
        %v528 = vsel %vm526, %v502, 0
        %530 = vmatprep.subr.bf16.mxu0 0
        %531 = vmatpush1.bf16.msra.mxu0 %v522
        %532 = vmatprep.subr.bf16.mxu0 0
        %533 = vmatpush1.bf16.msra.mxu0 %v523
        %534 = vmatprep.subr.bf16.mxu0 0
        %535 = vmatpush1.bf16.msra.mxu0 0
        %536 = vmatprep.subr.bf16.mxu0 0
        %537 = vmatpush1.bf16.msra.mxu0 0
        %538 = vmatprep.subr.bf16.mxu0 0
        %539 = vmatpush1.bf16.msra.mxu0 0
        %540 = vmatprep.subr.bf16.mxu0 0
        %541 = vmatpush1.bf16.msra.mxu0 0
        %542 = vmatprep.subr.bf16.mxu0 0
        %543 = vmatpush1.bf16.msra.mxu0 0
        %544 = vmatprep.subr.bf16.mxu0 0
        %545 = vmatpush1.bf16.msra.mxu0 0
        %546 = vmatprep.subr.bf16.mxu0 0
        %547 = vmatpush1.bf16.msra.mxu0 0
        %548 = vmatprep.subr.bf16.mxu0 0
        %549 = vmatpush1.bf16.msra.mxu0 0
        %550 = vmatprep.subr.bf16.mxu0 0
        %551 = vmatpush1.bf16.msra.mxu0 0
        %552 = vmatprep.subr.bf16.mxu0 0
        %553 = vmatpush1.bf16.msra.mxu0 0
        %554 = vmatprep.subr.bf16.mxu0 0
        %555 = vmatpush1.bf16.msra.mxu0 0
        %556 = vmatprep.subr.bf16.mxu0 0
        %557 = vmatpush1.bf16.msra.mxu0 0
        %558 = vmatprep.subr.bf16.mxu0 0
        %559 = vmatpush1.bf16.msra.mxu0 0
        %560 = vmatprep.subr.bf16.mxu0 0
        %561 = vmatpush1.bf16.msra.mxu0 0
        %562 = vmatprep.mubr.bf16.mxu0 0
        %563 = vmatmul.mubr.bf16.gmra.mrb[0].mxu0 %v528
        %v564 = vpop.f32.mrb[0].mxu0
        %v565 = vadd.f32 %v512, %v564
        %v566 = vpop.f32.mrb[0].mxu0
        %v567 = vpop.f32.mrb[0].mxu0
        %v568 = vpop.f32.mrb[0].mxu0
        %569 = vdwg.mxu0
        %v570 = vpack.c.bf16 %v565, %v565
        %vm571 = vcmask 519168
        %572 = vst.msk [vmem:[#allocation2] sm:$0xf] %vm571, %v570
      $region68: #{decoder_forward.8} parent=63 // pred_fallthru
        _
      %v573 = vld [vmem:[%s473] sm:$0xff]
      %v574 = vpack.c.bf16 %v573, %v573
      %v575 = vld [vmem:[%s3] sm:$0xf]
      %v576 = vld [vmem:[%s3 + $0x4] sm:$0xf]
      %v577 = vld [vmem:[%s3 + $0x8] sm:$0xf]
      %v578 = vld [vmem:[%s3 + $0xc] sm:$0xf]
      %v579 = vld [vmem:[%s4] sm:$0x1]
      %v581 = vlaneseq
      %v582 = vshrl.u32 %v581, 7
      %v583 = vsub.s32 0, %v582
      %v584 = vrot.slane %v579, %v583
      %v590 = vunpack.c.l.b16 %v575
      %v591 = vunpack.c.l.b16 %v576
      %v592 = vunpack.c.l.b16 %v577
      %v593 = vunpack.c.l.b16 %v578
      %v594 = vpack.c.b16 %v591, %v590
      %v595 = vpack.c.b16 %v593, %v592
      %vm598 = vcmask 261120
      %v600 = vsel %vm598, %v574, 0
      %602 = vmatprep.subr.bf16.mxu0 0
      %603 = vmatpush1.bf16.msra.mxu0 %v594
      %604 = vmatprep.subr.bf16.mxu0 0
      %605 = vmatpush1.bf16.msra.mxu0 %v595
      %606 = vmatprep.subr.bf16.mxu0 0
      %607 = vmatpush1.bf16.msra.mxu0 0
      %608 = vmatprep.subr.bf16.mxu0 0
      %609 = vmatpush1.bf16.msra.mxu0 0
      %610 = vmatprep.subr.bf16.mxu0 0
      %611 = vmatpush1.bf16.msra.mxu0 0
      %612 = vmatprep.subr.bf16.mxu0 0
      %613 = vmatpush1.bf16.msra.mxu0 0
      %614 = vmatprep.subr.bf16.mxu0 0
      %615 = vmatpush1.bf16.msra.mxu0 0
      %616 = vmatprep.subr.bf16.mxu0 0
      %617 = vmatpush1.bf16.msra.mxu0 0
      %618 = vmatprep.subr.bf16.mxu0 0
      %619 = vmatpush1.bf16.msra.mxu0 0
      %620 = vmatprep.subr.bf16.mxu0 0
      %621 = vmatpush1.bf16.msra.mxu0 0
      %622 = vmatprep.subr.bf16.mxu0 0
      %623 = vmatpush1.bf16.msra.mxu0 0
      %624 = vmatprep.subr.bf16.mxu0 0
      %625 = vmatpush1.bf16.msra.mxu0 0
      %626 = vmatprep.subr.bf16.mxu0 0
      %627 = vmatpush1.bf16.msra.mxu0 0
      %628 = vmatprep.subr.bf16.mxu0 0
      %629 = vmatpush1.bf16.msra.mxu0 0
      %630 = vmatprep.subr.bf16.mxu0 0
      %631 = vmatpush1.bf16.msra.mxu0 0
      %632 = vmatprep.subr.bf16.mxu0 0
      %633 = vmatpush1.bf16.msra.mxu0 0
      %634 = vmatprep.mubr.bf16.mxu0 0
      %635 = vmatmul.mubr.bf16.gmra.mrb[0].mxu0 %v600
      %v636 = vpop.f32.mrb[0].mxu0
      %v637 = vadd.f32 %v584, %v636
      %v638 = vpop.f32.mrb[0].mxu0
      %v639 = vpop.f32.mrb[0].mxu0
      %v640 = vpop.f32.mrb[0].mxu0
      %641 = vdwg.mxu0
      %v642 = vpack.c.bf16 %v637, %v637
      %v643 = vld [vmem:[%s484] sm:$0xf]
      %v644 = vunpack.c.l.bf16 %v643
      %v645 = vld [vmem:[#allocation2] sm:$0xf]
      %vm646 = vcmask 64512
      %v648 = vsel %vm646, %v642, 0
      %v651 = vsel %vm646, %v645, 0
      %653 = vmatprep.subr.bf16.mxu0 0
      %654 = vmatpush1.bf16.xpose.msra.mxu0 %v651
      %655 = vmatprep.subr.bf16.mxu0 0
      %656 = vmatpush1.bf16.xpose.msra.mxu0 0
      %657 = vmatprep.subr.bf16.mxu0 0
      %658 = vmatpush1.bf16.xpose.msra.mxu0 0
      %659 = vmatprep.subr.bf16.mxu0 0
      %660 = vmatpush1.bf16.xpose.msra.mxu0 0
      %661 = vmatprep.subr.bf16.mxu0 0
      %662 = vmatpush1.bf16.xpose.msra.mxu0 0
      %663 = vmatprep.subr.bf16.mxu0 0
      %664 = vmatpush1.bf16.xpose.msra.mxu0 0
      %665 = vmatprep.subr.bf16.mxu0 0
      %666 = vmatpush1.bf16.xpose.msra.mxu0 0
      %667 = vmatprep.subr.bf16.mxu0 0
      %668 = vmatpush1.bf16.xpose.msra.mxu0 0
      %669 = vmatprep.subr.bf16.mxu0 0
      %670 = vmatpush1.bf16.xpose.msra.mxu0 0
      %671 = vmatprep.subr.bf16.mxu0 0
      %672 = vmatpush1.bf16.xpose.msra.mxu0 0
      %673 = vmatprep.subr.bf16.mxu0 0
      %674 = vmatpush1.bf16.xpose.msra.mxu0 0
      %675 = vmatprep.subr.bf16.mxu0 0
      %676 = vmatpush1.bf16.xpose.msra.mxu0 0
      %677 = vmatprep.subr.bf16.mxu0 0
      %678 = vmatpush1.bf16.xpose.msra.mxu0 0
      %679 = vmatprep.subr.bf16.mxu0 0
      %680 = vmatpush1.bf16.xpose.msra.mxu0 0
      %681 = vmatprep.subr.bf16.mxu0 0
      %682 = vmatpush1.bf16.xpose.msra.mxu0 0
      %683 = vmatprep.subr.bf16.mxu0 0
      %684 = vmatpush1.bf16.xpose.msra.mxu0 0
      %685 = vmatprep.mubr.bf16.mxu0 0
      %686 = vmatmul.mubr.bf16.gmra.mrb[0].mxu0 %v648
      %v687 = vpop.f32.mrb[0].mxu0
      %v688 = vadd.f32 %v644, %v687
      %v689 = vpop.f32.mrb[0].mxu0
      %v690 = vpop.f32.mrb[0].mxu0
      %v691 = vpop.f32.mrb[0].mxu0
      %692 = vdwg.mxu0
      %v693 = vsel %vm646, %v688, -inf
      %694 = vmax.xlane.f32.xlu0 %v693
      %v695 = vpop.xlane.xlu0 %694
      %v696 = vsub.f32 %v688, %v695
      %v697 = vmul.f32 %v696, 1.442695
      %v698 = vpow.pop %v697
      %v699 = vsel %vm646, %v698, 0.0
      %700 = vadd.xlane.f32.xlu0 %v699
      %v701 = vpop.xlane.xlu0 %700
      %v702 = vrcp.pop %v701
      %v703 = vmul.f32 %v698, %v702
      %p704 = scmp.eq.s32.totalorder %s28, 0
      // Predicated region
      $region69: #{decoder_forward.8} parent=63 // pred_check
        %p705 = pneg %p704
      $region70: #{decoder_forward.8} parent=63 // pred_check_branch
        %707 = sbr.rel (%p705) target = $region72
      $region71: #{decoder_forward.8} parent=63 // pred_region
        %708 = vst.msk [vmem:[%s495] sm:$0xff] %vm646, %v703
      $region72: #{decoder_forward.8} parent=63 // pred_fallthru
        _
      %v709 = vpack.c.bf16 %v703, %v703
      %v711 = vunpack.c.l.b16 %v645
      %v712 = vpack.c.b16 %v711, %v711
      %713 = vrot.lane.b32.xlu0 %v712, 96
      %v714 = vpop.permute.xlu0 %713
      %v716 = vsel %vm646, %v709, 0
      %vm718 = vcmask 1043456
      %v720 = vsel %vm718, %v714, 0
      %722 = vmatprep.subr.bf16.mxu0 0
      %723 = vmatpush1.bf16.msra.mxu0 %v720
      %724 = vmatprep.subr.bf16.mxu0 0
      %725 = vmatpush1.bf16.msra.mxu0 0
      %726 = vmatprep.subr.bf16.mxu0 0
      %727 = vmatpush1.bf16.msra.mxu0 0
      %728 = vmatprep.subr.bf16.mxu0 0
      %729 = vmatpush1.bf16.msra.mxu0 0
      %730 = vmatprep.subr.bf16.mxu0 0
      %731 = vmatpush1.bf16.msra.mxu0 0
      %732 = vmatprep.subr.bf16.mxu0 0
      %733 = vmatpush1.bf16.msra.mxu0 0
      %734 = vmatprep.subr.bf16.mxu0 0
      %735 = vmatpush1.bf16.msra.mxu0 0
      %736 = vmatprep.subr.bf16.mxu0 0
      %737 = vmatpush1.bf16.msra.mxu0 0
      %738 = vmatprep.subr.bf16.mxu0 0
      %739 = vmatpush1.bf16.msra.mxu0 0
      %740 = vmatprep.subr.bf16.mxu0 0
      %741 = vmatpush1.bf16.msra.mxu0 0
      %742 = vmatprep.subr.bf16.mxu0 0
      %743 = vmatpush1.bf16.msra.mxu0 0
      %744 = vmatprep.subr.bf16.mxu0 0
      %745 = vmatpush1.bf16.msra.mxu0 0
      %746 = vmatprep.subr.bf16.mxu0 0
      %747 = vmatpush1.bf16.msra.mxu0 0
      %748 = vmatprep.subr.bf16.mxu0 0
      %749 = vmatpush1.bf16.msra.mxu0 0
      %750 = vmatprep.subr.bf16.mxu0 0
      %751 = vmatpush1.bf16.msra.mxu0 0
      %752 = vmatprep.subr.bf16.mxu0 0
      %753 = vmatpush1.bf16.msra.mxu0 0
      %754 = vmatprep.mubr.bf16.mxu0 0
      %755 = vmatmul.mubr.bf16.gmra.mrb[0].mxu0 %v716
      %v756 = vpop.f32.mrb[0].mxu0
      %v757 = vadd.f32 0.0, %v756
      %v758 = vpop.f32.mrb[0].mxu0
      %v759 = vpop.f32.mrb[0].mxu0
      %v760 = vpop.f32.mrb[0].mxu0
      %761 = vdwg.mxu0
      %v762 = vpack.c.bf16 %v757, %v757
      %vm763 = vcmask 60416
      %764 = vst.msk [vmem:[#allocation3] sm:$0xf] %vm763, %v762
      %v765 = vld [vmem:[#allocation2] sm:$0xf]
      %767 = vrot.lane.b32.xlu0 %v642, 120
      %v768 = vpop.permute.xlu0 %767
      %v770 = vunpack.c.l.b16 %v765
      %v771 = vpack.c.b16 %v770, %v770
      %772 = vrot.lane.b32.xlu0 %v771, 120
      %v773 = vpop.permute.xlu0 %772
      %v775 = vsel %vm646, %v768, 0
      %v778 = vsel %vm646, %v773, 0
      %780 = vmatprep.subr.bf16.mxu0 0
      %781 = vmatpush1.bf16.xpose.msra.mxu0 %v778
      %782 = vmatprep.subr.bf16.mxu0 0
      %783 = vmatpush1.bf16.xpose.msra.mxu0 0
      %784 = vmatprep.subr.bf16.mxu0 0
      %785 = vmatpush1.bf16.xpose.msra.mxu0 0
      %786 = vmatprep.subr.bf16.mxu0 0
      %787 = vmatpush1.bf16.xpose.msra.mxu0 0
      %788 = vmatprep.subr.bf16.mxu0 0
      %789 = vmatpush1.bf16.xpose.msra.mxu0 0
      %790 = vmatprep.subr.bf16.mxu0 0
      %791 = vmatpush1.bf16.xpose.msra.mxu0 0
      %792 = vmatprep.subr.bf16.mxu0 0
      %793 = vmatpush1.bf16.xpose.msra.mxu0 0
      %794 = vmatprep.subr.bf16.mxu0 0
      %795 = vmatpush1.bf16.xpose.msra.mxu0 0
      %796 = vmatprep.subr.bf16.mxu0 0
      %797 = vmatpush1.bf16.xpose.msra.mxu0 0
      %798 = vmatprep.subr.bf16.mxu0 0
      %799 = vmatpush1.bf16.xpose.msra.mxu0 0
      %800 = vmatprep.subr.bf16.mxu0 0
      %801 = vmatpush1.bf16.xpose.msra.mxu0 0
      %802 = vmatprep.subr.bf16.mxu0 0
      %803 = vmatpush1.bf16.xpose.msra.mxu0 0
      %804 = vmatprep.subr.bf16.mxu0 0
      %805 = vmatpush1.bf16.xpose.msra.mxu0 0
      %806 = vmatprep.subr.bf16.mxu0 0
      %807 = vmatpush1.bf16.xpose.msra.mxu0 0
      %808 = vmatprep.subr.bf16.mxu0 0
      %809 = vmatpush1.bf16.xpose.msra.mxu0 0
      %810 = vmatprep.subr.bf16.mxu0 0
      %811 = vmatpush1.bf16.xpose.msra.mxu0 0
      %812 = vmatprep.mubr.bf16.mxu0 0
      %813 = vmatmul.mubr.bf16.gmra.mrb[0].mxu0 %v775
      %v814 = vpop.f32.mrb[0].mxu0
      %v815 = vadd.f32 %v644, %v814
      %v816 = vpop.f32.mrb[0].mxu0
      %v817 = vpop.f32.mrb[0].mxu0
      %v818 = vpop.f32.mrb[0].mxu0
      %819 = vdwg.mxu0
      %v820 = vsel %vm646, %v815, -inf
      %821 = vmax.xlane.f32.xlu0 %v820
      %v822 = vpop.xlane.xlu0 %821
      %v823 = vsub.f32 %v815, %v822
      %v824 = vmul.f32 %v823, 1.442695
      %v825 = vpow.pop %v824
      %v826 = vsel %vm646, %v825, 0.0
      %827 = vadd.xlane.f32.xlu0 %v826
      %v828 = vpop.xlane.xlu0 %827
      %v829 = vrcp.pop %v828
      %v830 = vmul.f32 %v825, %v829
      // Predicated region
      $region73: #{decoder_forward.8} parent=63 // pred_check
        %p831 = pneg %p704
      $region74: #{decoder_forward.8} parent=63 // pred_check_branch
        %833 = sbr.rel (%p831) target = $region76
      $region75: #{decoder_forward.8} parent=63 // pred_region
        %s834 = scalar_lea.vmem %s495, 8
        %835 = vst.msk [vmem:[%s834] sm:$0xff] %vm646, %v830
      $region76: #{decoder_forward.8} parent=63 // pred_fallthru
        _
      %v836 = vpack.c.bf16 %v830, %v830
      %837 = vrot.lane.b32.xlu0 %v771, 88
      %v838 = vpop.permute.xlu0 %837
      %v840 = vsel %vm646, %v836, 0
      %v843 = vsel %vm718, %v838, 0
      %845 = vmatprep.subr.bf16.mxu0 0
      %846 = vmatpush1.bf16.msra.mxu0 %v843
      %847 = vmatprep.subr.bf16.mxu0 0
      %848 = vmatpush1.bf16.msra.mxu0 0
      %849 = vmatprep.subr.bf16.mxu0 0
      %850 = vmatpush1.bf16.msra.mxu0 0
      %851 = vmatprep.subr.bf16.mxu0 0
      %852 = vmatpush1.bf16.msra.mxu0 0
      %853 = vmatprep.subr.bf16.mxu0 0
      %854 = vmatpush1.bf16.msra.mxu0 0
      %855 = vmatprep.subr.bf16.mxu0 0
      %856 = vmatpush1.bf16.msra.mxu0 0
      %857 = vmatprep.subr.bf16.mxu0 0
      %858 = vmatpush1.bf16.msra.mxu0 0
      %859 = vmatprep.subr.bf16.mxu0 0
      %860 = vmatpush1.bf16.msra.mxu0 0
      %861 = vmatprep.subr.bf16.mxu0 0
      %862 = vmatpush1.bf16.msra.mxu0 0
      %863 = vmatprep.subr.bf16.mxu0 0
      %864 = vmatpush1.bf16.msra.mxu0 0
      %865 = vmatprep.subr.bf16.mxu0 0
      %866 = vmatpush1.bf16.msra.mxu0 0
      %867 = vmatprep.subr.bf16.mxu0 0
      %868 = vmatpush1.bf16.msra.mxu0 0
      %869 = vmatprep.subr.bf16.mxu0 0
      %870 = vmatpush1.bf16.msra.mxu0 0
      %871 = vmatprep.subr.bf16.mxu0 0
      %872 = vmatpush1.bf16.msra.mxu0 0
      %873 = vmatprep.subr.bf16.mxu0 0
      %874 = vmatpush1.bf16.msra.mxu0 0
      %875 = vmatprep.subr.bf16.mxu0 0
      %876 = vmatpush1.bf16.msra.mxu0 0
      %877 = vmatprep.mubr.bf16.mxu0 0
      %878 = vmatmul.mubr.bf16.gmra.mrb[0].mxu0 %v840
      %v879 = vpop.f32.mrb[0].mxu0
      %v880 = vadd.f32 0.0, %v879
      %v881 = vpop.f32.mrb[0].mxu0
      %v882 = vpop.f32.mrb[0].mxu0
      %v883 = vpop.f32.mrb[0].mxu0
      %884 = vdwg.mxu0
      %v885 = vpack.c.bf16 %v880, %v880
      %v887 = vunpack.c.l.b16 %v885
      %v888 = vpack.c.b16 %v887, %v887
      %889 = vrot.lane.b32.xlu0 %v888, 8
      %v890 = vpop.permute.xlu0 %889
      %vm892 = vcmask 126016
      %893 = vst.msk [vmem:[#allocation3] sm:$0xf] %vm892, %v890
      %v894 = vld [vmem:[#allocation2] sm:$0xf]
      %895 = vrot.lane.b32.xlu0 %v642, 112
      %v896 = vpop.permute.xlu0 %895
      %v898 = vunpack.c.l.b16 %v894
      %v899 = vpack.c.b16 %v898, %v898
      %900 = vrot.lane.b32.xlu0 %v899, 112
      %v901 = vpop.permute.xlu0 %900
      %v903 = vsel %vm646, %v896, 0
      %v906 = vsel %vm646, %v901, 0
      %908 = vmatprep.subr.bf16.mxu0 0
      %909 = vmatpush1.bf16.xpose.msra.mxu0 %v906
      %910 = vmatprep.subr.bf16.mxu0 0
      %911 = vmatpush1.bf16.xpose.msra.mxu0 0
      %912 = vmatprep.subr.bf16.mxu0 0
      %913 = vmatpush1.bf16.xpose.msra.mxu0 0
      %914 = vmatprep.subr.bf16.mxu0 0
      %915 = vmatpush1.bf16.xpose.msra.mxu0 0
      %916 = vmatprep.subr.bf16.mxu0 0
      %917 = vmatpush1.bf16.xpose.msra.mxu0 0
      %918 = vmatprep.subr.bf16.mxu0 0
      %919 = vmatpush1.bf16.xpose.msra.mxu0 0
      %920 = vmatprep.subr.bf16.mxu0 0
      %921 = vmatpush1.bf16.xpose.msra.mxu0 0
      %922 = vmatprep.subr.bf16.mxu0 0
      %923 = vmatpush1.bf16.xpose.msra.mxu0 0
      %924 = vmatprep.subr.bf16.mxu0 0
      %925 = vmatpush1.bf16.xpose.msra.mxu0 0
      %926 = vmatprep.subr.bf16.mxu0 0
      %927 = vmatpush1.bf16.xpose.msra.mxu0 0
      %928 = vmatprep.subr.bf16.mxu0 0
      %929 = vmatpush1.bf16.xpose.msra.mxu0 0
      %930 = vmatprep.subr.bf16.mxu0 0
      %931 = vmatpush1.bf16.xpose.msra.mxu0 0
      %932 = vmatprep.subr.bf16.mxu0 0
      %933 = vmatpush1.bf16.xpose.msra.mxu0 0
      %934 = vmatprep.subr.bf16.mxu0 0
      %935 = vmatpush1.bf16.xpose.msra.mxu0 0
      %936 = vmatprep.subr.bf16.mxu0 0
      %937 = vmatpush1.bf16.xpose.msra.mxu0 0
      %938 = vmatprep.subr.bf16.mxu0 0
      %939 = vmatpush1.bf16.xpose.msra.mxu0 0
      %940 = vmatprep.mubr.bf16.mxu0 0
      %941 = vmatmul.mubr.bf16.gmra.mrb[0].mxu0 %v903
      %v942 = vpop.f32.mrb[0].mxu0
      %v943 = vadd.f32 %v644, %v942
      %v944 = vpop.f32.mrb[0].mxu0
      %v945 = vpop.f32.mrb[0].mxu0
      %v946 = vpop.f32.mrb[0].mxu0
      %947 = vdwg.mxu0
      %v948 = vsel %vm646, %v943, -inf
      %949 = vmax.xlane.f32.xlu0 %v948
      %v950 = vpop.xlane.xlu0 %949
      %v951 = vsub.f32 %v943, %v950
      %v952 = vmul.f32 %v951, 1.442695
      %v953 = vpow.pop %v952
      %v954 = vsel %vm646, %v953, 0.0
      %955 = vadd.xlane.f32.xlu0 %v954
      %v956 = vpop.xlane.xlu0 %955
      %v957 = vrcp.pop %v956
      %v958 = vmul.f32 %v953, %v957
      // Predicated region
      $region77: #{decoder_forward.8} parent=63 // pred_check
        %p959 = pneg %p704
      $region78: #{decoder_forward.8} parent=63 // pred_check_branch
        %961 = sbr.rel (%p959) target = $region80
      $region79: #{decoder_forward.8} parent=63 // pred_region
        %s962 = scalar_lea.vmem %s495, 16
        %963 = vst.msk [vmem:[%s962] sm:$0xff] %vm646, %v958
      $region80: #{decoder_forward.8} parent=63 // pred_fallthru
        _
      %v964 = vpack.c.bf16 %v958, %v958
      %965 = vrot.lane.b32.xlu0 %v899, 80
      %v966 = vpop.permute.xlu0 %965
      %v968 = vsel %vm646, %v964, 0
      %v971 = vsel %vm718, %v966, 0
      %973 = vmatprep.subr.bf16.mxu0 0
      %974 = vmatpush1.bf16.msra.mxu0 %v971
      %975 = vmatprep.subr.bf16.mxu0 0
      %976 = vmatpush1.bf16.msra.mxu0 0
      %977 = vmatprep.subr.bf16.mxu0 0
      %978 = vmatpush1.bf16.msra.mxu0 0
      %979 = vmatprep.subr.bf16.mxu0 0
      %980 = vmatpush1.bf16.msra.mxu0 0
      %981 = vmatprep.subr.bf16.mxu0 0
      %982 = vmatpush1.bf16.msra.mxu0 0
      %983 = vmatprep.subr.bf16.mxu0 0
      %984 = vmatpush1.bf16.msra.mxu0 0
      %985 = vmatprep.subr.bf16.mxu0 0
      %986 = vmatpush1.bf16.msra.mxu0 0
      %987 = vmatprep.subr.bf16.mxu0 0
      %988 = vmatpush1.bf16.msra.mxu0 0
      %989 = vmatprep.subr.bf16.mxu0 0
      %990 = vmatpush1.bf16.msra.mxu0 0
      %991 = vmatprep.subr.bf16.mxu0 0
      %992 = vmatpush1.bf16.msra.mxu0 0
      %993 = vmatprep.subr.bf16.mxu0 0
      %994 = vmatpush1.bf16.msra.mxu0 0
      %995 = vmatprep.subr.bf16.mxu0 0
      %996 = vmatpush1.bf16.msra.mxu0 0
      %997 = vmatprep.subr.bf16.mxu0 0
      %998 = vmatpush1.bf16.msra.mxu0 0
      %999 = vmatprep.subr.bf16.mxu0 0
      %1000 = vmatpush1.bf16.msra.mxu0 0
      %1001 = vmatprep.subr.bf16.mxu0 0
      %1002 = vmatpush1.bf16.msra.mxu0 0
      %1003 = vmatprep.subr.bf16.mxu0 0
      %1004 = vmatpush1.bf16.msra.mxu0 0
      %1005 = vmatprep.mubr.bf16.mxu0 0
      %1006 = vmatmul.mubr.bf16.gmra.mrb[0].mxu0 %v968
      %v1007 = vpop.f32.mrb[0].mxu0
      %v1008 = vadd.f32 0.0, %v1007
      %v1009 = vpop.f32.mrb[0].mxu0
      %v1010 = vpop.f32.mrb[0].mxu0
      %v1011 = vpop.f32.mrb[0].mxu0
      %1012 = vdwg.mxu0
      %v1013 = vpack.c.bf16 %v1008, %v1008
      %v1015 = vunpack.c.l.b16 %v1013
      %v1016 = vpack.c.b16 %v1015, %v1015
      %1017 = vrot.lane.b32.xlu0 %v1016, 16
      %v1018 = vpop.permute.xlu0 %1017
      %vm1020 = vcmask 191616
      %1021 = vst.msk [vmem:[#allocation3] sm:$0xf] %vm1020, %v1018
      %v1022 = vld [vmem:[#allocation2] sm:$0xf]
      %1023 = vrot.lane.b32.xlu0 %v642, 104
      %v1024 = vpop.permute.xlu0 %1023
      %v1026 = vunpack.c.l.b16 %v1022
      %v1027 = vpack.c.b16 %v1026, %v1026
      %1028 = vrot.lane.b32.xlu0 %v1027, 104
      %v1029 = vpop.permute.xlu0 %1028
      %v1031 = vsel %vm646, %v1024, 0
      %v1034 = vsel %vm646, %v1029, 0
      %1036 = vmatprep.subr.bf16.mxu0 0
      %1037 = vmatpush1.bf16.xpose.msra.mxu0 %v1034
      %1038 = vmatprep.subr.bf16.mxu0 0
      %1039 = vmatpush1.bf16.xpose.msra.mxu0 0
      %1040 = vmatprep.subr.bf16.mxu0 0
      %1041 = vmatpush1.bf16.xpose.msra.mxu0 0
      %1042 = vmatprep.subr.bf16.mxu0 0
      %1043 = vmatpush1.bf16.xpose.msra.mxu0 0
      %1044 = vmatprep.subr.bf16.mxu0 0
      %1045 = vmatpush1.bf16.xpose.msra.mxu0 0
      %1046 = vmatprep.subr.bf16.mxu0 0
      %1047 = vmatpush1.bf16.xpose.msra.mxu0 0
      %1048 = vmatprep.subr.bf16.mxu0 0
      %1049 = vmatpush1.bf16.xpose.msra.mxu0 0
      %1050 = vmatprep.subr.bf16.mxu0 0
      %1051 = vmatpush1.bf16.xpose.msra.mxu0 0
      %1052 = vmatprep.subr.bf16.mxu0 0
      %1053 = vmatpush1.bf16.xpose.msra.mxu0 0
      %1054 = vmatprep.subr.bf16.mxu0 0
      %1055 = vmatpush1.bf16.xpose.msra.mxu0 0
      %1056 = vmatprep.subr.bf16.mxu0 0
      %1057 = vmatpush1.bf16.xpose.msra.mxu0 0
      %1058 = vmatprep.subr.bf16.mxu0 0
      %1059 = vmatpush1.bf16.xpose.msra.mxu0 0
      %1060 = vmatprep.subr.bf16.mxu0 0
      %1061 = vmatpush1.bf16.xpose.msra.mxu0 0
      %1062 = vmatprep.subr.bf16.mxu0 0
      %1063 = vmatpush1.bf16.xpose.msra.mxu0 0
      %1064 = vmatprep.subr.bf16.mxu0 0
      %1065 = vmatpush1.bf16.xpose.msra.mxu0 0
      %1066 = vmatprep.subr.bf16.mxu0 0
      %1067 = vmatpush1.bf16.xpose.msra.mxu0 0
      %1068 = vmatprep.mubr.bf16.mxu0 0
      %1069 = vmatmul.mubr.bf16.gmra.mrb[0].mxu0 %v1031
      %v1070 = vpop.f32.mrb[0].mxu0
      %v1071 = vadd.f32 %v644, %v1070
      %v1072 = vpop.f32.mrb[0].mxu0
      %v1073 = vpop.f32.mrb[0].mxu0
      %v1074 = vpop.f32.mrb[0].mxu0
      %1075 = vdwg.mxu0
      %v1076 = vsel %vm646, %v1071, -inf
      %1077 = vmax.xlane.f32.xlu0 %v1076
      %v1078 = vpop.xlane.xlu0 %1077
      %v1079 = vsub.f32 %v1071, %v1078
      %v1080 = vmul.f32 %v1079, 1.442695
      %v1081 = vpow.pop %v1080
      %v1082 = vsel %vm646, %v1081, 0.0
      %1083 = vadd.xlane.f32.xlu0 %v1082
      %v1084 = vpop.xlane.xlu0 %1083
      %v1085 = vrcp.pop %v1084
      %v1086 = vmul.f32 %v1081, %v1085
      // Predicated region
      $region81: #{decoder_forward.8} parent=63 // pred_check
        %p1087 = pneg %p704
      $region82: #{decoder_forward.8} parent=63 // pred_check_branch
        %1089 = sbr.rel (%p1087) target = $region84
      $region83: #{decoder_forward.8} parent=63 // pred_region
        %s1090 = scalar_lea.vmem %s495, 24
        %1091 = vst.msk [vmem:[%s1090] sm:$0xff] %vm646, %v1086
      $region84: #{decoder_forward.8} parent=63 // pred_fallthru
        _
      %v1092 = vpack.c.bf16 %v1086, %v1086
      %1093 = vrot.lane.b32.xlu0 %v1027, 72
      %v1094 = vpop.permute.xlu0 %1093
      %v1096 = vsel %vm646, %v1092, 0
      %v1099 = vsel %vm718, %v1094, 0
      %1101 = vmatprep.subr.bf16.mxu0 0
      %1102 = vmatpush1.bf16.msra.mxu0 %v1099
      %1103 = vmatprep.subr.bf16.mxu0 0
      %1104 = vmatpush1.bf16.msra.mxu0 0
      %1105 = vmatprep.subr.bf16.mxu0 0
      %1106 = vmatpush1.bf16.msra.mxu0 0
      %1107 = vmatprep.subr.bf16.mxu0 0
      %1108 = vmatpush1.bf16.msra.mxu0 0
      %1109 = vmatprep.subr.bf16.mxu0 0
      %1110 = vmatpush1.bf16.msra.mxu0 0
      %1111 = vmatprep.subr.bf16.mxu0 0
      %1112 = vmatpush1.bf16.msra.mxu0 0
      %1113 = vmatprep.subr.bf16.mxu0 0
      %1114 = vmatpush1.bf16.msra.mxu0 0
      %1115 = vmatprep.subr.bf16.mxu0 0
      %1116 = vmatpush1.bf16.msra.mxu0 0
      %1117 = vmatprep.subr.bf16.mxu0 0
      %1118 = vmatpush1.bf16.msra.mxu0 0
      %1119 = vmatprep.subr.bf16.mxu0 0
      %1120 = vmatpush1.bf16.msra.mxu0 0
      %1121 = vmatprep.subr.bf16.mxu0 0
      %1122 = vmatpush1.bf16.msra.mxu0 0
      %1123 = vmatprep.subr.bf16.mxu0 0
      %1124 = vmatpush1.bf16.msra.mxu0 0
      %1125 = vmatprep.subr.bf16.mxu0 0
      %1126 = vmatpush1.bf16.msra.mxu0 0
      %1127 = vmatprep.subr.bf16.mxu0 0
      %1128 = vmatpush1.bf16.msra.mxu0 0
      %1129 = vmatprep.subr.bf16.mxu0 0
      %1130 = vmatpush1.bf16.msra.mxu0 0
      %1131 = vmatprep.subr.bf16.mxu0 0
      %1132 = vmatpush1.bf16.msra.mxu0 0
      %1133 = vmatprep.mubr.bf16.mxu0 0
      %1134 = vmatmul.mubr.bf16.gmra.mrb[0].mxu0 %v1096
      %v1135 = vpop.f32.mrb[0].mxu0
      %v1136 = vadd.f32 0.0, %v1135
      %v1137 = vpop.f32.mrb[0].mxu0
      %v1138 = vpop.f32.mrb[0].mxu0
      %v1139 = vpop.f32.mrb[0].mxu0
      %1140 = vdwg.mxu0
      %v1141 = vpack.c.bf16 %v1136, %v1136
      %v1143 = vunpack.c.l.b16 %v1141
      %v1144 = vpack.c.b16 %v1143, %v1143
      %1145 = vrot.lane.b32.xlu0 %v1144, 24
      %v1146 = vpop.permute.xlu0 %1145
      %vm1148 = vcmask 257216
      %1149 = vst.msk [vmem:[#allocation3] sm:$0xf] %vm1148, %v1146
      %v1150 = vld [vmem:[#allocation3] sm:$0xf]
      %v1151 = vld [vmem:[%s7] sm:$0xf]
      %v1152 = vld [vmem:[%s7 + $0x4] sm:$0xf]
      %v1153 = vld [vmem:[%s7 + $0x8] sm:$0xf]
      %v1154 = vld [vmem:[%s7 + $0xc] sm:$0xf]
      %v1155 = vld [vmem:[%s8] sm:$0x1]
      %v1157 = vlaneseq
      %v1158 = vshrl.u32 %v1157, 7
      %v1159 = vsub.s32 0, %v1158
      %v1160 = vrot.slane %v1155, %v1159
      %v1166 = vunpack.c.l.b16 %v1151
      %v1167 = vunpack.c.l.b16 %v1152
      %v1168 = vunpack.c.l.b16 %v1153
      %v1169 = vunpack.c.l.b16 %v1154
      %v1170 = vpack.c.b16 %v1167, %v1166
      %v1171 = vpack.c.b16 %v1169, %v1168
      %v1175 = vsel %vm598, %v1150, 0
      %1177 = vmatprep.subr.bf16.mxu0 0
      %1178 = vmatpush1.bf16.msra.mxu0 %v1170
      %1179 = vmatprep.subr.bf16.mxu0 0
      %1180 = vmatpush1.bf16.msra.mxu0 %v1171
      %1181 = vmatprep.subr.bf16.mxu0 0
      %1182 = vmatpush1.bf16.msra.mxu0 0
      %1183 = vmatprep.subr.bf16.mxu0 0
      %1184 = vmatpush1.bf16.msra.mxu0 0
      %1185 = vmatprep.subr.bf16.mxu0 0
      %1186 = vmatpush1.bf16.msra.mxu0 0
      %1187 = vmatprep.subr.bf16.mxu0 0
      %1188 = vmatpush1.bf16.msra.mxu0 0
      %1189 = vmatprep.subr.bf16.mxu0 0
      %1190 = vmatpush1.bf16.msra.mxu0 0
      %1191 = vmatprep.subr.bf16.mxu0 0
      %1192 = vmatpush1.bf16.msra.mxu0 0
      %1193 = vmatprep.subr.bf16.mxu0 0
      %1194 = vmatpush1.bf16.msra.mxu0 0
      %1195 = vmatprep.subr.bf16.mxu0 0
      %1196 = vmatpush1.bf16.msra.mxu0 0
      %1197 = vmatprep.subr.bf16.mxu0 0
      %1198 = vmatpush1.bf16.msra.mxu0 0
      %1199 = vmatprep.subr.bf16.mxu0 0
      %1200 = vmatpush1.bf16.msra.mxu0 0
      %1201 = vmatprep.subr.bf16.mxu0 0
      %1202 = vmatpush1.bf16.msra.mxu0 0
      %1203 = vmatprep.subr.bf16.mxu0 0
      %1204 = vmatpush1.bf16.msra.mxu0 0
      %1205 = vmatprep.subr.bf16.mxu0 0
      %1206 = vmatpush1.bf16.msra.mxu0 0
      %1207 = vmatprep.subr.bf16.mxu0 0
      %1208 = vmatpush1.bf16.msra.mxu0 0
      %1209 = vmatprep.mubr.bf16.mxu0 0
      %1210 = vmatmul.mubr.bf16.gmra.mrb[0].mxu0 %v1175
      %v1211 = vpop.f32.mrb[0].mxu0
      %v1212 = vadd.f32 %v1160, %v1211
      %v1213 = vpop.f32.mrb[0].mxu0
      %v1214 = vpop.f32.mrb[0].mxu0
      %v1215 = vpop.f32.mrb[0].mxu0
      %1216 = vdwg.mxu0
      %v1217 = vadd.f32 %v573, %v1212
      %v1218 = vsel %vm598, %v1217, 0.0
      %1219 = vadd.xlane.f32.xlu0 %v1218
      %v1220 = vpop.xlane.xlu0 %1219
      %v1221 = vrcp.pop 32.0
      %v1222 = vmul.f32 %v1220, %v1221
      %v1223 = vsub.f32 %v1217, %v1222
      %v1224 = vmul.f32 %v1223, %v1223
      %v1225 = vsel %vm598, %v1224, 0.0
      %1226 = vadd.xlane.f32.xlu0 %v1225
      %v1227 = vpop.xlane.xlu0 %1226
      %v1228 = vmul.f32 %v1227, %v1221
      %v1229 = vadd.f32 %v1228, 1e-05
      %v1230 = vrsqrt.pop %v1229
      %v1231 = vmul.f32 %v1223, %v1230
      %v1232 = vld [vmem:[%s9] sm:$0x1]
      %v1234 = vlaneseq
      %v1235 = vshrl.u32 %v1234, 7
      %v1236 = vsub.s32 0, %v1235
      %v1237 = vrot.slane %v1232, %v1236
      %v1239 = vmul.f32 %v1231, %v1237
      %v1240 = vld [vmem:[%s10] sm:$0x1]
      %v1242 = vlaneseq
      %v1243 = vshrl.u32 %v1242, 7
      %v1244 = vsub.s32 0, %v1243
      %v1245 = vrot.slane %v1240, %v1244
      %v1247 = vadd.f32 %v1239, %v1245
      %1248 = vst.msk [vmem:[%s491] sm:$0xff] %vm598, %v1247
      %p1249 = scmp.lt.s32.totalorder %s28, 1
      %s1250 = scalar_select %p1249, %s28, 1
      %p1251 = scmp.lt.s32.totalorder %s29, 0
      %s1252 = scalar_select %p1251, %s29, 0
      %s1253 = sadd.s32 %s1252, %s1250
      %s1254 = smul.addr %s1253, 8
      %s1255 = scalar_lea.vmem %s11, %s1254
      %p1256 = scmp.lt.s32.totalorder %s29, 0
      %s1257 = scalar_select %p1256, %s29, 0
      %s1258 = smul.addr %s1257, 8
      %s1259 = scalar_lea.vmem %s12, %s1258
      // Predicated region
      $region85: #{decoder_forward.8} parent=63 // pred_check
        %p1260 = pneg %p306
      $region86: #{decoder_forward.8} parent=63 // pred_check_branch
        %1262 = sbr.rel (%p1260) target = $region88
      $region87: #{decoder_forward.8} parent=63 // pred_region
        _
      $region88: #{decoder_forward.8} parent=63 // pred_fallthru
        _
      // Predicated region
      $region89: #{decoder_forward.8} parent=63 // pred_check
        %p1263 = pneg %p332
      $region90: #{decoder_forward.8} parent=63 // pred_check_branch
        %1265 = sbr.rel (%p1263) target = $region92
      $region91: #{decoder_forward.8} parent=63 // pred_region
        _
      $region92: #{decoder_forward.8} parent=63 // pred_fallthru
        _
      // Predicated region
      $region93: #{decoder_forward.8} parent=63 // pred_check
        %p1266 = pneg %p332
      $region94: #{decoder_forward.8} parent=63 // pred_check_branch
        %1268 = sbr.rel (%p1266) target = $region96
      $region95: #{decoder_forward.8} parent=63 // pred_region
        %p1269 = scmp.lt.s32.totalorder %s29, 0
        %s1270 = scalar_select %p1269, %s29, 0
        %s1271 = smul.addr %s1270, 8
        %s1272 = scalar_lea.vmem %s12, %s1271
      $region96: #{decoder_forward.8} parent=63 // pred_fallthru
        _
    $region64: #{decoder_forward.8} parent=5 // pred_fallthru
      _
    %p1273 = scmp.le.s32.totalorder 2, %s19
    // Predicated region
    $region97: #{decoder_forward.8} parent=5 // pred_check
      %p1274 = pneg %p1273
    $region98: #{decoder_forward.8} parent=5 // pred_check_branch
      %1276 = sbr.rel (%p1274) target = $region100
    $region99: #{decoder_forward.8} parent=5 // pred_region
      %s1277 = ssub.s32 %s19, 2
      // Predicated region
      $region101: #{decoder_forward.8} parent=99 // pred_check
        %p1278 = pneg %p312
      $region102: #{decoder_forward.8} parent=99 // pred_check_branch
        %1280 = sbr.rel (%p1278) target = $region104
      $region103: #{decoder_forward.8} parent=99 // pred_region
        %p1281 = scmp.lt.s32.totalorder %s30, 1
        %s1282 = scalar_select %p1281, %s30, 1
        %p1283 = scmp.lt.s32.totalorder %s31, 0
        %s1284 = scalar_select %p1283, %s31, 0
        %s1285 = sadd.s32 %s1284, %s1282
        %s1286 = smul.addr %s1285, 8
        %s1287 = scalar_lea.vmem %s11, %s1286
      $region104: #{decoder_forward.8} parent=99 // pred_fallthru
        _
    $region100: #{decoder_forward.8} parent=5 // pred_fallthru
      _
  $region6: #{decoder_forward.8} parent=0 // loop_footer
    %s23 = sadd.s32 1, %s19
  $region7: #{decoder_forward.8} parent=0 // loop_footer_branch
    %18 = sbr.rel target = $region3
  $region8: #{decoder_forward.8} parent=0 // loop_exit
    _

</llo_original>
